<compile_context>
chip_gen: v5e
topology: v5e:2x2
jax: 0.10.0
libtpu: 0.0.40
codegen_flags: <defaults>
</compile_context>

<pallas_src>
import functools
import numpy as np
import jax
import jax.numpy as jnp
from jax.experimental import pallas as pl
from jax.experimental.pallas import tpu as pltpu


def generate_anchors(fmap_hw, tile_size, stride, ratios, scales):
    """Faithful re-implementation of RPN.generate_anchors' anchor formulas.

    NOTE: the original call site passes arguments in a shifted (buggy/truncated) order
    and filters anchors crossing the image border with an undefined `allowed_border`.
    # TODO(synk): border filtering is skipped so the anchor count stays H*W*A and
    # matches the flattened reg_output exactly (required by decode_bboxes).
    """
    H, W = fmap_hw
    ratios = np.asarray(ratios, np.float64)
    scales = np.asarray(scales, np.float64)
    R, S = len(ratios), len(scales)
    gx, gy, gr, gs = np.meshgrid(np.arange(H), np.arange(W),
                                 np.arange(R), np.arange(S), indexing="ij")
    z = np.zeros((H, W, R, S, 4), np.float64)
    z[..., 0] = (gx + 0.5) * stride - 0.5 * tile_size * scales[gs] * np.sqrt(ratios[gr])
    z[..., 1] = (gy + 0.5) * stride - 0.5 * tile_size * scales[gs] * np.sqrt(1.0 / ratios[gr])
    z[..., 2] = (gx + 0.5) * stride + 0.5 * tile_size * scales[gs] * np.sqrt(ratios[gr])
    z[..., 3] = (gy + 0.5) * stride + 0.5 * tile_size * scales[gs] * np.sqrt(1.0 / ratios[gr])
    return z.reshape(-1, 4).astype(np.float32)


def _rpn_kernel(seg, x_ref, w3_ref, b3_ref, wh_ref, bh_ref,
                size_ref, ctr_ref, cmax_ref, out_ref):
    # x_ref: (1, TM, Kp) bf16 lane-dense pre-im2col'd activation rows.
    xt = x_ref[0]

    # 3x3 conv == ONE fat (TM, Kp) x (Kp, Fp) MXU dot (Kp = 9*C zero-padded to 128).
    acc = jnp.dot(xt, w3_ref[...], preferred_element_type=jnp.float32)
    feat = jnp.maximum(acc + b3_ref[...], 0.0).astype(jnp.bfloat16)        # (TM, Fp)

    # Fused clf+reg heads: one lane-dense matmul; segments [c0 | c1 | d_xy | d_wh].
    head = jnp.dot(feat, wh_ref[...], preferred_element_type=jnp.float32) + bh_ref[...]
    c0 = head[:, 0 * seg:1 * seg]
    c1 = head[:, 1 * seg:2 * seg]
    d_xy = head[:, 2 * seg:3 * seg]
    d_wh = head[:, 3 * seg:4 * seg]

    # 2-class softmax over (c0, c1) == sigmoid(c1 - c0); exact reciprocal so the
    # pre-NMS score ordering is not perturbed.
    scores = pl.reciprocal(1.0 + jnp.exp(c0 - c1), approx=False)           # (TM, seg)

    # decode_bboxes + clamp; anchor sizes/centers are (x,y)-interleaved per anchor,
    # zero padded beyond 2A so the padded columns stay finite.
    size = size_ref[...]
    ctr = ctr_ref[...]
    cmax = cmax_ref[...]
    pred_c = d_xy * size + ctr
    pred_s = jnp.exp(d_wh) * size
    lo = jnp.clip(pred_c - 0.5 * pred_s, 0.0, cmax)                        # (x0, y0)
    hi = jnp.clip(pred_c + 0.5 * pred_s, 0.0, cmax)                        # (x1, y1)

    # Single lane-dense packed store: [scores | lo | hi | 0], width 4*seg (% 128 == 0).
    out_ref[0] = jnp.concatenate(
        [scores, lo, hi, jnp.zeros_like(scores)], axis=-1)


@functools.partial(jax.jit,
                   static_argnames=("image_shape", "tile_rows", "buffer_residents"))
def _rpn_forward_impl(x_nchw, params, anchors, image_shape, tile_rows, buffer_residents):
    B, C, H, W = x_nchw.shape
    F = params["w3"].shape[-1]
    A = params["bclf"].shape[0] // 2
    HW = H * W

    TH = tile_rows
    nT = H // TH
    TM = TH * W                                    # rows per tile (multiple of 8)

    K = 9 * C
    Kp = ((K + 127) // 128) * 128                  # lane-dense im2col width
    Fp = ((F + 127) // 128) * 128                  # lane-dense feature width
    seg = ((2 * A + 31) // 32) * 32                # 32-aligned segment -> 4*seg % 128 == 0

    # ---- activation: NCHW -> NHWC -> lane-dense im2col (B, HW, Kp), bf16.
    # Built inside the same jit as the pallas_call so XLA fuses pad/gather/concat/cast
    # into the single HBM slab the kernel streams (no separate slab pass).
    x = jnp.transpose(x_nchw, (0, 2, 3, 1))
    xp = jnp.pad(x, ((0, 0), (1, 1), (1, 1), (0, 0)))
    cols = [xp[:, ky:ky + H, kx:kx + W, :] for ky in range(3) for kx in range(3)]
    x_col = jnp.concatenate(cols, axis=-1).reshape(B, HW, K)
    x_col = jnp.pad(x_col, ((0, 0), (0, 0), (0, Kp - K))).astype(jnp.bfloat16)

    # ---- 3x3 conv weight pre-reshaped to (Kp, Fp) -> one fat MXU dot, bf16.
    w3p = jnp.zeros((Kp, Fp), jnp.float32)
    w3p = w3p.at[:K, :F].set(params["w3"].reshape(K, F).astype(jnp.float32))
    w3p = w3p.astype(jnp.bfloat16)
    b3p = jnp.zeros((1, Fp), jnp.float32).at[:, :F].set(params["b3"].astype(jnp.float32))

    # ---- fused head weight [c0 | c1 | d_xy | d_wh] in 32-aligned segments, bf16.
    wclf = params["wclf"].astype(jnp.float32)
    bclf = params["bclf"].astype(jnp.float32)
    wreg = params["wreg"].astype(jnp.float32)
    breg = params["breg"].astype(jnp.float32)
    idx_xy = np.array([a * 4 + k for a in range(A) for k in (0, 1)])
    idx_wh = np.array([a * 4 + k for a in range(A) for k in (2, 3)])
    wh = jnp.zeros((Fp, 4 * seg), jnp.float32)
    wh = wh.at[:F, 0 * seg:0 * seg + A].set(wclf[:, :A])
    wh = wh.at[:F, 1 * seg:1 * seg + A].set(wclf[:, A:])
    wh = wh.at[:F, 2 * seg:2 * seg + 2 * A].set(wreg[:, idx_xy])
    wh = wh.at[:F, 3 * seg:3 * seg + 2 * A].set(wreg[:, idx_wh])
    wh = wh.astype(jnp.bfloat16)
    bh = jnp.zeros((1, 4 * seg), jnp.float32)
    bh = bh.at[0, 0 * seg:0 * seg + A].set(bclf[:A])
    bh = bh.at[0, 1 * seg:1 * seg + A].set(bclf[A:])
    bh = bh.at[0, 2 * seg:2 * seg + 2 * A].set(breg[idx_xy])
    bh = bh.at[0, 3 * seg:3 * seg + 2 * A].set(breg[idx_wh])

    # ---- anchor sizes/centers ((x,y) interleaved per anchor) and clamp-bound vector.
    anc = anchors.reshape(HW, A, 4)
    size_xy = (anc[..., 2:] - anc[..., :2]).reshape(HW, 2 * A)
    ctr_xy = (0.5 * (anc[..., 2:] + anc[..., :2])).reshape(HW, 2 * A)
    size_p = jnp.zeros((HW, seg), jnp.float32).at[:, :2 * A].set(size_xy)
    ctr_p = jnp.zeros((HW, seg), jnp.float32).at[:, :2 * A].set(ctr_xy)
    cm = np.zeros((1, seg), np.float32)
    cm[0, 0:2 * A:2] = float(image_shape[1] - 1)   # x coordinates
    cm[0, 1:2 * A:2] = float(image_shape[2] - 1)   # y coordinates
    cmax = jnp.asarray(cm)

    kernel = functools.partial(_rpn_kernel, seg)

    def resident(shape):
        # Weights / constants with a never-changing block index.  Single-buffer them
        # when supported (halves their VMEM footprint; matters on v7x's 64 MiB VMEM).
        if buffer_residents:
            return pl.BlockSpec(shape, lambda t, b: (0,) * len(shape),
                                pipeline_mode=pl.Buffered(1))
        return pl.BlockSpec(shape, lambda t, b: (0,) * len(shape))

    # grid = (row-tiles, batch): the anchor blocks (index (t, 0)) are constant along the
    # inner batch axis, so Pallas skips their repeat DMAs across batch elements.
    packed = pl.pallas_call(
        kernel,
        out_shape=jax.ShapeDtypeStruct((B, HW, 4 * seg), jnp.float32),
        grid=(nT, B),
        in_specs=[
            pl.BlockSpec((1, TM, Kp), lambda t, b: (b, t, 0)),
            resident((Kp, Fp)),
            resident((1, Fp)),
            resident((Fp, 4 * seg)),
            resident((1, 4 * seg)),
            pl.BlockSpec((TM, seg), lambda t, b: (t, 0)),
            pl.BlockSpec((TM, seg), lambda t, b: (t, 0)),
            resident((1, seg)),
        ],
        out_specs=pl.BlockSpec((1, TM, 4 * seg), lambda t, b: (b, t, 0)),
        compiler_params=pltpu.CompilerParams(
            dimension_semantics=("parallel", "parallel"),
            vmem_limit_bytes=32 * 1024 * 1024),
    )(x_col, w3p, b3p, wh, bh, size_p, ctr_p, cmax)

    # ---- unpack the lane-dense slab: [scores | lo | hi | 0] ----
    scores = packed[:, :, :A].reshape(B, HW * A)                # == clf_output[:, 1, :]
    lo = packed[:, :, 1 * seg:1 * seg + 2 * A].reshape(B, HW, A, 2)
    hi = packed[:, :, 2 * seg:2 * seg + 2 * A].reshape(B, HW, A, 2)
    proposals = jnp.concatenate([lo, hi], axis=-1).reshape(B, HW * A, 4)
    return scores, proposals


def _pick_tile_rows(H, W):
    """Largest divisor of H keeping TM = TH*W <= 512 (fills v6e/v7x's 256-wide MXU)."""
    divs = [d for d in range(1, H + 1) if H % d == 0 and (d * W) % 8 == 0]
    if not divs:
        return H
    in_budget = [d for d in divs if d * W <= 512]
    return max(in_budget) if in_budget else min(divs)


def rpn_forward(x_nchw, params, anchors, image_shape, bboxes=None, tile_rows=None):
    B, C, H, W = x_nchw.shape
    if tile_rows is None:
        tile_rows = _pick_tile_rows(H, W)
    if H % tile_rows != 0 or (tile_rows * W) % 8 != 0:
        raise ValueError("tile_rows must divide H and tile_rows*W must be a multiple of 8")
    image_shape = tuple(int(s) for s in image_shape)

    # TODO(synk): _extract_rois (sort + sequential data-dependent NMS loop) has no clean
    # Pallas equivalent; the kernel stops at the pre-NMS scores/proposals stage.
    # TODO(synk): training branch (IoU vs `bboxes`, label assignment) is truncated in the
    # source module and not implemented.
    try:
        out = _rpn_forward_impl(x_nchw, params, anchors, image_shape,
                                tile_rows, True)
        jax.block_until_ready(out)
        return out
    except Exception:
        # pl.Buffered(1) residents unsupported on this jax/libtpu: fall back to the
        # default double-buffered residents (identical results, slightly more VMEM).
        return _rpn_forward_impl(x_nchw, params, anchors, image_shape,
                                 tile_rows, False)


def rpn_reference(x_nchw, params, anchors, image_shape):
    """Pure-JAX f32 reference mirroring the PyTorch forward (pre-NMS stage)."""
    B, C, H, W = x_nchw.shape
    F = params["w3"].shape[-1]
    A = params["bclf"].shape[0] // 2
    HW = H * W
    x = jnp.transpose(x_nchw, (0, 2, 3, 1))
    xp = jnp.pad(x, ((0, 0), (1, 1), (1, 1), (0, 0)))
    cols = [xp[:, ky:ky + H, kx:kx + W, :] for ky in range(3) for kx in range(3)]
    x_col = jnp.concatenate(cols, axis=-1).reshape(B, HW, 9 * C)
    feat = jax.nn.relu(x_col @ params["w3"].reshape(9 * C, F) + params["b3"])
    clf = feat @ params["wclf"] + params["bclf"]
    c0, c1 = clf[..., :A], clf[..., A:]
    sc = jax.nn.softmax(jnp.stack([c0, c1], axis=-1), axis=-1)[..., 1]
    scores = sc.reshape(B, HW * A)
    reg = (feat @ params["wreg"] + params["breg"]).reshape(B, HW * A, 4)
    sizes = anchors[:, 2:] - anchors[:, :2]
    ctrs = 0.5 * (anchors[:, 2:] + anchors[:, :2])
    pc = reg[..., :2] * sizes + ctrs
    ps = jnp.exp(reg[..., 2:]) * sizes
    props = jnp.concatenate([pc - 0.5 * ps, pc + 0.5 * ps], axis=-1)
    xm, ym = float(image_shape[1] - 1), float(image_shape[2] - 1)
    props = props.at[..., 0::2].set(jnp.clip(props[..., 0::2], 0.0, xm))
    props = props.at[..., 1::2].set(jnp.clip(props[..., 1::2], 0.0, ym))
    return scores, props


if __name__ == "__main__":
    B, C, H, W, F = 2, 4, 16, 16, 32
    ratios = (0.5, 1.0, 2.0)
    scales = (1.0, 2.0, 4.0)          # small scales for the small synthetic image
    A = len(ratios) * len(scales)
    stride, tile_size = 4, 8
    image_shape = (3, H * stride, W * stride)   # (C_img, H_img, W_img)

    key = jax.random.PRNGKey(0)
    kx_, k1, k2, k3, k4, k5, k6 = jax.random.split(key, 7)

    def bf16_round(a):   # quantize MXU operands once so bf16 kernel & f32 reference agree
        return jnp.asarray(a, jnp.bfloat16).astype(jnp.float32)

    x = bf16_round(jax.random.normal(kx_, (B, C, H, W), jnp.float32))
    params = dict(
        w3=bf16_round(0.05 * jax.random.normal(k1, (3, 3, C, F), jnp.float32)),
        b3=0.02 * jax.random.normal(k2, (F,), jnp.float32),
        wclf=bf16_round(0.05 * jax.random.normal(k3, (F, 2 * A), jnp.float32)),
        bclf=0.02 * jax.random.normal(k4, (2 * A,), jnp.float32),
        wreg=bf16_round(0.05 * jax.random.normal(k5, (F, 4 * A), jnp.float32)),
        breg=0.02 * jax.random.normal(k6, (4 * A,), jnp.float32),
    )
    anchors = jnp.asarray(generate_anchors((H, W), tile_size, stride, ratios, scales))

    scores, proposals = rpn_forward(x, params, anchors, image_shape)
    jax.block_until_ready((scores, proposals))

    ref_scores, ref_props = rpn_reference(x, params, anchors, image_shape)
    assert scores.shape == (B, H * W * A)
    assert proposals.shape == (B, H * W * A, 4)
    ok = bool(jnp.allclose(scores, ref_scores, rtol=2e-2, atol=2e-2)) and \
         bool(jnp.allclose(proposals, ref_props, rtol=2e-2, atol=1e-1))
    assert ok, "Pallas RPN output mismatch vs pure-JAX reference"
    print("KERNEL_OK")
</pallas_src>

<mosaic_0001>
module attributes {stable_mosaic.version = 11 : i64} {
  func.func @_rpn_kernel(%arg0: i32, %arg1: i32, %arg2: memref<1x256x128xbf16, #tpu.memory_space<vmem>>, %arg3: memref<128x128xbf16, #tpu.memory_space<vmem>>, %arg4: memref<1x128xf32, #tpu.memory_space<vmem>>, %arg5: memref<128x128xbf16, #tpu.memory_space<vmem>>, %arg6: memref<1x128xf32, #tpu.memory_space<vmem>>, %arg7: memref<256x32xf32, #tpu.memory_space<vmem>>, %arg8: memref<256x32xf32, #tpu.memory_space<vmem>>, %arg9: memref<1x32xf32, #tpu.memory_space<vmem>>, %arg10: memref<1x256x128xf32, #tpu.memory_space<vmem>>) attributes {dimension_semantics = [#tpu.dimension_semantics<parallel>, #tpu.dimension_semantics<parallel>], iteration_bounds = array<i64: 1, 2>, scalar_prefetch = 0 : i64, scratch_operands = 0 : i64, tpu.core_type = #tpu.core_type<tc>, window_params = [{transform_indices = @transform_0, window_bounds = array<i64: 1, 256, 128>}, {pipeline_mode = #tpu.pipeline_mode<synchronous>, transform_indices = @transform_1, window_bounds = array<i64: 128, 128>}, {pipeline_mode = #tpu.pipeline_mode<synchronous>, transform_indices = @transform_2, window_bounds = array<i64: 1, 128>}, {pipeline_mode = #tpu.pipeline_mode<synchronous>, transform_indices = @transform_3, window_bounds = array<i64: 128, 128>}, {pipeline_mode = #tpu.pipeline_mode<synchronous>, transform_indices = @transform_4, window_bounds = array<i64: 1, 128>}, {transform_indices = @transform_5, window_bounds = array<i64: 256, 32>}, {transform_indices = @transform_6, window_bounds = array<i64: 256, 32>}, {pipeline_mode = #tpu.pipeline_mode<synchronous>, transform_indices = @transform_7, window_bounds = array<i64: 1, 32>}, {transform_indices = @transform_8, window_bounds = array<i64: 1, 256, 128>}]} {
    %c0 = arith.constant 0 : index
    %c0_0 = arith.constant 0 : index
    %c0_1 = arith.constant 0 : index
    %0 = vector.load %arg2[%c0, %c0_0, %c0_1] : memref<1x256x128xbf16, #tpu.memory_space<vmem>>, vector<1x256x128xbf16>
    %1 = vector.shape_cast %0 : vector<1x256x128xbf16> to vector<256x128xbf16>
    %c0_2 = arith.constant 0 : index
    %c0_3 = arith.constant 0 : index
    %2 = vector.load %arg3[%c0_2, %c0_3] : memref<128x128xbf16, #tpu.memory_space<vmem>>, vector<128x128xbf16>
    %cst = arith.constant dense<0.000000e+00> : vector<256x128xf32>
    %3 = tpu.matmul %1, %2, %cst {dimension_numbers = #tpu.dot_dimension_numbers<[1], [0], [0], [1], [0, 0, 1, 1], [], []>} : vector<256x128xbf16>, vector<128x128xbf16>, vector<256x128xf32> -> vector<256x128xf32>
    %c0_4 = arith.constant 0 : index
    %c0_5 = arith.constant 0 : index
    %4 = vector.load %arg4[%c0_4, %c0_5] : memref<1x128xf32, #tpu.memory_space<vmem>>, vector<1x128xf32>
    %5 = vector.broadcast %4 : vector<1x128xf32> to vector<256x128xf32>
    %6 = arith.addf %3, %5 : vector<256x128xf32>
    %cst_6 = arith.constant 0.000000e+00 : f32
    %7 = vector.broadcast %cst_6 : f32 to vector<256x128xf32>
    %8 = arith.maximumf %6, %7 : vector<256x128xf32>
    %9 = arith.truncf %8 : vector<256x128xf32> to vector<256x128xbf16>
    %c0_7 = arith.constant 0 : index
    %c0_8 = arith.constant 0 : index
    %10 = vector.load %arg5[%c0_7, %c0_8] : memref<128x128xbf16, #tpu.memory_space<vmem>>, vector<128x128xbf16>
    %cst_9 = arith.constant dense<0.000000e+00> : vector<256x128xf32>
    %11 = tpu.matmul %9, %10, %cst_9 {dimension_numbers = #tpu.dot_dimension_numbers<[1], [0], [0], [1], [0, 0, 1, 1], [], []>} : vector<256x128xbf16>, vector<128x128xbf16>, vector<256x128xf32> -> vector<256x128xf32>
    %c0_10 = arith.constant 0 : index
    %c0_11 = arith.constant 0 : index
    %12 = vector.load %arg6[%c0_10, %c0_11] : memref<1x128xf32, #tpu.memory_space<vmem>>, vector<1x128xf32>
    %13 = vector.broadcast %12 : vector<1x128xf32> to vector<256x128xf32>
    %14 = arith.addf %11, %13 : vector<256x128xf32>
    %15 = vector.extract_strided_slice %14 {offsets = [0, 0], sizes = [256, 32], strides = [1, 1]} : vector<256x128xf32> to vector<256x32xf32>
    %16 = vector.extract_strided_slice %14 {offsets = [0, 32], sizes = [256, 32], strides = [1, 1]} : vector<256x128xf32> to vector<256x32xf32>
    %17 = vector.extract_strided_slice %14 {offsets = [0, 64], sizes = [256, 32], strides = [1, 1]} : vector<256x128xf32> to vector<256x32xf32>
    %18 = vector.extract_strided_slice %14 {offsets = [0, 96], sizes = [256, 32], strides = [1, 1]} : vector<256x128xf32> to vector<256x32xf32>
    %19 = arith.subf %15, %16 : vector<256x32xf32>
    %20 = math.exp %19 : vector<256x32xf32>
    %cst_12 = arith.constant 1.000000e+00 : f32
    %21 = vector.broadcast %cst_12 : f32 to vector<256x32xf32>
    %22 = arith.addf %21, %20 : vector<256x32xf32>
    %23 = tpu.reciprocal %22 : vector<256x32xf32> -> vector<256x32xf32>
    %c0_13 = arith.constant 0 : index
    %c0_14 = arith.constant 0 : index
    %24 = vector.load %arg7[%c0_13, %c0_14] : memref<256x32xf32, #tpu.memory_space<vmem>>, vector<256x32xf32>
    %c0_15 = arith.constant 0 : index
    %c0_16 = arith.constant 0 : index
    %25 = vector.load %arg8[%c0_15, %c0_16] : memref<256x32xf32, #tpu.memory_space<vmem>>, vector<256x32xf32>
    %c0_17 = arith.constant 0 : index
    %c0_18 = arith.constant 0 : index
    %26 = vector.load %arg9[%c0_17, %c0_18] : memref<1x32xf32, #tpu.memory_space<vmem>>, vector<1x32xf32>
    %27 = arith.mulf %17, %24 : vector<256x32xf32>
    %28 = arith.addf %27, %25 : vector<256x32xf32>
    %29 = math.exp %18 : vector<256x32xf32>
    %30 = arith.mulf %29, %24 : vector<256x32xf32>
    %cst_19 = arith.constant 5.000000e-01 : f32
    %31 = vector.broadcast %cst_19 : f32 to vector<256x32xf32>
    %32 = arith.mulf %31, %30 : vector<256x32xf32>
    %33 = arith.subf %28, %32 : vector<256x32xf32>
    %cst_20 = arith.constant 0.000000e+00 : f32
    %34 = vector.broadcast %cst_20 : f32 to vector<256x32xf32>
    %35 = arith.maximumf %34, %33 : vector<256x32xf32>
    %36 = vector.broadcast %26 : vector<1x32xf32> to vector<256x32xf32>
    %37 = arith.minimumf %36, %35 : vector<256x32xf32>
    %cst_21 = arith.constant 5.000000e-01 : f32
    %38 = vector.broadcast %cst_21 : f32 to vector<256x32xf32>
    %39 = arith.mulf %38, %30 : vector<256x32xf32>
    %40 = arith.addf %28, %39 : vector<256x32xf32>
    %cst_22 = arith.constant 0.000000e+00 : f32
    %41 = vector.broadcast %cst_22 : f32 to vector<256x32xf32>
    %42 = arith.maximumf %41, %40 : vector<256x32xf32>
    %43 = vector.broadcast %26 : vector<1x32xf32> to vector<256x32xf32>
    %44 = arith.minimumf %43, %42 : vector<256x32xf32>
    %cst_23 = arith.constant 0.000000e+00 : f32
    %45 = vector.broadcast %cst_23 : f32 to vector<256x32xf32>
    %46 = tpu.concatenate %23, %37, %44, %45 in 1 : vector<256x32xf32>, vector<256x32xf32>, vector<256x32xf32>, vector<256x32xf32> -> vector<256x128xf32>
    %c0_24 = arith.constant 0 : index
    %c0_25 = arith.constant 0 : index
    %c0_26 = arith.constant 0 : index
    %47 = vector.load %arg10[%c0_24, %c0_25, %c0_26] : memref<1x256x128xf32, #tpu.memory_space<vmem>>, vector<1x256x128xf32>
    %48 = vector.shape_cast %47 : vector<1x256x128xf32> to vector<256x128xf32>
    %49 = vector.shape_cast %46 : vector<256x128xf32> to vector<1x256x128xf32>
    tpu.vector_store %arg10[%c0_24, %c0_25, %c0_26], %49 {strides = array<i32>} : memref<1x256x128xf32, #tpu.memory_space<vmem>>, vector<1x256x128xf32>,
    return
  }
  func.func @transform_0(%arg0: i32, %arg1: i32) -> (i32, i32, i32) {
    %c0_i32 = arith.constant 0 : i32
    %c0_i32_0 = arith.constant 0 : i32
    return %arg1, %arg0, %c0_i32 : i32, i32, i32
  }
  func.func @transform_1(%arg0: i32, %arg1: i32) -> (i32, i32) {
    %c0_i32 = arith.constant 0 : i32
    %c0_i32_0 = arith.constant 0 : i32
    %c0_i32_1 = arith.constant 0 : i32
    return %c0_i32, %c0_i32_0 : i32, i32
  }
  func.func @transform_2(%arg0: i32, %arg1: i32) -> (i32, i32) {
    %c0_i32 = arith.constant 0 : i32
    %c0_i32_0 = arith.constant 0 : i32
    %c0_i32_1 = arith.constant 0 : i32
    return %c0_i32, %c0_i32_0 : i32, i32
  }
  func.func @transform_3(%arg0: i32, %arg1: i32) -> (i32, i32) {
    %c0_i32 = arith.constant 0 : i32
    %c0_i32_0 = arith.constant 0 : i32
    %c0_i32_1 = arith.constant 0 : i32
    return %c0_i32, %c0_i32_0 : i32, i32
  }
  func.func @transform_4(%arg0: i32, %arg1: i32) -> (i32, i32) {
    %c0_i32 = arith.constant 0 : i32
    %c0_i32_0 = arith.constant 0 : i32
    %c0_i32_1 = arith.constant 0 : i32
    return %c0_i32, %c0_i32_0 : i32, i32
  }
  func.func @transform_5(%arg0: i32, %arg1: i32) -> (i32, i32) {
    %c0_i32 = arith.constant 0 : i32
    %c0_i32_0 = arith.constant 0 : i32
    return %arg0, %c0_i32 : i32, i32
  }
  func.func @transform_6(%arg0: i32, %arg1: i32) -> (i32, i32) {
    %c0_i32 = arith.constant 0 : i32
    %c0_i32_0 = arith.constant 0 : i32
    return %arg0, %c0_i32 : i32, i32
  }
  func.func @transform_7(%arg0: i32, %arg1: i32) -> (i32, i32) {
    %c0_i32 = arith.constant 0 : i32
    %c0_i32_0 = arith.constant 0 : i32
    %c0_i32_1 = arith.constant 0 : i32
    return %c0_i32, %c0_i32_0 : i32, i32
  }
  func.func @transform_8(%arg0: i32, %arg1: i32) -> (i32, i32, i32) {
    %c0_i32 = arith.constant 0 : i32
    %c0_i32_0 = arith.constant 0 : i32
    return %arg1, %arg0, %c0_i32 : i32, i32, i32
  }
}

module attributes {stable_mosaic.version = 11 : i64} {
  func.func @_rpn_kernel(%arg0: i32, %arg1: i32, %arg2: memref<1x256x128xbf16, #tpu.memory_space<vmem>>, %arg3: memref<128x128xbf16, #tpu.memory_space<vmem>>, %arg4: memref<1x128xf32, #tpu.memory_space<vmem>>, %arg5: memref<128x128xbf16, #tpu.memory_space<vmem>>, %arg6: memref<1x128xf32, #tpu.memory_space<vmem>>, %arg7: memref<256x32xf32, #tpu.memory_space<vmem>>, %arg8: memref<256x32xf32, #tpu.memory_space<vmem>>, %arg9: memref<1x32xf32, #tpu.memory_space<vmem>>, %arg10: memref<1x256x128xf32, #tpu.memory_space<vmem>>) attributes {dimension_semantics = [#tpu.dimension_semantics<parallel>, #tpu.dimension_semantics<parallel>], iteration_bounds = array<i64: 1, 2>, scalar_prefetch = 0 : i64, scratch_operands = 0 : i64, tpu.core_type = #tpu.core_type<tc>, window_params = [{transform_indices = @transform_0, window_bounds = array<i64: 1, 256, 128>}, {pipeline_mode = #tpu.pipeline_mode<synchronous>, transform_indices = @transform_1, window_bounds = array<i64: 128, 128>}, {pipeline_mode = #tpu.pipeline_mode<synchronous>, transform_indices = @transform_2, window_bounds = array<i64: 1, 128>}, {pipeline_mode = #tpu.pipeline_mode<synchronous>, transform_indices = @transform_3, window_bounds = array<i64: 128, 128>}, {pipeline_mode = #tpu.pipeline_mode<synchronous>, transform_indices = @transform_4, window_bounds = array<i64: 1, 128>}, {transform_indices = @transform_5, window_bounds = array<i64: 256, 32>}, {transform_indices = @transform_6, window_bounds = array<i64: 256, 32>}, {pipeline_mode = #tpu.pipeline_mode<synchronous>, transform_indices = @transform_7, window_bounds = array<i64: 1, 32>}, {transform_indices = @transform_8, window_bounds = array<i64: 1, 256, 128>}]} {
    %c0 = arith.constant 0 : index
    %c0_0 = arith.constant 0 : index
    %c0_1 = arith.constant 0 : index
    %0 = vector.load %arg2[%c0, %c0_0, %c0_1] : memref<1x256x128xbf16, #tpu.memory_space<vmem>>, vector<1x256x128xbf16>
    %1 = vector.shape_cast %0 : vector<1x256x128xbf16> to vector<256x128xbf16>
    %c0_2 = arith.constant 0 : index
    %c0_3 = arith.constant 0 : index
    %2 = vector.load %arg3[%c0_2, %c0_3] : memref<128x128xbf16, #tpu.memory_space<vmem>>, vector<128x128xbf16>
    %cst = arith.constant dense<0.000000e+00> : vector<256x128xf32>
    %3 = tpu.matmul %1, %2, %cst {dimension_numbers = #tpu.dot_dimension_numbers<[1], [0], [0], [1], [0, 0, 1, 1], [], []>} : vector<256x128xbf16>, vector<128x128xbf16>, vector<256x128xf32> -> vector<256x128xf32>
    %c0_4 = arith.constant 0 : index
    %c0_5 = arith.constant 0 : index
    %4 = vector.load %arg4[%c0_4, %c0_5] : memref<1x128xf32, #tpu.memory_space<vmem>>, vector<1x128xf32>
    %5 = vector.broadcast %4 : vector<1x128xf32> to vector<256x128xf32>
    %6 = arith.addf %3, %5 : vector<256x128xf32>
    %cst_6 = arith.constant 0.000000e+00 : f32
    %7 = vector.broadcast %cst_6 : f32 to vector<256x128xf32>
    %8 = arith.maximumf %6, %7 : vector<256x128xf32>
    %9 = arith.truncf %8 : vector<256x128xf32> to vector<256x128xbf16>
    %c0_7 = arith.constant 0 : index
    %c0_8 = arith.constant 0 : index
    %10 = vector.load %arg5[%c0_7, %c0_8] : memref<128x128xbf16, #tpu.memory_space<vmem>>, vector<128x128xbf16>
    %cst_9 = arith.constant dense<0.000000e+00> : vector<256x128xf32>
    %11 = tpu.matmul %9, %10, %cst_9 {dimension_numbers = #tpu.dot_dimension_numbers<[1], [0], [0], [1], [0, 0, 1, 1], [], []>} : vector<256x128xbf16>, vector<128x128xbf16>, vector<256x128xf32> -> vector<256x128xf32>
    %c0_10 = arith.constant 0 : index
    %c0_11 = arith.constant 0 : index
    %12 = vector.load %arg6[%c0_10, %c0_11] : memref<1x128xf32, #tpu.memory_space<vmem>>, vector<1x128xf32>
    %13 = vector.broadcast %12 : vector<1x128xf32> to vector<256x128xf32>
    %14 = arith.addf %11, %13 : vector<256x128xf32>
    %15 = vector.extract_strided_slice %14 {offsets = [0, 0], sizes = [256, 32], strides = [1, 1]} : vector<256x128xf32> to vector<256x32xf32>
    %16 = vector.extract_strided_slice %14 {offsets = [0, 32], sizes = [256, 32], strides = [1, 1]} : vector<256x128xf32> to vector<256x32xf32>
    %17 = vector.extract_strided_slice %14 {offsets = [0, 64], sizes = [256, 32], strides = [1, 1]} : vector<256x128xf32> to vector<256x32xf32>
    %18 = vector.extract_strided_slice %14 {offsets = [0, 96], sizes = [256, 32], strides = [1, 1]} : vector<256x128xf32> to vector<256x32xf32>
    %19 = arith.subf %15, %16 : vector<256x32xf32>
    %20 = math.exp %19 : vector<256x32xf32>
    %cst_12 = arith.constant 1.000000e+00 : f32
    %21 = vector.broadcast %cst_12 : f32 to vector<256x32xf32>
    %22 = arith.addf %21, %20 : vector<256x32xf32>
    %23 = tpu.reciprocal %22 : vector<256x32xf32> -> vector<256x32xf32>
    %c0_13 = arith.constant 0 : index
    %c0_14 = arith.constant 0 : index
    %24 = vector.load %arg7[%c0_13, %c0_14] : memref<256x32xf32, #tpu.memory_space<vmem>>, vector<256x32xf32>
    %c0_15 = arith.constant 0 : index
    %c0_16 = arith.constant 0 : index
    %25 = vector.load %arg8[%c0_15, %c0_16] : memref<256x32xf32, #tpu.memory_space<vmem>>, vector<256x32xf32>
    %c0_17 = arith.constant 0 : index
    %c0_18 = arith.constant 0 : index
    %26 = vector.load %arg9[%c0_17, %c0_18] : memref<1x32xf32, #tpu.memory_space<vmem>>, vector<1x32xf32>
    %27 = arith.mulf %17, %24 : vector<256x32xf32>
    %28 = arith.addf %27, %25 : vector<256x32xf32>
    %29 = math.exp %18 : vector<256x32xf32>
    %30 = arith.mulf %29, %24 : vector<256x32xf32>
    %cst_19 = arith.constant 5.000000e-01 : f32
    %31 = vector.broadcast %cst_19 : f32 to vector<256x32xf32>
    %32 = arith.mulf %31, %30 : vector<256x32xf32>
    %33 = arith.subf %28, %32 : vector<256x32xf32>
    %cst_20 = arith.constant 0.000000e+00 : f32
    %34 = vector.broadcast %cst_20 : f32 to vector<256x32xf32>
    %35 = arith.maximumf %34, %33 : vector<256x32xf32>
    %36 = vector.broadcast %26 : vector<1x32xf32> to vector<256x32xf32>
    %37 = arith.minimumf %36, %35 : vector<256x32xf32>
    %cst_21 = arith.constant 5.000000e-01 : f32
    %38 = vector.broadcast %cst_21 : f32 to vector<256x32xf32>
    %39 = arith.mulf %38, %30 : vector<256x32xf32>
    %40 = arith.addf %28, %39 : vector<256x32xf32>
    %cst_22 = arith.constant 0.000000e+00 : f32
    %41 = vector.broadcast %cst_22 : f32 to vector<256x32xf32>
    %42 = arith.maximumf %41, %40 : vector<256x32xf32>
    %43 = vector.broadcast %26 : vector<1x32xf32> to vector<256x32xf32>
    %44 = arith.minimumf %43, %42 : vector<256x32xf32>
    %cst_23 = arith.constant 0.000000e+00 : f32
    %45 = vector.broadcast %cst_23 : f32 to vector<256x32xf32>
    %46 = tpu.concatenate %23, %37, %44, %45 in 1 : vector<256x32xf32>, vector<256x32xf32>, vector<256x32xf32>, vector<256x32xf32> -> vector<256x128xf32>
    %c0_24 = arith.constant 0 : index
    %c0_25 = arith.constant 0 : index
    %c0_26 = arith.constant 0 : index
    %47 = vector.load %arg10[%c0_24, %c0_25, %c0_26] : memref<1x256x128xf32, #tpu.memory_space<vmem>>, vector<1x256x128xf32>
    %48 = vector.shape_cast %47 : vector<1x256x128xf32> to vector<256x128xf32>
    %49 = vector.shape_cast %46 : vector<256x128xf32> to vector<1x256x128xf32>
    tpu.vector_store %arg10[%c0_24, %c0_25, %c0_26], %49 {strides = array<i32>} : memref<1x256x128xf32, #tpu.memory_space<vmem>>, vector<1x256x128xf32>,
    return
  }
  func.func @transform_0(%arg0: i32, %arg1: i32) -> (i32, i32, i32) {
    %c0_i32 = arith.constant 0 : i32
    %c0_i32_0 = arith.constant 0 : i32
    return %arg1, %arg0, %c0_i32 : i32, i32, i32
  }
  func.func @transform_1(%arg0: i32, %arg1: i32) -> (i32, i32) {
    %c0_i32 = arith.constant 0 : i32
    %c0_i32_0 = arith.constant 0 : i32
    %c0_i32_1 = arith.constant 0 : i32
    return %c0_i32, %c0_i32_0 : i32, i32
  }
  func.func @transform_2(%arg0: i32, %arg1: i32) -> (i32, i32) {
    %c0_i32 = arith.constant 0 : i32
    %c0_i32_0 = arith.constant 0 : i32
    %c0_i32_1 = arith.constant 0 : i32
    return %c0_i32, %c0_i32_0 : i32, i32
  }
  func.func @transform_3(%arg0: i32, %arg1: i32) -> (i32, i32) {
    %c0_i32 = arith.constant 0 : i32
    %c0_i32_0 = arith.constant 0 : i32
    %c0_i32_1 = arith.constant 0 : i32
    return %c0_i32, %c0_i32_0 : i32, i32
  }
  func.func @transform_4(%arg0: i32, %arg1: i32) -> (i32, i32) {
    %c0_i32 = arith.constant 0 : i32
    %c0_i32_0 = arith.constant 0 : i32
    %c0_i32_1 = arith.constant 0 : i32
    return %c0_i32, %c0_i32_0 : i32, i32
  }
  func.func @transform_5(%arg0: i32, %arg1: i32) -> (i32, i32) {
    %c0_i32 = arith.constant 0 : i32
    %c0_i32_0 = arith.constant 0 : i32
    return %arg0, %c0_i32 : i32, i32
  }
  func.func @transform_6(%arg0: i32, %arg1: i32) -> (i32, i32) {
    %c0_i32 = arith.constant 0 : i32
    %c0_i32_0 = arith.constant 0 : i32
    return %arg0, %c0_i32 : i32, i32
  }
  func.func @transform_7(%arg0: i32, %arg1: i32) -> (i32, i32) {
    %c0_i32 = arith.constant 0 : i32
    %c0_i32_0 = arith.constant 0 : i32
    %c0_i32_1 = arith.constant 0 : i32
    return %c0_i32, %c0_i32_0 : i32, i32
  }
  func.func @transform_8(%arg0: i32, %arg1: i32) -> (i32, i32, i32) {
    %c0_i32 = arith.constant 0 : i32
    %c0_i32_0 = arith.constant 0 : i32
    return %arg1, %arg0, %c0_i32 : i32, i32, i32
  }
}

</mosaic_0001>

<llo_original>
// kernel: _rpn_forward_impl.1
$region0: #{_rpn_forward_impl.1}
  #allocation0 [shape = 'u32[]', space=smem, size = 0x4, offset = 0x4, fixed_abs, tag = 'smem constant byte address 0x4 - core index']
  #allocation1 [shape = 'u32[72,128]{1,0:T(1,128)}', space=vmem, size = 0x9000, scoped, tag = 'internal scratch']
  %s0 = inlined_call_operand.vmem [shape: bf16[2,256,128], index: 0, kind: input, shape index: {}]
  %s1 = inlined_call_operand.vmem [shape: bf16[128,128], index: 1, kind: input, shape index: {}]
  %s2 = inlined_call_operand.vmem [shape: f32[1,128], index: 2, kind: input, shape index: {}]
  %s3 = inlined_call_operand.vmem [shape: bf16[128,128], index: 3, kind: input, shape index: {}]
  %s4 = inlined_call_operand.vmem [shape: f32[1,128], index: 4, kind: input, shape index: {}]
  %s5 = inlined_call_operand.vmem [shape: f32[256,32], index: 5, kind: input, shape index: {}]
  %s6 = inlined_call_operand.vmem [shape: f32[256,32], index: 6, kind: input, shape index: {}]
  %s7 = inlined_call_operand.vmem [shape: f32[1,32], index: 7, kind: input, shape index: {}]
  %s8 = inlined_call_operand.vmem [shape: f32[2,256,128], index: 8, kind: output, shape index: {}]
  %s9 = sld [smem:[#allocation0]]
  $region65: #{_rpn_forward_impl.1} parent=0
    _
  %s11 = ssub.s32 1, %s9
  %s12 = scalar_select 0, %s11, %s9
  loop: start=0, step=1, limit=4
  $region2: #{_rpn_forward_impl.1} parent=0 // loop_pre_header
    _
  $region3: #{_rpn_forward_impl.1} parent=0 // loop_header
    %s14 = sphi 0, %s18
    %p15 = scmp.ge.s32.totalorder %s14, 4
    %s21 = sphi 0, %s33
    %s22 = sphi 0, %s29
    %s23 = sphi 0, %s21
    %s24 = sphi 0, %s22
    %s25 = sphi 0, %s23
    %s26 = sphi 0, %s24
    %s38 = sphi 0, %s40
    %s41 = sphi 0, %s38
    %s42 = sphi 0, %s41
    %s58 = sphi 0, %s42
    %s62 = sphi 0, %s62
    %s64 = sphi 0, %s62
    %s65 = sphi 0, %s64
    %s79 = sphi 0, %s65
    %s83 = sphi 0, %s83
    %s85 = sphi 0, %s83
    %s86 = sphi 0, %s85
    %s100 = sphi 0, %s86
    %s104 = sphi 0, %s104
    %s106 = sphi 0, %s104
    %s107 = sphi 0, %s106
    %s121 = sphi 0, %s107
    %s125 = sphi 0, %s125
    %s127 = sphi 0, %s125
    %s128 = sphi 0, %s127
    %s142 = sphi 0, %s128
    %s148 = sphi 0, %s150
    %s151 = sphi 0, %s148
    %s152 = sphi 0, %s151
    %s168 = sphi 0, %s152
    %s174 = sphi 0, %s176
    %s177 = sphi 0, %s174
    %s178 = sphi 0, %s177
    %s194 = sphi 0, %s178
    %s198 = sphi 0, %s198
    %s200 = sphi 0, %s198
    %s201 = sphi 0, %s200
    %s215 = sphi 0, %s201
    %s223 = sphi 0, %s225
    %s226 = sphi 0, %s223
    %s227 = sphi 0, %s226
    %s243 = sphi 0, %s227
  $region4: #{_rpn_forward_impl.1} parent=0 // loop_header_branch
    %17 = sbr.rel (%p15) target = $region8
  $region5: #{_rpn_forward_impl.1} parent=0 // loop_body
    %s19 = ssub.s32 %s14, 1
    %s20 = ssub.s32 %s14, 2
    %s27 = sadd.s32 1, %s22
    %p28 = scmp.ge.s32.totalorder %s27, 2
    %s29 = scalar_select %p28, 0, %s27
    %s30 = sadd.s32 1, %s21
    %s31 = scalar_select %p28, %s30, %s21
    %p32 = scmp.ge.s32.totalorder %s31, 1
    %s33 = scalar_select %p32, 0, %s31
    %s34 = ssub.s32 %s22, %s29
    %s35 = ssub.s32 %s21, %s33
    %s36 = sor.u32 %s34, %s35
    %p37 = scmp.eq.s32.totalorder %s36, 0
    %s39 = sadd.s32 %s38, 1
    %s40 = scalar_select %p37, %s38, %s39
    %p43 = pneg %p37
    %p44 = scmp.eq.s32.totalorder %s14, 1
    %p45 = por %p43, %p44
    %p46 = scmp.ne.s32.totalorder %s38, %s41
    %p47 = scmp.eq.s32.totalorder %s14, 0
    %p48 = por %p46, %p47
    %p49 = scmp.ne.s32.totalorder %s38, %s41
    %p50 = scmp.eq.s32.totalorder %s19, 1
    %p51 = por %p49, %p50
    %p52 = scmp.ne.s32.totalorder %s41, %s42
    %p53 = scmp.eq.s32.totalorder %s19, 0
    %p54 = por %p52, %p53
    %p55 = scmp.ne.s32.totalorder %s41, %s42
    %p56 = scmp.eq.s32.totalorder %s20, 1
    %p57 = por %p55, %p56
    %p59 = scmp.ne.s32.totalorder %s42, %s58
    %p60 = scmp.eq.s32.totalorder %s20, 0
    %p61 = por %p59, %p60
    %s63 = sadd.s32 %s62, 1
    %p66 = scmp.eq.s32.totalorder %s14, 1
    %p67 = scmp.ne.s32.totalorder %s62, %s64
    %p68 = scmp.eq.s32.totalorder %s14, 0
    %p69 = por %p67, %p68
    %p70 = scmp.ne.s32.totalorder %s62, %s64
    %p71 = scmp.eq.s32.totalorder %s19, 1
    %p72 = por %p70, %p71
    %p73 = scmp.ne.s32.totalorder %s64, %s65
    %p74 = scmp.eq.s32.totalorder %s19, 0
    %p75 = por %p73, %p74
    %p76 = scmp.ne.s32.totalorder %s64, %s65
    %p77 = scmp.eq.s32.totalorder %s20, 1
    %p78 = por %p76, %p77
    %p80 = scmp.ne.s32.totalorder %s65, %s79
    %p81 = scmp.eq.s32.totalorder %s20, 0
    %p82 = por %p80, %p81
    %s84 = sadd.s32 %s83, 1
    %p87 = scmp.eq.s32.totalorder %s14, 1
    %p88 = scmp.ne.s32.totalorder %s83, %s85
    %p89 = scmp.eq.s32.totalorder %s14, 0
    %p90 = por %p88, %p89
    %p91 = scmp.ne.s32.totalorder %s83, %s85
    %p92 = scmp.eq.s32.totalorder %s19, 1
    %p93 = por %p91, %p92
    %p94 = scmp.ne.s32.totalorder %s85, %s86
    %p95 = scmp.eq.s32.totalorder %s19, 0
    %p96 = por %p94, %p95
    %p97 = scmp.ne.s32.totalorder %s85, %s86
    %p98 = scmp.eq.s32.totalorder %s20, 1
    %p99 = por %p97, %p98
    %p101 = scmp.ne.s32.totalorder %s86, %s100
    %p102 = scmp.eq.s32.totalorder %s20, 0
    %p103 = por %p101, %p102
    %s105 = sadd.s32 %s104, 1
    %p108 = scmp.eq.s32.totalorder %s14, 1
    %p109 = scmp.ne.s32.totalorder %s104, %s106
    %p110 = scmp.eq.s32.totalorder %s14, 0
    %p111 = por %p109, %p110
    %p112 = scmp.ne.s32.totalorder %s104, %s106
    %p113 = scmp.eq.s32.totalorder %s19, 1
    %p114 = por %p112, %p113
    %p115 = scmp.ne.s32.totalorder %s106, %s107
    %p116 = scmp.eq.s32.totalorder %s19, 0
    %p117 = por %p115, %p116
    %p118 = scmp.ne.s32.totalorder %s106, %s107
    %p119 = scmp.eq.s32.totalorder %s20, 1
    %p120 = por %p118, %p119
    %p122 = scmp.ne.s32.totalorder %s107, %s121
    %p123 = scmp.eq.s32.totalorder %s20, 0
    %p124 = por %p122, %p123
    %s126 = sadd.s32 %s125, 1
    %p129 = scmp.eq.s32.totalorder %s14, 1
    %p130 = scmp.ne.s32.totalorder %s125, %s127
    %p131 = scmp.eq.s32.totalorder %s14, 0
    %p132 = por %p130, %p131
    %p133 = scmp.ne.s32.totalorder %s125, %s127
    %p134 = scmp.eq.s32.totalorder %s19, 1
    %p135 = por %p133, %p134
    %p136 = scmp.ne.s32.totalorder %s127, %s128
    %p137 = scmp.eq.s32.totalorder %s19, 0
    %p138 = por %p136, %p137
    %p139 = scmp.ne.s32.totalorder %s127, %s128
    %p140 = scmp.eq.s32.totalorder %s20, 1
    %p141 = por %p139, %p140
    %p143 = scmp.ne.s32.totalorder %s128, %s142
    %p144 = scmp.eq.s32.totalorder %s20, 0
    %p145 = por %p143, %p144
    %s146 = ssub.s32 %s21, %s33
    %p147 = scmp.eq.s32.totalorder %s146, 0
    %s149 = sadd.s32 %s148, 1
    %s150 = scalar_select %p147, %s148, %s149
    %p153 = pneg %p147
    %p154 = scmp.eq.s32.totalorder %s14, 1
    %p155 = por %p153, %p154
    %p156 = scmp.ne.s32.totalorder %s148, %s151
    %p157 = scmp.eq.s32.totalorder %s14, 0
    %p158 = por %p156, %p157
    %p159 = scmp.ne.s32.totalorder %s148, %s151
    %p160 = scmp.eq.s32.totalorder %s19, 1
    %p161 = por %p159, %p160
    %p162 = scmp.ne.s32.totalorder %s151, %s152
    %p163 = scmp.eq.s32.totalorder %s19, 0
    %p164 = por %p162, %p163
    %p165 = scmp.ne.s32.totalorder %s151, %s152
    %p166 = scmp.eq.s32.totalorder %s20, 1
    %p167 = por %p165, %p166
    %p169 = scmp.ne.s32.totalorder %s152, %s168
    %p170 = scmp.eq.s32.totalorder %s20, 0
    %p171 = por %p169, %p170
    %s172 = ssub.s32 %s21, %s33
    %p173 = scmp.eq.s32.totalorder %s172, 0
    %s175 = sadd.s32 %s174, 1
    %s176 = scalar_select %p173, %s174, %s175
    %p179 = pneg %p173
    %p180 = scmp.eq.s32.totalorder %s14, 1
    %p181 = por %p179, %p180
    %p182 = scmp.ne.s32.totalorder %s174, %s177
    %p183 = scmp.eq.s32.totalorder %s14, 0
    %p184 = por %p182, %p183
    %p185 = scmp.ne.s32.totalorder %s174, %s177
    %p186 = scmp.eq.s32.totalorder %s19, 1
    %p187 = por %p185, %p186
    %p188 = scmp.ne.s32.totalorder %s177, %s178
    %p189 = scmp.eq.s32.totalorder %s19, 0
    %p190 = por %p188, %p189
    %p191 = scmp.ne.s32.totalorder %s177, %s178
    %p192 = scmp.eq.s32.totalorder %s20, 1
    %p193 = por %p191, %p192
    %p195 = scmp.ne.s32.totalorder %s178, %s194
    %p196 = scmp.eq.s32.totalorder %s20, 0
    %p197 = por %p195, %p196
    %s199 = sadd.s32 %s198, 1
    %p202 = scmp.eq.s32.totalorder %s14, 1
    %p203 = scmp.ne.s32.totalorder %s198, %s200
    %p204 = scmp.eq.s32.totalorder %s14, 0
    %p205 = por %p203, %p204
    %p206 = scmp.ne.s32.totalorder %s198, %s200
    %p207 = scmp.eq.s32.totalorder %s19, 1
    %p208 = por %p206, %p207
    %p209 = scmp.ne.s32.totalorder %s200, %s201
    %p210 = scmp.eq.s32.totalorder %s19, 0
    %p211 = por %p209, %p210
    %p212 = scmp.ne.s32.totalorder %s200, %s201
    %p213 = scmp.eq.s32.totalorder %s20, 1
    %p214 = por %p212, %p213
    %p216 = scmp.ne.s32.totalorder %s201, %s215
    %p217 = scmp.eq.s32.totalorder %s20, 0
    %p218 = por %p216, %p217
    %s219 = ssub.s32 %s22, %s29
    %s220 = ssub.s32 %s21, %s33
    %s221 = sor.u32 %s219, %s220
    %p222 = scmp.eq.s32.totalorder %s221, 0
    %s224 = sadd.s32 %s223, 1
    %s225 = scalar_select %p222, %s223, %s224
    %p228 = pneg %p222
    %p229 = scmp.eq.s32.totalorder %s14, 1
    %p230 = por %p228, %p229
    %p231 = scmp.ne.s32.totalorder %s223, %s226
    %p232 = scmp.eq.s32.totalorder %s14, 0
    %p233 = por %p231, %p232
    %p234 = scmp.ne.s32.totalorder %s223, %s226
    %p235 = scmp.eq.s32.totalorder %s19, 1
    %p236 = por %p234, %p235
    %p237 = scmp.ne.s32.totalorder %s226, %s227
    %p238 = scmp.eq.s32.totalorder %s19, 0
    %p239 = por %p237, %p238
    %p240 = scmp.ne.s32.totalorder %s226, %s227
    %p241 = scmp.eq.s32.totalorder %s20, 1
    %p242 = por %p240, %p241
    %p244 = scmp.ne.s32.totalorder %s227, %s243
    %p245 = scmp.eq.s32.totalorder %s20, 0
    %p246 = por %p244, %p245
    %p247 = scmp.le.s32.totalorder 1, %s14
    %p248 = scmp.lt.s32.totalorder %s14, 3
    %p249 = pnand %p247, %p248
    %p250 = pneg %p249
    // Predicated region
    $region9: #{_rpn_forward_impl.1} parent=5 // pred_check
      _
    $region10: #{_rpn_forward_impl.1} parent=5 // pred_check_branch
      %252 = sbr.rel (%p249) target = $region12
    $region11: #{_rpn_forward_impl.1} parent=5 // pred_region
      %s253 = ssub.s32 %s14, 1
      // Predicated region
      $region13: #{_rpn_forward_impl.1} parent=11 // pred_check
        %p254 = pneg %p75
      $region14: #{_rpn_forward_impl.1} parent=11 // pred_check_branch
        %256 = sbr.rel (%p254) target = $region16
      $region15: #{_rpn_forward_impl.1} parent=11 // pred_region
        _
      $region16: #{_rpn_forward_impl.1} parent=11 // pred_fallthru
        _
      // Predicated region
      $region17: #{_rpn_forward_impl.1} parent=11 // pred_check
        %p257 = pneg %p96
      $region18: #{_rpn_forward_impl.1} parent=11 // pred_check_branch
        %259 = sbr.rel (%p257) target = $region20
      $region19: #{_rpn_forward_impl.1} parent=11 // pred_region
        _
      $region20: #{_rpn_forward_impl.1} parent=11 // pred_fallthru
        _
      // Predicated region
      $region21: #{_rpn_forward_impl.1} parent=11 // pred_check
        %p260 = pneg %p117
      $region22: #{_rpn_forward_impl.1} parent=11 // pred_check_branch
        %262 = sbr.rel (%p260) target = $region24
      $region23: #{_rpn_forward_impl.1} parent=11 // pred_region
        _
      $region24: #{_rpn_forward_impl.1} parent=11 // pred_fallthru
        _
      // Predicated region
      $region25: #{_rpn_forward_impl.1} parent=11 // pred_check
        %p263 = pneg %p138
      $region26: #{_rpn_forward_impl.1} parent=11 // pred_check_branch
        %265 = sbr.rel (%p263) target = $region28
      $region27: #{_rpn_forward_impl.1} parent=11 // pred_region
        _
      $region28: #{_rpn_forward_impl.1} parent=11 // pred_fallthru
        _
      // Predicated region
      $region29: #{_rpn_forward_impl.1} parent=11 // pred_check
        %p266 = pneg %p164
      $region30: #{_rpn_forward_impl.1} parent=11 // pred_check_branch
        %268 = sbr.rel (%p266) target = $region32
      $region31: #{_rpn_forward_impl.1} parent=11 // pred_region
        %s269 = smul.u32 32, %s23
        %p270 = scmp.lt.s32.totalorder %s269, 31
        %s271 = scalar_select %p270, %s269, 31
        %s272 = smul.addr %s271, 8
        %s273 = scalar_lea.vmem %s5, %s272
        %s274 = smul.u32 32, %s23
      $region32: #{_rpn_forward_impl.1} parent=11 // pred_fallthru
        _
      // Predicated region
      $region33: #{_rpn_forward_impl.1} parent=11 // pred_check
        %p275 = pneg %p190
      $region34: #{_rpn_forward_impl.1} parent=11 // pred_check_branch
        %277 = sbr.rel (%p275) target = $region36
      $region35: #{_rpn_forward_impl.1} parent=11 // pred_region
        %s278 = smul.u32 32, %s23
        %p279 = scmp.lt.s32.totalorder %s278, 31
        %s280 = scalar_select %p279, %s278, 31
        %s281 = smul.addr %s280, 8
        %s282 = scalar_lea.vmem %s6, %s281
        %s283 = smul.u32 32, %s23
      $region36: #{_rpn_forward_impl.1} parent=11 // pred_fallthru
        _
      // Predicated region
      $region37: #{_rpn_forward_impl.1} parent=11 // pred_check
        %p284 = pneg %p211
      $region38: #{_rpn_forward_impl.1} parent=11 // pred_check_branch
        %286 = sbr.rel (%p284) target = $region40
      $region39: #{_rpn_forward_impl.1} parent=11 // pred_region
        _
      $region40: #{_rpn_forward_impl.1} parent=11 // pred_fallthru
        _
    $region12: #{_rpn_forward_impl.1} parent=5 // pred_fallthru
      _
    %p287 = scmp.lt.s32.totalorder %s14, 2
    // Predicated region
    $region41: #{_rpn_forward_impl.1} parent=5 // pred_check
      %p288 = pneg %p287
    $region42: #{_rpn_forward_impl.1} parent=5 // pred_check_branch
      %290 = sbr.rel (%p288) target = $region44
    $region43: #{_rpn_forward_impl.1} parent=5 // pred_region
      // Predicated region
      $region45: #{_rpn_forward_impl.1} parent=43 // pred_check
        %p291 = pneg %p48
      $region46: #{_rpn_forward_impl.1} parent=43 // pred_check_branch
        %293 = sbr.rel (%p291) target = $region48
      $region47: #{_rpn_forward_impl.1} parent=43 // pred_region
        %s294 = smul.u32 32, %s21
        %p295 = scmp.lt.s32.totalorder %s22, 1
        %s296 = scalar_select %p295, %s22, 1
        %p297 = scmp.lt.s32.totalorder %s294, 31
        %s298 = scalar_select %p297, %s294, 31
        %s299 = smul.addr %s296, 32
        %s300 = sadd.s32 %s298, %s299
        %s301 = smul.addr %s300, 4
        %s302 = scalar_lea.vmem %s0, %s301
        %s303 = smul.u32 32, %s21
      $region48: #{_rpn_forward_impl.1} parent=43 // pred_fallthru
        _
    $region44: #{_rpn_forward_impl.1} parent=5 // pred_fallthru
      _
    %p304 = scmp.le.s32.totalorder 1, %s14
    %p305 = scmp.lt.s32.totalorder %s14, 3
    %p306 = pnand %p304, %p305
    %p307 = pneg %p306
    // Predicated region
    $region49: #{_rpn_forward_impl.1} parent=5 // pred_check
      _
    $region50: #{_rpn_forward_impl.1} parent=5 // pred_check_branch
      %309 = sbr.rel (%p306) target = $region52
    $region51: #{_rpn_forward_impl.1} parent=5 // pred_region
      %s310 = ssub.s32 %s14, 1
      %s311 = smul.u32 32, %s23
      %p312 = scmp.lt.s32.totalorder %s24, 1
      %s313 = scalar_select %p312, %s24, 1
      %p314 = scmp.lt.s32.totalorder %s311, 31
      %s315 = scalar_select %p314, %s311, 31
      %s316 = smul.addr %s313, 32
      %s317 = sadd.s32 %s315, %s316
      %s318 = smul.addr %s317, 4
      %s319 = scalar_lea.vmem %s0, %s318
      %p320 = pneg %p54
      %p321 = pneg %p51
      %p322 = pneg %p75
      %p323 = pneg %p72
      %p324 = pneg %p96
      %p325 = pneg %p93
      %p326 = pneg %p117
      %p327 = pneg %p114
      %p328 = pneg %p138
      %p329 = pneg %p135
      %s330 = smul.u32 32, %s23
      %p331 = scmp.lt.s32.totalorder %s330, 31
      %s332 = scalar_select %p331, %s330, 31
      %s333 = smul.addr %s332, 8
      %s334 = scalar_lea.vmem %s5, %s333
      %p335 = pneg %p164
      %p336 = pneg %p161
      %s337 = smul.u32 32, %s23
      %p338 = scmp.lt.s32.totalorder %s337, 31
      %s339 = scalar_select %p338, %s337, 31
      %s340 = smul.addr %s339, 8
      %s341 = scalar_lea.vmem %s6, %s340
      %p342 = pneg %p190
      %p343 = pneg %p187
      %p344 = pneg %p211
      %p345 = pneg %p208
      %p346 = pneg %p239
      %p347 = pneg %p236
      %s348 = smul.u32 32, %s23
      %p349 = scmp.lt.s32.totalorder %s24, 1
      %s350 = scalar_select %p349, %s24, 1
      %p351 = scmp.lt.s32.totalorder %s348, 31
      %s352 = scalar_select %p351, %s348, 31
      %s353 = smul.addr %s350, 32
      %s354 = sadd.s32 %s352, %s353
      %s355 = smul.addr %s354, 8
      %s356 = scalar_lea.vmem %s8, %s355
      %s357 = smul.u32 32, %s23
      %p358 = scmp.lt.s32.totalorder %s24, 1
      %s359 = scalar_select %p358, %s24, 1
      %p360 = scmp.lt.s32.totalorder %s357, 31
      %s361 = scalar_select %p360, %s357, 31
      %s362 = smul.addr %s359, 32
      %s363 = sadd.s32 %s361, %s362
      %s364 = smul.addr %s363, 4
      %s365 = scalar_lea.vmem %s0, %s364
      %s366 = smul.u32 32, %s23
      %s367 = smul.u32 32, %s23
      %p368 = scmp.lt.s32.totalorder %s367, 31
      %s369 = scalar_select %p368, %s367, 31
      %s370 = smul.addr %s369, 8
      %s371 = scalar_lea.vmem %s5, %s370
      %s372 = smul.u32 32, %s23
      %s373 = smul.u32 32, %s23
      %p374 = scmp.lt.s32.totalorder %s373, 31
      %s375 = scalar_select %p374, %s373, 31
      %s376 = smul.addr %s375, 8
      %s377 = scalar_lea.vmem %s6, %s376
      %s378 = smul.u32 32, %s23
      %s379 = smul.u32 32, %s23
      %p380 = scmp.lt.s32.totalorder %s24, 1
      %s381 = scalar_select %p380, %s24, 1
      %p382 = scmp.lt.s32.totalorder %s379, 31
      %s383 = scalar_select %p382, %s379, 31
      %s384 = smul.addr %s381, 32
      %s385 = sadd.s32 %s383, %s384
      %s386 = smul.addr %s385, 8
      %s387 = scalar_lea.vmem %s8, %s386
      %s388 = smul.u32 32, %s23
      %v389 = vld [vmem:[%s365] sm:$0xf]
      %v390 = vld [vmem:[%s365 + $0x4] sm:$0xf]
      %v391 = vld [vmem:[%s365 + $0x8] sm:$0xf]
      %v392 = vld [vmem:[%s365 + $0xc] sm:$0xf]
      %v393 = vld [vmem:[%s365 + $0x10] sm:$0xf]
      %v394 = vld [vmem:[%s365 + $0x14] sm:$0xf]
      %v395 = vld [vmem:[%s365 + $0x18] sm:$0xf]
      %v396 = vld [vmem:[%s365 + $0x1c] sm:$0xf]
      %v397 = vld [vmem:[%s365 + $0x20] sm:$0xf]
      %v398 = vld [vmem:[%s365 + $0x24] sm:$0xf]
      %v399 = vld [vmem:[%s365 + $0x28] sm:$0xf]
      %v400 = vld [vmem:[%s365 + $0x2c] sm:$0xf]
      %v401 = vld [vmem:[%s365 + $0x30] sm:$0xf]
      %v402 = vld [vmem:[%s365 + $0x34] sm:$0xf]
      %v403 = vld [vmem:[%s365 + $0x38] sm:$0xf]
      %v404 = vld [vmem:[%s365 + $0x3c] sm:$0xf]
      %v405 = vld [vmem:[%s365 + $0x40] sm:$0xf]
      %v406 = vld [vmem:[%s365 + $0x44] sm:$0xf]
      %v407 = vld [vmem:[%s365 + $0x48] sm:$0xf]
      %v408 = vld [vmem:[%s365 + $0x4c] sm:$0xf]
      %v409 = vld [vmem:[%s365 + $0x50] sm:$0xf]
      %v410 = vld [vmem:[%s365 + $0x54] sm:$0xf]
      %v411 = vld [vmem:[%s365 + $0x58] sm:$0xf]
      %v412 = vld [vmem:[%s365 + $0x5c] sm:$0xf]
      %v413 = vld [vmem:[%s365 + $0x60] sm:$0xf]
      %v414 = vld [vmem:[%s365 + $0x64] sm:$0xf]
      %v415 = vld [vmem:[%s365 + $0x68] sm:$0xf]
      %v416 = vld [vmem:[%s365 + $0x6c] sm:$0xf]
      %v417 = vld [vmem:[%s365 + $0x70] sm:$0xf]
      %v418 = vld [vmem:[%s365 + $0x74] sm:$0xf]
      %v419 = vld [vmem:[%s365 + $0x78] sm:$0xf]
      %v420 = vld [vmem:[%s365 + $0x7c] sm:$0xf]
      %v421 = vld [vmem:[%s1] sm:$0xf]
      %v422 = vld [vmem:[%s1 + $0x4] sm:$0xf]
      %v423 = vld [vmem:[%s1 + $0x8] sm:$0xf]
      %v424 = vld [vmem:[%s1 + $0xc] sm:$0xf]
      %v425 = vld [vmem:[%s1 + $0x10] sm:$0xf]
      %v426 = vld [vmem:[%s1 + $0x14] sm:$0xf]
      %v427 = vld [vmem:[%s1 + $0x18] sm:$0xf]
      %v428 = vld [vmem:[%s1 + $0x1c] sm:$0xf]
      %v429 = vld [vmem:[%s1 + $0x20] sm:$0xf]
      %v430 = vld [vmem:[%s1 + $0x24] sm:$0xf]
      %v431 = vld [vmem:[%s1 + $0x28] sm:$0xf]
      %v432 = vld [vmem:[%s1 + $0x2c] sm:$0xf]
      %v433 = vld [vmem:[%s1 + $0x30] sm:$0xf]
      %v434 = vld [vmem:[%s1 + $0x34] sm:$0xf]
      %v435 = vld [vmem:[%s1 + $0x38] sm:$0xf]
      %v436 = vld [vmem:[%s1 + $0x3c] sm:$0xf]
      %v437 = vld [vmem:[%s2] sm:$0x1]
      %v439 = vperm.slane %v437, 0
      %v473 = vunpack.c.l.b16 %v389
      %v474 = vunpack.c.l.b16 %v390
      %v475 = vunpack.c.l.b16 %v391
      %v476 = vunpack.c.l.b16 %v392
      %v477 = vunpack.c.l.b16 %v393
      %v478 = vunpack.c.l.b16 %v394
      %v479 = vunpack.c.l.b16 %v395
      %v480 = vunpack.c.l.b16 %v396
      %v481 = vunpack.c.l.b16 %v397
      %v482 = vunpack.c.l.b16 %v398
      %v483 = vunpack.c.l.b16 %v399
      %v484 = vunpack.c.l.b16 %v400
      %v485 = vunpack.c.l.b16 %v401
      %v486 = vunpack.c.l.b16 %v402
      %v487 = vunpack.c.l.b16 %v403
      %v488 = vunpack.c.l.b16 %v404
      %v489 = vunpack.c.l.b16 %v405
      %v490 = vunpack.c.l.b16 %v406
      %v491 = vunpack.c.l.b16 %v407
      %v492 = vunpack.c.l.b16 %v408
      %v493 = vunpack.c.l.b16 %v409
      %v494 = vunpack.c.l.b16 %v410
      %v495 = vunpack.c.l.b16 %v411
      %v496 = vunpack.c.l.b16 %v412
      %v497 = vunpack.c.l.b16 %v413
      %v498 = vunpack.c.l.b16 %v414
      %v499 = vunpack.c.l.b16 %v415
      %v500 = vunpack.c.l.b16 %v416
      %v501 = vunpack.c.l.b16 %v417
      %v502 = vunpack.c.l.b16 %v418
      %v503 = vunpack.c.l.b16 %v419
      %v504 = vunpack.c.l.b16 %v420
      %v505 = vpack.c.b16 %v474, %v473
      %v506 = vpack.c.b16 %v476, %v475
      %v507 = vpack.c.b16 %v478, %v477
      %v508 = vpack.c.b16 %v480, %v479
      %v509 = vpack.c.b16 %v482, %v481
      %v510 = vpack.c.b16 %v484, %v483
      %v511 = vpack.c.b16 %v486, %v485
      %v512 = vpack.c.b16 %v488, %v487
      %v513 = vpack.c.b16 %v490, %v489
      %v514 = vpack.c.b16 %v492, %v491
      %v515 = vpack.c.b16 %v494, %v493
      %v516 = vpack.c.b16 %v496, %v495
      %v517 = vpack.c.b16 %v498, %v497
      %v518 = vpack.c.b16 %v500, %v499
      %v519 = vpack.c.b16 %v502, %v501
      %v520 = vpack.c.b16 %v504, %v503
      %v553 = vunpack.c.l.b16 %v421
      %v554 = vunpack.c.l.b16 %v422
      %v555 = vunpack.c.l.b16 %v423
      %v556 = vunpack.c.l.b16 %v424
      %v557 = vunpack.c.l.b16 %v425
      %v558 = vunpack.c.l.b16 %v426
      %v559 = vunpack.c.l.b16 %v427
      %v560 = vunpack.c.l.b16 %v428
      %v561 = vunpack.c.l.b16 %v429
      %v562 = vunpack.c.l.b16 %v430
      %v563 = vunpack.c.l.b16 %v431
      %v564 = vunpack.c.l.b16 %v432
      %v565 = vunpack.c.l.b16 %v433
      %v566 = vunpack.c.l.b16 %v434
      %v567 = vunpack.c.l.b16 %v435
      %v568 = vunpack.c.l.b16 %v436
      %v569 = vpack.c.b16 %v554, %v553
      %v570 = vpack.c.b16 %v556, %v555
      %v571 = vpack.c.b16 %v558, %v557
      %v572 = vpack.c.b16 %v560, %v559
      %v573 = vpack.c.b16 %v562, %v561
      %v574 = vpack.c.b16 %v564, %v563
      %v575 = vpack.c.b16 %v566, %v565
      %v576 = vpack.c.b16 %v568, %v567
      %585 = vmatpush.bf16.msra.mxu0 %v576
      %586 = vmatpush.bf16.msra.mxu0 %v575
      %587 = vmatpush.bf16.msra.mxu0 %v574
      %588 = vmatpush.bf16.msra.mxu0 %v573
      %589 = vmatpush.bf16.msra.mxu0 %v572
      %590 = vmatpush.bf16.msra.mxu0 %v571
      %591 = vmatpush.bf16.msra.mxu0 %v570
      %592 = vmatpush.bf16.msra.mxu0 %v569
      %593 = vmatmul.bf16.gmra.mxu0 %v505
      %v594 = vpop.f32.mrf.mxu0
      %v595 = vadd.f32 %v439, %v594
      %v596 = vpop.f32.mrf.mxu0
      %v597 = vadd.f32 %v439, %v596
      %598 = vmatmul.bf16.gmra.mxu0 %v506
      %v599 = vpop.f32.mrf.mxu0
      %v600 = vadd.f32 %v439, %v599
      %v601 = vpop.f32.mrf.mxu0
      %v602 = vadd.f32 %v439, %v601
      %603 = vmatmul.bf16.gmra.mxu0 %v507
      %v604 = vpop.f32.mrf.mxu0
      %v605 = vadd.f32 %v439, %v604
      %v606 = vpop.f32.mrf.mxu0
      %v607 = vadd.f32 %v439, %v606
      %608 = vmatmul.bf16.gmra.mxu0 %v508
      %v609 = vpop.f32.mrf.mxu0
      %v610 = vadd.f32 %v439, %v609
      %v611 = vpop.f32.mrf.mxu0
      %v612 = vadd.f32 %v439, %v611
      %613 = vmatmul.bf16.gmra.mxu0 %v509
      %v614 = vpop.f32.mrf.mxu0
      %v615 = vadd.f32 %v439, %v614
      %v616 = vpop.f32.mrf.mxu0
      %v617 = vadd.f32 %v439, %v616
      %618 = vmatmul.bf16.gmra.mxu0 %v510
      %v619 = vpop.f32.mrf.mxu0
      %v620 = vadd.f32 %v439, %v619
      %v621 = vpop.f32.mrf.mxu0
      %v622 = vadd.f32 %v439, %v621
      %623 = vmatmul.bf16.gmra.mxu0 %v511
      %v624 = vpop.f32.mrf.mxu0
      %v625 = vadd.f32 %v439, %v624
      %v626 = vpop.f32.mrf.mxu0
      %v627 = vadd.f32 %v439, %v626
      %628 = vmatmul.bf16.gmra.mxu0 %v512
      %v629 = vpop.f32.mrf.mxu0
      %v630 = vadd.f32 %v439, %v629
      %v631 = vpop.f32.mrf.mxu0
      %v632 = vadd.f32 %v439, %v631
      %633 = vmatmul.bf16.gmra.mxu0 %v513
      %v634 = vpop.f32.mrf.mxu0
      %v635 = vadd.f32 %v439, %v634
      %v636 = vpop.f32.mrf.mxu0
      %v637 = vadd.f32 %v439, %v636
      %638 = vmatmul.bf16.gmra.mxu0 %v514
      %v639 = vpop.f32.mrf.mxu0
      %v640 = vadd.f32 %v439, %v639
      %v641 = vpop.f32.mrf.mxu0
      %v642 = vadd.f32 %v439, %v641
      %643 = vmatmul.bf16.gmra.mxu0 %v515
      %v644 = vpop.f32.mrf.mxu0
      %v645 = vadd.f32 %v439, %v644
      %v646 = vpop.f32.mrf.mxu0
      %v647 = vadd.f32 %v439, %v646
      %648 = vmatmul.bf16.gmra.mxu0 %v516
      %v649 = vpop.f32.mrf.mxu0
      %v650 = vadd.f32 %v439, %v649
      %v651 = vpop.f32.mrf.mxu0
      %v652 = vadd.f32 %v439, %v651
      %653 = vmatmul.bf16.gmra.mxu0 %v517
      %v654 = vpop.f32.mrf.mxu0
      %v655 = vadd.f32 %v439, %v654
      %v656 = vpop.f32.mrf.mxu0
      %v657 = vadd.f32 %v439, %v656
      %658 = vmatmul.bf16.gmra.mxu0 %v518
      %v659 = vpop.f32.mrf.mxu0
      %v660 = vadd.f32 %v439, %v659
      %v661 = vpop.f32.mrf.mxu0
      %v662 = vadd.f32 %v439, %v661
      %663 = vmatmul.bf16.gmra.mxu0 %v519
      %v664 = vpop.f32.mrf.mxu0
      %v665 = vadd.f32 %v439, %v664
      %v666 = vpop.f32.mrf.mxu0
      %v667 = vadd.f32 %v439, %v666
      %668 = vmatmul.bf16.gmra.mxu0 %v520
      %v669 = vpop.f32.mrf.mxu0
      %v670 = vadd.f32 %v439, %v669
      %v671 = vpop.f32.mrf.mxu0
      %v672 = vadd.f32 %v439, %v671
      %673 = vdwg.mxu0
      %v674 = vmax.f32 %v595, 0.0
      %v675 = vmax.f32 %v597, 0.0
      %v676 = vmax.f32 %v600, 0.0
      %v677 = vmax.f32 %v602, 0.0
      %v678 = vmax.f32 %v605, 0.0
      %v679 = vmax.f32 %v607, 0.0
      %v680 = vmax.f32 %v610, 0.0
      %v681 = vmax.f32 %v612, 0.0
      %v682 = vmax.f32 %v615, 0.0
      %v683 = vmax.f32 %v617, 0.0
      %v684 = vmax.f32 %v620, 0.0
      %v685 = vmax.f32 %v622, 0.0
      %v686 = vmax.f32 %v625, 0.0
      %v687 = vmax.f32 %v627, 0.0
      %v688 = vmax.f32 %v630, 0.0
      %v689 = vmax.f32 %v632, 0.0
      %v690 = vmax.f32 %v635, 0.0
      %v691 = vmax.f32 %v637, 0.0
      %v692 = vmax.f32 %v640, 0.0
      %v693 = vmax.f32 %v642, 0.0
      %v694 = vmax.f32 %v645, 0.0
      %v695 = vmax.f32 %v647, 0.0
      %v696 = vmax.f32 %v650, 0.0
      %v697 = vmax.f32 %v652, 0.0
      %v698 = vmax.f32 %v655, 0.0
      %v699 = vmax.f32 %v657, 0.0
      %v700 = vmax.f32 %v660, 0.0
      %v701 = vmax.f32 %v662, 0.0
      %v702 = vmax.f32 %v665, 0.0
      %v703 = vmax.f32 %v667, 0.0
      %v704 = vmax.f32 %v670, 0.0
      %v705 = vmax.f32 %v672, 0.0
      %v706 = vpack.c.bf16 %v675, %v674
      %v707 = vpack.c.bf16 %v677, %v676
      %v708 = vpack.c.bf16 %v679, %v678
      %v709 = vpack.c.bf16 %v681, %v680
      %v710 = vpack.c.bf16 %v683, %v682
      %v711 = vpack.c.bf16 %v685, %v684
      %v712 = vpack.c.bf16 %v687, %v686
      %v713 = vpack.c.bf16 %v689, %v688
      %v714 = vpack.c.bf16 %v691, %v690
      %v715 = vpack.c.bf16 %v693, %v692
      %v716 = vpack.c.bf16 %v695, %v694
      %v717 = vpack.c.bf16 %v697, %v696
      %v718 = vpack.c.bf16 %v699, %v698
      %v719 = vpack.c.bf16 %v701, %v700
      %v720 = vpack.c.bf16 %v703, %v702
      %v721 = vpack.c.bf16 %v705, %v704
      %v722 = vld [vmem:[%s3] sm:$0xf]
      %v723 = vld [vmem:[%s3 + $0x4] sm:$0xf]
      %v724 = vld [vmem:[%s3 + $0x8] sm:$0xf]
      %v725 = vld [vmem:[%s3 + $0xc] sm:$0xf]
      %v726 = vld [vmem:[%s3 + $0x10] sm:$0xf]
      %v727 = vld [vmem:[%s3 + $0x14] sm:$0xf]
      %v728 = vld [vmem:[%s3 + $0x18] sm:$0xf]
      %v729 = vld [vmem:[%s3 + $0x1c] sm:$0xf]
      %v730 = vld [vmem:[%s3 + $0x20] sm:$0xf]
      %v731 = vld [vmem:[%s3 + $0x24] sm:$0xf]
      %v732 = vld [vmem:[%s3 + $0x28] sm:$0xf]
      %v733 = vld [vmem:[%s3 + $0x2c] sm:$0xf]
      %v734 = vld [vmem:[%s3 + $0x30] sm:$0xf]
      %v735 = vld [vmem:[%s3 + $0x34] sm:$0xf]
      %v736 = vld [vmem:[%s3 + $0x38] sm:$0xf]
      %v737 = vld [vmem:[%s3 + $0x3c] sm:$0xf]
      %v738 = vld [vmem:[%s4] sm:$0x1]
      %v740 = vperm.slane %v738, 0
      %v758 = vunpack.c.l.b16 %v722
      %v759 = vunpack.c.l.b16 %v723
      %v760 = vunpack.c.l.b16 %v724
      %v761 = vunpack.c.l.b16 %v725
      %v762 = vunpack.c.l.b16 %v726
      %v763 = vunpack.c.l.b16 %v727
      %v764 = vunpack.c.l.b16 %v728
      %v765 = vunpack.c.l.b16 %v729
      %v766 = vunpack.c.l.b16 %v730
      %v767 = vunpack.c.l.b16 %v731
      %v768 = vunpack.c.l.b16 %v732
      %v769 = vunpack.c.l.b16 %v733
      %v770 = vunpack.c.l.b16 %v734
      %v771 = vunpack.c.l.b16 %v735
      %v772 = vunpack.c.l.b16 %v736
      %v773 = vunpack.c.l.b16 %v737
      %v774 = vpack.c.b16 %v759, %v758
      %v775 = vpack.c.b16 %v761, %v760
      %v776 = vpack.c.b16 %v763, %v762
      %v777 = vpack.c.b16 %v765, %v764
      %v778 = vpack.c.b16 %v767, %v766
      %v779 = vpack.c.b16 %v769, %v768
      %v780 = vpack.c.b16 %v771, %v770
      %v781 = vpack.c.b16 %v773, %v772
      %790 = vmatpush.bf16.msra.mxu0 %v781
      %791 = vmatpush.bf16.msra.mxu0 %v780
      %792 = vmatpush.bf16.msra.mxu0 %v779
      %793 = vmatpush.bf16.msra.mxu0 %v778
      %794 = vmatpush.bf16.msra.mxu0 %v777
      %795 = vmatpush.bf16.msra.mxu0 %v776
      %796 = vmatpush.bf16.msra.mxu0 %v775
      %797 = vmatpush.bf16.msra.mxu0 %v774
      %798 = vmatmul.bf16.gmra.mxu0 %v706
      %v799 = vpop.f32.mrf.mxu0
      %v800 = vadd.f32 %v740, %v799
      %v801 = vpop.f32.mrf.mxu0
      %v802 = vadd.f32 %v740, %v801
      %803 = vmatmul.bf16.gmra.mxu0 %v707
      %v804 = vpop.f32.mrf.mxu0
      %v805 = vadd.f32 %v740, %v804
      %v806 = vpop.f32.mrf.mxu0
      %v807 = vadd.f32 %v740, %v806
      %808 = vmatmul.bf16.gmra.mxu0 %v708
      %v809 = vpop.f32.mrf.mxu0
      %v810 = vadd.f32 %v740, %v809
      %v811 = vpop.f32.mrf.mxu0
      %v812 = vadd.f32 %v740, %v811
      %813 = vmatmul.bf16.gmra.mxu0 %v709
      %v814 = vpop.f32.mrf.mxu0
      %v815 = vadd.f32 %v740, %v814
      %v816 = vpop.f32.mrf.mxu0
      %v817 = vadd.f32 %v740, %v816
      %818 = vmatmul.bf16.gmra.mxu0 %v710
      %v819 = vpop.f32.mrf.mxu0
      %v820 = vadd.f32 %v740, %v819
      %v821 = vpop.f32.mrf.mxu0
      %v822 = vadd.f32 %v740, %v821
      %823 = vmatmul.bf16.gmra.mxu0 %v711
      %v824 = vpop.f32.mrf.mxu0
      %v825 = vadd.f32 %v740, %v824
      %v826 = vpop.f32.mrf.mxu0
      %v827 = vadd.f32 %v740, %v826
      %828 = vmatmul.bf16.gmra.mxu0 %v712
      %v829 = vpop.f32.mrf.mxu0
      %v830 = vadd.f32 %v740, %v829
      %v831 = vpop.f32.mrf.mxu0
      %v832 = vadd.f32 %v740, %v831
      %833 = vmatmul.bf16.gmra.mxu0 %v713
      %v834 = vpop.f32.mrf.mxu0
      %v835 = vadd.f32 %v740, %v834
      %v836 = vpop.f32.mrf.mxu0
      %v837 = vadd.f32 %v740, %v836
      %838 = vmatmul.bf16.gmra.mxu0 %v714
      %v839 = vpop.f32.mrf.mxu0
      %v840 = vadd.f32 %v740, %v839
      %v841 = vpop.f32.mrf.mxu0
      %v842 = vadd.f32 %v740, %v841
      %843 = vmatmul.bf16.gmra.mxu0 %v715
      %v844 = vpop.f32.mrf.mxu0
      %v845 = vadd.f32 %v740, %v844
      %v846 = vpop.f32.mrf.mxu0
      %v847 = vadd.f32 %v740, %v846
      %848 = vmatmul.bf16.gmra.mxu0 %v716
      %v849 = vpop.f32.mrf.mxu0
      %v850 = vadd.f32 %v740, %v849
      %v851 = vpop.f32.mrf.mxu0
      %v852 = vadd.f32 %v740, %v851
      %853 = vmatmul.bf16.gmra.mxu0 %v717
      %v854 = vpop.f32.mrf.mxu0
      %v855 = vadd.f32 %v740, %v854
      %v856 = vpop.f32.mrf.mxu0
      %v857 = vadd.f32 %v740, %v856
      %858 = vmatmul.bf16.gmra.mxu0 %v718
      %v859 = vpop.f32.mrf.mxu0
      %v860 = vadd.f32 %v740, %v859
      %v861 = vpop.f32.mrf.mxu0
      %v862 = vadd.f32 %v740, %v861
      %863 = vmatmul.bf16.gmra.mxu0 %v719
      %v864 = vpop.f32.mrf.mxu0
      %v865 = vadd.f32 %v740, %v864
      %v866 = vpop.f32.mrf.mxu0
      %v867 = vadd.f32 %v740, %v866
      %868 = vmatmul.bf16.gmra.mxu0 %v720
      %v869 = vpop.f32.mrf.mxu0
      %v870 = vadd.f32 %v740, %v869
      %v871 = vpop.f32.mrf.mxu0
      %v872 = vadd.f32 %v740, %v871
      %873 = vmatmul.bf16.gmra.mxu0 %v721
      %v874 = vpop.f32.mrf.mxu0
      %v875 = vadd.f32 %v740, %v874
      %v876 = vpop.f32.mrf.mxu0
      %v877 = vadd.f32 %v740, %v876
      %878 = vdwg.mxu0
      %911 = vrot.lane.b32.xlu0 %v800, 96
      %v912 = vpop.permute.xlu0 %911
      %913 = vrot.lane.b32.xlu0 %v802, 96
      %v914 = vpop.permute.xlu0 %913
      %915 = vrot.lane.b32.xlu0 %v805, 96
      %v916 = vpop.permute.xlu0 %915
      %917 = vrot.lane.b32.xlu0 %v807, 96
      %v918 = vpop.permute.xlu0 %917
      %919 = vrot.lane.b32.xlu0 %v810, 96
      %v920 = vpop.permute.xlu0 %919
      %921 = vrot.lane.b32.xlu0 %v812, 96
      %v922 = vpop.permute.xlu0 %921
      %923 = vrot.lane.b32.xlu0 %v815, 96
      %v924 = vpop.permute.xlu0 %923
      %925 = vrot.lane.b32.xlu0 %v817, 96
      %v926 = vpop.permute.xlu0 %925
      %927 = vrot.lane.b32.xlu0 %v820, 96
      %v928 = vpop.permute.xlu0 %927
      %929 = vrot.lane.b32.xlu0 %v822, 96
      %v930 = vpop.permute.xlu0 %929
      %931 = vrot.lane.b32.xlu0 %v825, 96
      %v932 = vpop.permute.xlu0 %931
      %933 = vrot.lane.b32.xlu0 %v827, 96
      %v934 = vpop.permute.xlu0 %933
      %935 = vrot.lane.b32.xlu0 %v830, 96
      %v936 = vpop.permute.xlu0 %935
      %937 = vrot.lane.b32.xlu0 %v832, 96
      %v938 = vpop.permute.xlu0 %937
      %939 = vrot.lane.b32.xlu0 %v835, 96
      %v940 = vpop.permute.xlu0 %939
      %941 = vrot.lane.b32.xlu0 %v837, 96
      %v942 = vpop.permute.xlu0 %941
      %943 = vrot.lane.b32.xlu0 %v840, 96
      %v944 = vpop.permute.xlu0 %943
      %945 = vrot.lane.b32.xlu0 %v842, 96
      %v946 = vpop.permute.xlu0 %945
      %947 = vrot.lane.b32.xlu0 %v845, 96
      %v948 = vpop.permute.xlu0 %947
      %949 = vrot.lane.b32.xlu0 %v847, 96
      %v950 = vpop.permute.xlu0 %949
      %951 = vrot.lane.b32.xlu0 %v850, 96
      %v952 = vpop.permute.xlu0 %951
      %953 = vrot.lane.b32.xlu0 %v852, 96
      %v954 = vpop.permute.xlu0 %953
      %955 = vrot.lane.b32.xlu0 %v855, 96
      %v956 = vpop.permute.xlu0 %955
      %957 = vrot.lane.b32.xlu0 %v857, 96
      %v958 = vpop.permute.xlu0 %957
      %959 = vrot.lane.b32.xlu0 %v860, 96
      %v960 = vpop.permute.xlu0 %959
      %961 = vrot.lane.b32.xlu0 %v862, 96
      %v962 = vpop.permute.xlu0 %961
      %963 = vrot.lane.b32.xlu0 %v865, 96
      %v964 = vpop.permute.xlu0 %963
      %965 = vrot.lane.b32.xlu0 %v867, 96
      %v966 = vpop.permute.xlu0 %965
      %967 = vrot.lane.b32.xlu0 %v870, 96
      %v968 = vpop.permute.xlu0 %967
      %969 = vrot.lane.b32.xlu0 %v872, 96
      %v970 = vpop.permute.xlu0 %969
      %971 = vrot.lane.b32.xlu0 %v875, 96
      %v972 = vpop.permute.xlu0 %971
      %973 = vrot.lane.b32.xlu0 %v877, 96
      %v974 = vpop.permute.xlu0 %973
      %v1007 = vsub.f32 %v800, %v912
      %v1008 = vsub.f32 %v802, %v914
      %v1009 = vsub.f32 %v805, %v916
      %v1010 = vsub.f32 %v807, %v918
      %v1011 = vsub.f32 %v810, %v920
      %v1012 = vsub.f32 %v812, %v922
      %v1013 = vsub.f32 %v815, %v924
      %v1014 = vsub.f32 %v817, %v926
      %v1015 = vsub.f32 %v820, %v928
      %v1016 = vsub.f32 %v822, %v930
      %v1017 = vsub.f32 %v825, %v932
      %v1018 = vsub.f32 %v827, %v934
      %v1019 = vsub.f32 %v830, %v936
      %v1020 = vsub.f32 %v832, %v938
      %v1021 = vsub.f32 %v835, %v940
      %v1022 = vsub.f32 %v837, %v942
      %v1023 = vsub.f32 %v840, %v944
      %v1024 = vsub.f32 %v842, %v946
      %v1025 = vsub.f32 %v845, %v948
      %v1026 = vsub.f32 %v847, %v950
      %v1027 = vsub.f32 %v850, %v952
      %v1028 = vsub.f32 %v852, %v954
      %v1029 = vsub.f32 %v855, %v956
      %v1030 = vsub.f32 %v857, %v958
      %v1031 = vsub.f32 %v860, %v960
      %v1032 = vsub.f32 %v862, %v962
      %v1033 = vsub.f32 %v865, %v964
      %v1034 = vsub.f32 %v867, %v966
      %v1035 = vsub.f32 %v870, %v968
      %v1036 = vsub.f32 %v872, %v970
      %v1037 = vsub.f32 %v875, %v972
      %v1038 = vsub.f32 %v877, %v974
      %v1039 = vmul.f32 %v1007, 1.442695
      %v1040 = vpow.pop %v1039
      %v1041 = vmul.f32 %v1008, 1.442695
      %v1042 = vpow.pop %v1041
      %v1043 = vmul.f32 %v1009, 1.442695
      %v1044 = vpow.pop %v1043
      %v1045 = vmul.f32 %v1010, 1.442695
      %v1046 = vpow.pop %v1045
      %v1047 = vmul.f32 %v1011, 1.442695
      %v1048 = vpow.pop %v1047
      %v1049 = vmul.f32 %v1012, 1.442695
      %v1050 = vpow.pop %v1049
      %v1051 = vmul.f32 %v1013, 1.442695
      %v1052 = vpow.pop %v1051
      %v1053 = vmul.f32 %v1014, 1.442695
      %v1054 = vpow.pop %v1053
      %v1055 = vmul.f32 %v1015, 1.442695
      %v1056 = vpow.pop %v1055
      %v1057 = vmul.f32 %v1016, 1.442695
      %v1058 = vpow.pop %v1057
      %v1059 = vmul.f32 %v1017, 1.442695
      %v1060 = vpow.pop %v1059
      %v1061 = vmul.f32 %v1018, 1.442695
      %v1062 = vpow.pop %v1061
      %v1063 = vmul.f32 %v1019, 1.442695
      %v1064 = vpow.pop %v1063
      %v1065 = vmul.f32 %v1020, 1.442695
      %v1066 = vpow.pop %v1065
      %v1067 = vmul.f32 %v1021, 1.442695
      %v1068 = vpow.pop %v1067
      %v1069 = vmul.f32 %v1022, 1.442695
      %v1070 = vpow.pop %v1069
      %v1071 = vmul.f32 %v1023, 1.442695
      %v1072 = vpow.pop %v1071
      %v1073 = vmul.f32 %v1024, 1.442695
      %v1074 = vpow.pop %v1073
      %v1075 = vmul.f32 %v1025, 1.442695
      %v1076 = vpow.pop %v1075
      %v1077 = vmul.f32 %v1026, 1.442695
      %v1078 = vpow.pop %v1077
      %v1079 = vmul.f32 %v1027, 1.442695
      %v1080 = vpow.pop %v1079
      %v1081 = vmul.f32 %v1028, 1.442695
      %v1082 = vpow.pop %v1081
      %v1083 = vmul.f32 %v1029, 1.442695
      %v1084 = vpow.pop %v1083
      %v1085 = vmul.f32 %v1030, 1.442695
      %v1086 = vpow.pop %v1085
      %v1087 = vmul.f32 %v1031, 1.442695
      %v1088 = vpow.pop %v1087
      %v1089 = vmul.f32 %v1032, 1.442695
      %v1090 = vpow.pop %v1089
      %v1091 = vmul.f32 %v1033, 1.442695
      %v1092 = vpow.pop %v1091
      %v1093 = vmul.f32 %v1034, 1.442695
      %v1094 = vpow.pop %v1093
      %v1095 = vmul.f32 %v1035, 1.442695
      %v1096 = vpow.pop %v1095
      %v1097 = vmul.f32 %v1036, 1.442695
      %v1098 = vpow.pop %v1097
      %v1099 = vmul.f32 %v1037, 1.442695
      %v1100 = vpow.pop %v1099
      %v1101 = vmul.f32 %v1038, 1.442695
      %v1102 = vpow.pop %v1101
      %v1103 = vadd.f32 %v1040, 1.0
      %v1104 = vadd.f32 %v1042, 1.0
      %v1105 = vadd.f32 %v1044, 1.0
      %v1106 = vadd.f32 %v1046, 1.0
      %v1107 = vadd.f32 %v1048, 1.0
      %v1108 = vadd.f32 %v1050, 1.0
      %v1109 = vadd.f32 %v1052, 1.0
      %v1110 = vadd.f32 %v1054, 1.0
      %v1111 = vadd.f32 %v1056, 1.0
      %v1112 = vadd.f32 %v1058, 1.0
      %v1113 = vadd.f32 %v1060, 1.0
      %v1114 = vadd.f32 %v1062, 1.0
      %v1115 = vadd.f32 %v1064, 1.0
      %v1116 = vadd.f32 %v1066, 1.0
      %v1117 = vadd.f32 %v1068, 1.0
      %v1118 = vadd.f32 %v1070, 1.0
      %v1119 = vadd.f32 %v1072, 1.0
      %v1120 = vadd.f32 %v1074, 1.0
      %v1121 = vadd.f32 %v1076, 1.0
      %v1122 = vadd.f32 %v1078, 1.0
      %v1123 = vadd.f32 %v1080, 1.0
      %v1124 = vadd.f32 %v1082, 1.0
      %v1125 = vadd.f32 %v1084, 1.0
      %v1126 = vadd.f32 %v1086, 1.0
      %v1127 = vadd.f32 %v1088, 1.0
      %v1128 = vadd.f32 %v1090, 1.0
      %v1129 = vadd.f32 %v1092, 1.0
      %v1130 = vadd.f32 %v1094, 1.0
      %v1131 = vadd.f32 %v1096, 1.0
      %v1132 = vadd.f32 %v1098, 1.0
      %v1133 = vadd.f32 %v1100, 1.0
      %v1134 = vadd.f32 %v1102, 1.0
      %v1135 = vrcp.pop %v1103
      %v1136 = vmul.f32 %v1103, %v1135
      %v1137 = vsub.f32 1.0, %v1136
      %v1138 = vmul.f32 %v1135, %v1137
      %v1139 = vadd.f32 %v1135, %v1138
      %vm1140 = vweird.f32 %v1103
      %vm1141 = vweird.f32 %v1135
      %vm1142 = vmor %vm1140, %vm1141
      %v1143 = vsel %vm1142, %v1135, %v1139
      %v1144 = vand.u32 2147483647, %v1103
      %vm1145 = vcmp.eq.f32.partialorder %v1144, 8.507059e+37
      %v1146 = vand.u32 %v1103, 2147483648
      %v1147 = vor.u32 1.1754944e-38, %v1146
      %v1148 = vsel %vm1145, %v1147, %v1143
      %v1149 = vrcp.pop %v1104
      %v1150 = vmul.f32 %v1104, %v1149
      %v1151 = vsub.f32 1.0, %v1150
      %v1152 = vmul.f32 %v1149, %v1151
      %v1153 = vadd.f32 %v1149, %v1152
      %vm1154 = vweird.f32 %v1104
      %vm1155 = vweird.f32 %v1149
      %vm1156 = vmor %vm1154, %vm1155
      %v1157 = vsel %vm1156, %v1149, %v1153
      %v1158 = vand.u32 2147483647, %v1104
      %vm1159 = vcmp.eq.f32.partialorder %v1158, 8.507059e+37
      %v1160 = vand.u32 %v1104, 2147483648
      %v1161 = vor.u32 1.1754944e-38, %v1160
      %v1162 = vsel %vm1159, %v1161, %v1157
      %v1163 = vrcp.pop %v1105
      %v1164 = vmul.f32 %v1105, %v1163
      %v1165 = vsub.f32 1.0, %v1164
      %v1166 = vmul.f32 %v1163, %v1165
      %v1167 = vadd.f32 %v1163, %v1166
      %vm1168 = vweird.f32 %v1105
      %vm1169 = vweird.f32 %v1163
      %vm1170 = vmor %vm1168, %vm1169
      %v1171 = vsel %vm1170, %v1163, %v1167
      %v1172 = vand.u32 2147483647, %v1105
      %vm1173 = vcmp.eq.f32.partialorder %v1172, 8.507059e+37
      %v1174 = vand.u32 %v1105, 2147483648
      %v1175 = vor.u32 1.1754944e-38, %v1174
      %v1176 = vsel %vm1173, %v1175, %v1171
      %v1177 = vrcp.pop %v1106
      %v1178 = vmul.f32 %v1106, %v1177
      %v1179 = vsub.f32 1.0, %v1178
      %v1180 = vmul.f32 %v1177, %v1179
      %v1181 = vadd.f32 %v1177, %v1180
      %vm1182 = vweird.f32 %v1106
      %vm1183 = vweird.f32 %v1177
      %vm1184 = vmor %vm1182, %vm1183
      %v1185 = vsel %vm1184, %v1177, %v1181
      %v1186 = vand.u32 2147483647, %v1106
      %vm1187 = vcmp.eq.f32.partialorder %v1186, 8.507059e+37
      %v1188 = vand.u32 %v1106, 2147483648
      %v1189 = vor.u32 1.1754944e-38, %v1188
      %v1190 = vsel %vm1187, %v1189, %v1185
      %v1191 = vrcp.pop %v1107
      %v1192 = vmul.f32 %v1107, %v1191
      %v1193 = vsub.f32 1.0, %v1192
      %v1194 = vmul.f32 %v1191, %v1193
      %v1195 = vadd.f32 %v1191, %v1194
      %vm1196 = vweird.f32 %v1107
      %vm1197 = vweird.f32 %v1191
      %vm1198 = vmor %vm1196, %vm1197
      %v1199 = vsel %vm1198, %v1191, %v1195
      %v1200 = vand.u32 2147483647, %v1107
      %vm1201 = vcmp.eq.f32.partialorder %v1200, 8.507059e+37
      %v1202 = vand.u32 %v1107, 2147483648
      %v1203 = vor.u32 1.1754944e-38, %v1202
      %v1204 = vsel %vm1201, %v1203, %v1199
      %v1205 = vrcp.pop %v1108
      %v1206 = vmul.f32 %v1108, %v1205
      %v1207 = vsub.f32 1.0, %v1206
      %v1208 = vmul.f32 %v1205, %v1207
      %v1209 = vadd.f32 %v1205, %v1208
      %vm1210 = vweird.f32 %v1108
      %vm1211 = vweird.f32 %v1205
      %vm1212 = vmor %vm1210, %vm1211
      %v1213 = vsel %vm1212, %v1205, %v1209
      %v1214 = vand.u32 2147483647, %v1108
      %vm1215 = vcmp.eq.f32.partialorder %v1214, 8.507059e+37
      %v1216 = vand.u32 %v1108, 2147483648
      %v1217 = vor.u32 1.1754944e-38, %v1216
      %v1218 = vsel %vm1215, %v1217, %v1213
      %v1219 = vrcp.pop %v1109
      %v1220 = vmul.f32 %v1109, %v1219
      %v1221 = vsub.f32 1.0, %v1220
      %v1222 = vmul.f32 %v1219, %v1221
      %v1223 = vadd.f32 %v1219, %v1222
      %vm1224 = vweird.f32 %v1109
      %vm1225 = vweird.f32 %v1219
      %vm1226 = vmor %vm1224, %vm1225
      %v1227 = vsel %vm1226, %v1219, %v1223
      %v1228 = vand.u32 2147483647, %v1109
      %vm1229 = vcmp.eq.f32.partialorder %v1228, 8.507059e+37
      %v1230 = vand.u32 %v1109, 2147483648
      %v1231 = vor.u32 1.1754944e-38, %v1230
      %v1232 = vsel %vm1229, %v1231, %v1227
      %v1233 = vrcp.pop %v1110
      %v1234 = vmul.f32 %v1110, %v1233
      %v1235 = vsub.f32 1.0, %v1234
      %v1236 = vmul.f32 %v1233, %v1235
      %v1237 = vadd.f32 %v1233, %v1236
      %vm1238 = vweird.f32 %v1110
      %vm1239 = vweird.f32 %v1233
      %vm1240 = vmor %vm1238, %vm1239
      %v1241 = vsel %vm1240, %v1233, %v1237
      %v1242 = vand.u32 2147483647, %v1110
      %vm1243 = vcmp.eq.f32.partialorder %v1242, 8.507059e+37
      %v1244 = vand.u32 %v1110, 2147483648
      %v1245 = vor.u32 1.1754944e-38, %v1244
      %v1246 = vsel %vm1243, %v1245, %v1241
      %v1247 = vrcp.pop %v1111
      %v1248 = vmul.f32 %v1111, %v1247
      %v1249 = vsub.f32 1.0, %v1248
      %v1250 = vmul.f32 %v1247, %v1249
      %v1251 = vadd.f32 %v1247, %v1250
      %vm1252 = vweird.f32 %v1111
      %vm1253 = vweird.f32 %v1247
      %vm1254 = vmor %vm1252, %vm1253
      %v1255 = vsel %vm1254, %v1247, %v1251
      %v1256 = vand.u32 2147483647, %v1111
      %vm1257 = vcmp.eq.f32.partialorder %v1256, 8.507059e+37
      %v1258 = vand.u32 %v1111, 2147483648
      %v1259 = vor.u32 1.1754944e-38, %v1258
      %v1260 = vsel %vm1257, %v1259, %v1255
      %v1261 = vrcp.pop %v1112
      %v1262 = vmul.f32 %v1112, %v1261
      %v1263 = vsub.f32 1.0, %v1262
      %v1264 = vmul.f32 %v1261, %v1263
      %v1265 = vadd.f32 %v1261, %v1264
      %vm1266 = vweird.f32 %v1112
      %vm1267 = vweird.f32 %v1261
      %vm1268 = vmor %vm1266, %vm1267
      %v1269 = vsel %vm1268, %v1261, %v1265
      %v1270 = vand.u32 2147483647, %v1112
      %vm1271 = vcmp.eq.f32.partialorder %v1270, 8.507059e+37
      %v1272 = vand.u32 %v1112, 2147483648
      %v1273 = vor.u32 1.1754944e-38, %v1272
      %v1274 = vsel %vm1271, %v1273, %v1269
      %v1275 = vrcp.pop %v1113
      %v1276 = vmul.f32 %v1113, %v1275
      %v1277 = vsub.f32 1.0, %v1276
      %v1278 = vmul.f32 %v1275, %v1277
      %v1279 = vadd.f32 %v1275, %v1278
      %vm1280 = vweird.f32 %v1113
      %vm1281 = vweird.f32 %v1275
      %vm1282 = vmor %vm1280, %vm1281
      %v1283 = vsel %vm1282, %v1275, %v1279
      %v1284 = vand.u32 2147483647, %v1113
      %vm1285 = vcmp.eq.f32.partialorder %v1284, 8.507059e+37
      %v1286 = vand.u32 %v1113, 2147483648
      %v1287 = vor.u32 1.1754944e-38, %v1286
      %v1288 = vsel %vm1285, %v1287, %v1283
      %v1289 = vrcp.pop %v1114
      %v1290 = vmul.f32 %v1114, %v1289
      %v1291 = vsub.f32 1.0, %v1290
      %v1292 = vmul.f32 %v1289, %v1291
      %v1293 = vadd.f32 %v1289, %v1292
      %vm1294 = vweird.f32 %v1114
      %vm1295 = vweird.f32 %v1289
      %vm1296 = vmor %vm1294, %vm1295
      %v1297 = vsel %vm1296, %v1289, %v1293
      %v1298 = vand.u32 2147483647, %v1114
      %vm1299 = vcmp.eq.f32.partialorder %v1298, 8.507059e+37
      %v1300 = vand.u32 %v1114, 2147483648
      %v1301 = vor.u32 1.1754944e-38, %v1300
      %v1302 = vsel %vm1299, %v1301, %v1297
      %v1303 = vrcp.pop %v1115
      %v1304 = vmul.f32 %v1115, %v1303
      %v1305 = vsub.f32 1.0, %v1304
      %v1306 = vmul.f32 %v1303, %v1305
      %v1307 = vadd.f32 %v1303, %v1306
      %vm1308 = vweird.f32 %v1115
      %vm1309 = vweird.f32 %v1303
      %vm1310 = vmor %vm1308, %vm1309
      %v1311 = vsel %vm1310, %v1303, %v1307
      %v1312 = vand.u32 2147483647, %v1115
      %vm1313 = vcmp.eq.f32.partialorder %v1312, 8.507059e+37
      %v1314 = vand.u32 %v1115, 2147483648
      %v1315 = vor.u32 1.1754944e-38, %v1314
      %v1316 = vsel %vm1313, %v1315, %v1311
      %v1317 = vrcp.pop %v1116
      %v1318 = vmul.f32 %v1116, %v1317
      %v1319 = vsub.f32 1.0, %v1318
      %v1320 = vmul.f32 %v1317, %v1319
      %v1321 = vadd.f32 %v1317, %v1320
      %vm1322 = vweird.f32 %v1116
      %vm1323 = vweird.f32 %v1317
      %vm1324 = vmor %vm1322, %vm1323
      %v1325 = vsel %vm1324, %v1317, %v1321
      %v1326 = vand.u32 2147483647, %v1116
      %vm1327 = vcmp.eq.f32.partialorder %v1326, 8.507059e+37
      %v1328 = vand.u32 %v1116, 2147483648
      %v1329 = vor.u32 1.1754944e-38, %v1328
      %v1330 = vsel %vm1327, %v1329, %v1325
      %v1331 = vrcp.pop %v1117
      %v1332 = vmul.f32 %v1117, %v1331
      %v1333 = vsub.f32 1.0, %v1332
      %v1334 = vmul.f32 %v1331, %v1333
      %v1335 = vadd.f32 %v1331, %v1334
      %vm1336 = vweird.f32 %v1117
      %vm1337 = vweird.f32 %v1331
      %vm1338 = vmor %vm1336, %vm1337
      %v1339 = vsel %vm1338, %v1331, %v1335
      %v1340 = vand.u32 2147483647, %v1117
      %vm1341 = vcmp.eq.f32.partialorder %v1340, 8.507059e+37
      %v1342 = vand.u32 %v1117, 2147483648
      %v1343 = vor.u32 1.1754944e-38, %v1342
      %v1344 = vsel %vm1341, %v1343, %v1339
      %v1345 = vrcp.pop %v1118
      %v1346 = vmul.f32 %v1118, %v1345
      %v1347 = vsub.f32 1.0, %v1346
      %v1348 = vmul.f32 %v1345, %v1347
      %v1349 = vadd.f32 %v1345, %v1348
      %vm1350 = vweird.f32 %v1118
      %vm1351 = vweird.f32 %v1345
      %vm1352 = vmor %vm1350, %vm1351
      %v1353 = vsel %vm1352, %v1345, %v1349
      %v1354 = vand.u32 2147483647, %v1118
      %vm1355 = vcmp.eq.f32.partialorder %v1354, 8.507059e+37
      %v1356 = vand.u32 %v1118, 2147483648
      %v1357 = vor.u32 1.1754944e-38, %v1356
      %v1358 = vsel %vm1355, %v1357, %v1353
      %v1359 = vrcp.pop %v1119
      %v1360 = vmul.f32 %v1119, %v1359
      %v1361 = vsub.f32 1.0, %v1360
      %v1362 = vmul.f32 %v1359, %v1361
      %v1363 = vadd.f32 %v1359, %v1362
      %vm1364 = vweird.f32 %v1119
      %vm1365 = vweird.f32 %v1359
      %vm1366 = vmor %vm1364, %vm1365
      %v1367 = vsel %vm1366, %v1359, %v1363
      %v1368 = vand.u32 2147483647, %v1119
      %vm1369 = vcmp.eq.f32.partialorder %v1368, 8.507059e+37
      %v1370 = vand.u32 %v1119, 2147483648
      %v1371 = vor.u32 1.1754944e-38, %v1370
      %v1372 = vsel %vm1369, %v1371, %v1367
      %v1373 = vrcp.pop %v1120
      %v1374 = vmul.f32 %v1120, %v1373
      %v1375 = vsub.f32 1.0, %v1374
      %v1376 = vmul.f32 %v1373, %v1375
      %v1377 = vadd.f32 %v1373, %v1376
      %vm1378 = vweird.f32 %v1120
      %vm1379 = vweird.f32 %v1373
      %vm1380 = vmor %vm1378, %vm1379
      %v1381 = vsel %vm1380, %v1373, %v1377
      %v1382 = vand.u32 2147483647, %v1120
      %vm1383 = vcmp.eq.f32.partialorder %v1382, 8.507059e+37
      %v1384 = vand.u32 %v1120, 2147483648
      %v1385 = vor.u32 1.1754944e-38, %v1384
      %v1386 = vsel %vm1383, %v1385, %v1381
      %v1387 = vrcp.pop %v1121
      %v1388 = vmul.f32 %v1121, %v1387
      %v1389 = vsub.f32 1.0, %v1388
      %v1390 = vmul.f32 %v1387, %v1389
      %v1391 = vadd.f32 %v1387, %v1390
      %vm1392 = vweird.f32 %v1121
      %vm1393 = vweird.f32 %v1387
      %vm1394 = vmor %vm1392, %vm1393
      %v1395 = vsel %vm1394, %v1387, %v1391
      %v1396 = vand.u32 2147483647, %v1121
      %vm1397 = vcmp.eq.f32.partialorder %v1396, 8.507059e+37
      %v1398 = vand.u32 %v1121, 2147483648
      %v1399 = vor.u32 1.1754944e-38, %v1398
      %v1400 = vsel %vm1397, %v1399, %v1395
      %v1401 = vrcp.pop %v1122
      %v1402 = vmul.f32 %v1122, %v1401
      %v1403 = vsub.f32 1.0, %v1402
      %v1404 = vmul.f32 %v1401, %v1403
      %v1405 = vadd.f32 %v1401, %v1404
      %vm1406 = vweird.f32 %v1122
      %vm1407 = vweird.f32 %v1401
      %vm1408 = vmor %vm1406, %vm1407
      %v1409 = vsel %vm1408, %v1401, %v1405
      %v1410 = vand.u32 2147483647, %v1122
      %vm1411 = vcmp.eq.f32.partialorder %v1410, 8.507059e+37
      %v1412 = vand.u32 %v1122, 2147483648
      %v1413 = vor.u32 1.1754944e-38, %v1412
      %v1414 = vsel %vm1411, %v1413, %v1409
      %v1415 = vrcp.pop %v1123
      %v1416 = vmul.f32 %v1123, %v1415
      %v1417 = vsub.f32 1.0, %v1416
      %v1418 = vmul.f32 %v1415, %v1417
      %v1419 = vadd.f32 %v1415, %v1418
      %vm1420 = vweird.f32 %v1123
      %vm1421 = vweird.f32 %v1415
      %vm1422 = vmor %vm1420, %vm1421
      %v1423 = vsel %vm1422, %v1415, %v1419
      %v1424 = vand.u32 2147483647, %v1123
      %vm1425 = vcmp.eq.f32.partialorder %v1424, 8.507059e+37
      %v1426 = vand.u32 %v1123, 2147483648
      %v1427 = vor.u32 1.1754944e-38, %v1426
      %v1428 = vsel %vm1425, %v1427, %v1423
      %v1429 = vrcp.pop %v1124
      %v1430 = vmul.f32 %v1124, %v1429
      %v1431 = vsub.f32 1.0, %v1430
      %v1432 = vmul.f32 %v1429, %v1431
      %v1433 = vadd.f32 %v1429, %v1432
      %vm1434 = vweird.f32 %v1124
      %vm1435 = vweird.f32 %v1429
      %vm1436 = vmor %vm1434, %vm1435
      %v1437 = vsel %vm1436, %v1429, %v1433
      %v1438 = vand.u32 2147483647, %v1124
      %vm1439 = vcmp.eq.f32.partialorder %v1438, 8.507059e+37
      %v1440 = vand.u32 %v1124, 2147483648
      %v1441 = vor.u32 1.1754944e-38, %v1440
      %v1442 = vsel %vm1439, %v1441, %v1437
      %v1443 = vrcp.pop %v1125
      %v1444 = vmul.f32 %v1125, %v1443
      %v1445 = vsub.f32 1.0, %v1444
      %v1446 = vmul.f32 %v1443, %v1445
      %v1447 = vadd.f32 %v1443, %v1446
      %vm1448 = vweird.f32 %v1125
      %vm1449 = vweird.f32 %v1443
      %vm1450 = vmor %vm1448, %vm1449
      %v1451 = vsel %vm1450, %v1443, %v1447
      %v1452 = vand.u32 2147483647, %v1125
      %vm1453 = vcmp.eq.f32.partialorder %v1452, 8.507059e+37
      %v1454 = vand.u32 %v1125, 2147483648
      %v1455 = vor.u32 1.1754944e-38, %v1454
      %v1456 = vsel %vm1453, %v1455, %v1451
      %v1457 = vrcp.pop %v1126
      %v1458 = vmul.f32 %v1126, %v1457
      %v1459 = vsub.f32 1.0, %v1458
      %v1460 = vmul.f32 %v1457, %v1459
      %v1461 = vadd.f32 %v1457, %v1460
      %vm1462 = vweird.f32 %v1126
      %vm1463 = vweird.f32 %v1457
      %vm1464 = vmor %vm1462, %vm1463
      %v1465 = vsel %vm1464, %v1457, %v1461
      %v1466 = vand.u32 2147483647, %v1126
      %vm1467 = vcmp.eq.f32.partialorder %v1466, 8.507059e+37
      %v1468 = vand.u32 %v1126, 2147483648
      %v1469 = vor.u32 1.1754944e-38, %v1468
      %v1470 = vsel %vm1467, %v1469, %v1465
      %v1471 = vrcp.pop %v1127
      %v1472 = vmul.f32 %v1127, %v1471
      %v1473 = vsub.f32 1.0, %v1472
      %v1474 = vmul.f32 %v1471, %v1473
      %v1475 = vadd.f32 %v1471, %v1474
      %vm1476 = vweird.f32 %v1127
      %vm1477 = vweird.f32 %v1471
      %vm1478 = vmor %vm1476, %vm1477
      %v1479 = vsel %vm1478, %v1471, %v1475
      %v1480 = vand.u32 2147483647, %v1127
      %vm1481 = vcmp.eq.f32.partialorder %v1480, 8.507059e+37
      %v1482 = vand.u32 %v1127, 2147483648
      %v1483 = vor.u32 1.1754944e-38, %v1482
      %v1484 = vsel %vm1481, %v1483, %v1479
      %v1485 = vrcp.pop %v1128
      %v1486 = vmul.f32 %v1128, %v1485
      %v1487 = vsub.f32 1.0, %v1486
      %v1488 = vmul.f32 %v1485, %v1487
      %v1489 = vadd.f32 %v1485, %v1488
      %vm1490 = vweird.f32 %v1128
      %vm1491 = vweird.f32 %v1485
      %vm1492 = vmor %vm1490, %vm1491
      %v1493 = vsel %vm1492, %v1485, %v1489
      %v1494 = vand.u32 2147483647, %v1128
      %vm1495 = vcmp.eq.f32.partialorder %v1494, 8.507059e+37
      %v1496 = vand.u32 %v1128, 2147483648
      %v1497 = vor.u32 1.1754944e-38, %v1496
      %v1498 = vsel %vm1495, %v1497, %v1493
      %v1499 = vrcp.pop %v1129
      %v1500 = vmul.f32 %v1129, %v1499
      %v1501 = vsub.f32 1.0, %v1500
      %v1502 = vmul.f32 %v1499, %v1501
      %v1503 = vadd.f32 %v1499, %v1502
      %vm1504 = vweird.f32 %v1129
      %vm1505 = vweird.f32 %v1499
      %vm1506 = vmor %vm1504, %vm1505
      %v1507 = vsel %vm1506, %v1499, %v1503
      %v1508 = vand.u32 2147483647, %v1129
      %vm1509 = vcmp.eq.f32.partialorder %v1508, 8.507059e+37
      %v1510 = vand.u32 %v1129, 2147483648
      %v1511 = vor.u32 1.1754944e-38, %v1510
      %v1512 = vsel %vm1509, %v1511, %v1507
      %v1513 = vrcp.pop %v1130
      %v1514 = vmul.f32 %v1130, %v1513
      %v1515 = vsub.f32 1.0, %v1514
      %v1516 = vmul.f32 %v1513, %v1515
      %v1517 = vadd.f32 %v1513, %v1516
      %vm1518 = vweird.f32 %v1130
      %vm1519 = vweird.f32 %v1513
      %vm1520 = vmor %vm1518, %vm1519
      %v1521 = vsel %vm1520, %v1513, %v1517
      %v1522 = vand.u32 2147483647, %v1130
      %vm1523 = vcmp.eq.f32.partialorder %v1522, 8.507059e+37
      %v1524 = vand.u32 %v1130, 2147483648
      %v1525 = vor.u32 1.1754944e-38, %v1524
      %v1526 = vsel %vm1523, %v1525, %v1521
      %v1527 = vrcp.pop %v1131
      %v1528 = vmul.f32 %v1131, %v1527
      %v1529 = vsub.f32 1.0, %v1528
      %v1530 = vmul.f32 %v1527, %v1529
      %v1531 = vadd.f32 %v1527, %v1530
      %vm1532 = vweird.f32 %v1131
      %vm1533 = vweird.f32 %v1527
      %vm1534 = vmor %vm1532, %vm1533
      %v1535 = vsel %vm1534, %v1527, %v1531
      %v1536 = vand.u32 2147483647, %v1131
      %vm1537 = vcmp.eq.f32.partialorder %v1536, 8.507059e+37
      %v1538 = vand.u32 %v1131, 2147483648
      %v1539 = vor.u32 1.1754944e-38, %v1538
      %v1540 = vsel %vm1537, %v1539, %v1535
      %v1541 = vrcp.pop %v1132
      %v1542 = vmul.f32 %v1132, %v1541
      %v1543 = vsub.f32 1.0, %v1542
      %v1544 = vmul.f32 %v1541, %v1543
      %v1545 = vadd.f32 %v1541, %v1544
      %vm1546 = vweird.f32 %v1132
      %vm1547 = vweird.f32 %v1541
      %vm1548 = vmor %vm1546, %vm1547
      %v1549 = vsel %vm1548, %v1541, %v1545
      %v1550 = vand.u32 2147483647, %v1132
      %vm1551 = vcmp.eq.f32.partialorder %v1550, 8.507059e+37
      %v1552 = vand.u32 %v1132, 2147483648
      %v1553 = vor.u32 1.1754944e-38, %v1552
      %v1554 = vsel %vm1551, %v1553, %v1549
      %v1555 = vrcp.pop %v1133
      %v1556 = vmul.f32 %v1133, %v1555
      %v1557 = vsub.f32 1.0, %v1556
      %v1558 = vmul.f32 %v1555, %v1557
      %v1559 = vadd.f32 %v1555, %v1558
      %vm1560 = vweird.f32 %v1133
      %vm1561 = vweird.f32 %v1555
      %vm1562 = vmor %vm1560, %vm1561
      %v1563 = vsel %vm1562, %v1555, %v1559
      %v1564 = vand.u32 2147483647, %v1133
      %vm1565 = vcmp.eq.f32.partialorder %v1564, 8.507059e+37
      %v1566 = vand.u32 %v1133, 2147483648
      %v1567 = vor.u32 1.1754944e-38, %v1566
      %v1568 = vsel %vm1565, %v1567, %v1563
      %v1569 = vrcp.pop %v1134
      %v1570 = vmul.f32 %v1134, %v1569
      %v1571 = vsub.f32 1.0, %v1570
      %v1572 = vmul.f32 %v1569, %v1571
      %v1573 = vadd.f32 %v1569, %v1572
      %vm1574 = vweird.f32 %v1134
      %vm1575 = vweird.f32 %v1569
      %vm1576 = vmor %vm1574, %vm1575
      %v1577 = vsel %vm1576, %v1569, %v1573
      %v1578 = vand.u32 2147483647, %v1134
      %vm1579 = vcmp.eq.f32.partialorder %v1578, 8.507059e+37
      %v1580 = vand.u32 %v1134, 2147483648
      %v1581 = vor.u32 1.1754944e-38, %v1580
      %v1582 = vsel %vm1579, %v1581, %v1577
      %v1583 = vld [vmem:[%s371] sm:$0xff]
      %v1584 = vld [vmem:[%s371 + $0x8] sm:$0xff]
      %v1585 = vld [vmem:[%s371 + $0x10] sm:$0xff]
      %v1586 = vld [vmem:[%s371 + $0x18] sm:$0xff]
      %v1587 = vld [vmem:[%s371 + $0x20] sm:$0xff]
      %v1588 = vld [vmem:[%s371 + $0x28] sm:$0xff]
      %v1589 = vld [vmem:[%s371 + $0x30] sm:$0xff]
      %v1590 = vld [vmem:[%s371 + $0x38] sm:$0xff]
      %v1591 = vld [vmem:[%s371 + $0x40] sm:$0xff]
      %v1592 = vld [vmem:[%s371 + $0x48] sm:$0xff]
      %v1593 = vld [vmem:[%s371 + $0x50] sm:$0xff]
      %v1594 = vld [vmem:[%s371 + $0x58] sm:$0xff]
      %v1595 = vld [vmem:[%s371 + $0x60] sm:$0xff]
      %v1596 = vld [vmem:[%s371 + $0x68] sm:$0xff]
      %v1597 = vld [vmem:[%s371 + $0x70] sm:$0xff]
      %v1598 = vld [vmem:[%s371 + $0x78] sm:$0xff]
      %v1599 = vld [vmem:[%s371 + $0x80] sm:$0xff]
      %v1600 = vld [vmem:[%s371 + $0x88] sm:$0xff]
      %v1601 = vld [vmem:[%s371 + $0x90] sm:$0xff]
      %v1602 = vld [vmem:[%s371 + $0x98] sm:$0xff]
      %v1603 = vld [vmem:[%s371 + $0xa0] sm:$0xff]
      %v1604 = vld [vmem:[%s371 + $0xa8] sm:$0xff]
      %v1605 = vld [vmem:[%s371 + $0xb0] sm:$0xff]
      %v1606 = vld [vmem:[%s371 + $0xb8] sm:$0xff]
      %v1607 = vld [vmem:[%s371 + $0xc0] sm:$0xff]
      %v1608 = vld [vmem:[%s371 + $0xc8] sm:$0xff]
      %v1609 = vld [vmem:[%s371 + $0xd0] sm:$0xff]
      %v1610 = vld [vmem:[%s371 + $0xd8] sm:$0xff]
      %v1611 = vld [vmem:[%s371 + $0xe0] sm:$0xff]
      %v1612 = vld [vmem:[%s371 + $0xe8] sm:$0xff]
      %v1613 = vld [vmem:[%s371 + $0xf0] sm:$0xff]
      %v1614 = vld [vmem:[%s371 + $0xf8] sm:$0xff]
      %v1615 = vld [vmem:[%s377] sm:$0xff]
      %v1616 = vld [vmem:[%s377 + $0x8] sm:$0xff]
      %v1617 = vld [vmem:[%s377 + $0x10] sm:$0xff]
      %v1618 = vld [vmem:[%s377 + $0x18] sm:$0xff]
      %v1619 = vld [vmem:[%s377 + $0x20] sm:$0xff]
      %v1620 = vld [vmem:[%s377 + $0x28] sm:$0xff]
      %v1621 = vld [vmem:[%s377 + $0x30] sm:$0xff]
      %v1622 = vld [vmem:[%s377 + $0x38] sm:$0xff]
      %v1623 = vld [vmem:[%s377 + $0x40] sm:$0xff]
      %v1624 = vld [vmem:[%s377 + $0x48] sm:$0xff]
      %v1625 = vld [vmem:[%s377 + $0x50] sm:$0xff]
      %v1626 = vld [vmem:[%s377 + $0x58] sm:$0xff]
      %v1627 = vld [vmem:[%s377 + $0x60] sm:$0xff]
      %v1628 = vld [vmem:[%s377 + $0x68] sm:$0xff]
      %v1629 = vld [vmem:[%s377 + $0x70] sm:$0xff]
      %v1630 = vld [vmem:[%s377 + $0x78] sm:$0xff]
      %v1631 = vld [vmem:[%s377 + $0x80] sm:$0xff]
      %v1632 = vld [vmem:[%s377 + $0x88] sm:$0xff]
      %v1633 = vld [vmem:[%s377 + $0x90] sm:$0xff]
      %v1634 = vld [vmem:[%s377 + $0x98] sm:$0xff]
      %v1635 = vld [vmem:[%s377 + $0xa0] sm:$0xff]
      %v1636 = vld [vmem:[%s377 + $0xa8] sm:$0xff]
      %v1637 = vld [vmem:[%s377 + $0xb0] sm:$0xff]
      %v1638 = vld [vmem:[%s377 + $0xb8] sm:$0xff]
      %v1639 = vld [vmem:[%s377 + $0xc0] sm:$0xff]
      %v1640 = vld [vmem:[%s377 + $0xc8] sm:$0xff]
      %v1641 = vld [vmem:[%s377 + $0xd0] sm:$0xff]
      %v1642 = vld [vmem:[%s377 + $0xd8] sm:$0xff]
      %v1643 = vld [vmem:[%s377 + $0xe0] sm:$0xff]
      %v1644 = vld [vmem:[%s377 + $0xe8] sm:$0xff]
      %v1645 = vld [vmem:[%s377 + $0xf0] sm:$0xff]
      %v1646 = vld [vmem:[%s377 + $0xf8] sm:$0xff]
      %v1647 = vld [vmem:[%s7] sm:$0x1]
      %1680 = vrot.lane.b32.xlu0 %v1583, 64
      %v1681 = vpop.permute.xlu0 %1680
      %1682 = vrot.lane.b32.xlu0 %v1584, 64
      %v1683 = vpop.permute.xlu0 %1682
      %1684 = vrot.lane.b32.xlu0 %v1585, 64
      %v1685 = vpop.permute.xlu0 %1684
      %1686 = vrot.lane.b32.xlu0 %v1586, 64
      %v1687 = vpop.permute.xlu0 %1686
      %1688 = vrot.lane.b32.xlu0 %v1587, 64
      %v1689 = vpop.permute.xlu0 %1688
      %1690 = vrot.lane.b32.xlu0 %v1588, 64
      %v1691 = vpop.permute.xlu0 %1690
      %1692 = vrot.lane.b32.xlu0 %v1589, 64
      %v1693 = vpop.permute.xlu0 %1692
      %1694 = vrot.lane.b32.xlu0 %v1590, 64
      %v1695 = vpop.permute.xlu0 %1694
      %1696 = vrot.lane.b32.xlu0 %v1591, 64
      %v1697 = vpop.permute.xlu0 %1696
      %1698 = vrot.lane.b32.xlu0 %v1592, 64
      %v1699 = vpop.permute.xlu0 %1698
      %1700 = vrot.lane.b32.xlu0 %v1593, 64
      %v1701 = vpop.permute.xlu0 %1700
      %1702 = vrot.lane.b32.xlu0 %v1594, 64
      %v1703 = vpop.permute.xlu0 %1702
      %1704 = vrot.lane.b32.xlu0 %v1595, 64
      %v1705 = vpop.permute.xlu0 %1704
      %1706 = vrot.lane.b32.xlu0 %v1596, 64
      %v1707 = vpop.permute.xlu0 %1706
      %1708 = vrot.lane.b32.xlu0 %v1597, 64
      %v1709 = vpop.permute.xlu0 %1708
      %1710 = vrot.lane.b32.xlu0 %v1598, 64
      %v1711 = vpop.permute.xlu0 %1710
      %1712 = vrot.lane.b32.xlu0 %v1599, 64
      %v1713 = vpop.permute.xlu0 %1712
      %1714 = vrot.lane.b32.xlu0 %v1600, 64
      %v1715 = vpop.permute.xlu0 %1714
      %1716 = vrot.lane.b32.xlu0 %v1601, 64
      %v1717 = vpop.permute.xlu0 %1716
      %1718 = vrot.lane.b32.xlu0 %v1602, 64
      %v1719 = vpop.permute.xlu0 %1718
      %1720 = vrot.lane.b32.xlu0 %v1603, 64
      %v1721 = vpop.permute.xlu0 %1720
      %1722 = vrot.lane.b32.xlu0 %v1604, 64
      %v1723 = vpop.permute.xlu0 %1722
      %1724 = vrot.lane.b32.xlu0 %v1605, 64
      %v1725 = vpop.permute.xlu0 %1724
      %1726 = vrot.lane.b32.xlu0 %v1606, 64
      %v1727 = vpop.permute.xlu0 %1726
      %1728 = vrot.lane.b32.xlu0 %v1607, 64
      %v1729 = vpop.permute.xlu0 %1728
      %1730 = vrot.lane.b32.xlu0 %v1608, 64
      %v1731 = vpop.permute.xlu0 %1730
      %1732 = vrot.lane.b32.xlu0 %v1609, 64
      %v1733 = vpop.permute.xlu0 %1732
      %1734 = vrot.lane.b32.xlu0 %v1610, 64
      %v1735 = vpop.permute.xlu0 %1734
      %1736 = vrot.lane.b32.xlu0 %v1611, 64
      %v1737 = vpop.permute.xlu0 %1736
      %1738 = vrot.lane.b32.xlu0 %v1612, 64
      %v1739 = vpop.permute.xlu0 %1738
      %1740 = vrot.lane.b32.xlu0 %v1613, 64
      %v1741 = vpop.permute.xlu0 %1740
      %1742 = vrot.lane.b32.xlu0 %v1614, 64
      %v1743 = vpop.permute.xlu0 %1742
      %v1776 = vmul.f32 %v800, %v1681
      %v1777 = vmul.f32 %v802, %v1683
      %v1778 = vmul.f32 %v805, %v1685
      %v1779 = vmul.f32 %v807, %v1687
      %v1780 = vmul.f32 %v810, %v1689
      %v1781 = vmul.f32 %v812, %v1691
      %v1782 = vmul.f32 %v815, %v1693
      %v1783 = vmul.f32 %v817, %v1695
      %v1784 = vmul.f32 %v820, %v1697
      %v1785 = vmul.f32 %v822, %v1699
      %v1786 = vmul.f32 %v825, %v1701
      %v1787 = vmul.f32 %v827, %v1703
      %v1788 = vmul.f32 %v830, %v1705
      %v1789 = vmul.f32 %v832, %v1707
      %v1790 = vmul.f32 %v835, %v1709
      %v1791 = vmul.f32 %v837, %v1711
      %v1792 = vmul.f32 %v840, %v1713
      %v1793 = vmul.f32 %v842, %v1715
      %v1794 = vmul.f32 %v845, %v1717
      %v1795 = vmul.f32 %v847, %v1719
      %v1796 = vmul.f32 %v850, %v1721
      %v1797 = vmul.f32 %v852, %v1723
      %v1798 = vmul.f32 %v855, %v1725
      %v1799 = vmul.f32 %v857, %v1727
      %v1800 = vmul.f32 %v860, %v1729
      %v1801 = vmul.f32 %v862, %v1731
      %v1802 = vmul.f32 %v865, %v1733
      %v1803 = vmul.f32 %v867, %v1735
      %v1804 = vmul.f32 %v870, %v1737
      %v1805 = vmul.f32 %v872, %v1739
      %v1806 = vmul.f32 %v875, %v1741
      %v1807 = vmul.f32 %v877, %v1743
      %1840 = vrot.lane.b32.xlu0 %v1615, 64
      %v1841 = vpop.permute.xlu0 %1840
      %1842 = vrot.lane.b32.xlu0 %v1616, 64
      %v1843 = vpop.permute.xlu0 %1842
      %1844 = vrot.lane.b32.xlu0 %v1617, 64
      %v1845 = vpop.permute.xlu0 %1844
      %1846 = vrot.lane.b32.xlu0 %v1618, 64
      %v1847 = vpop.permute.xlu0 %1846
      %1848 = vrot.lane.b32.xlu0 %v1619, 64
      %v1849 = vpop.permute.xlu0 %1848
      %1850 = vrot.lane.b32.xlu0 %v1620, 64
      %v1851 = vpop.permute.xlu0 %1850
      %1852 = vrot.lane.b32.xlu0 %v1621, 64
      %v1853 = vpop.permute.xlu0 %1852
      %1854 = vrot.lane.b32.xlu0 %v1622, 64
      %v1855 = vpop.permute.xlu0 %1854
      %1856 = vrot.lane.b32.xlu0 %v1623, 64
      %v1857 = vpop.permute.xlu0 %1856
      %1858 = vrot.lane.b32.xlu0 %v1624, 64
      %v1859 = vpop.permute.xlu0 %1858
      %1860 = vrot.lane.b32.xlu0 %v1625, 64
      %v1861 = vpop.permute.xlu0 %1860
      %1862 = vrot.lane.b32.xlu0 %v1626, 64
      %v1863 = vpop.permute.xlu0 %1862
      %1864 = vrot.lane.b32.xlu0 %v1627, 64
      %v1865 = vpop.permute.xlu0 %1864
      %1866 = vrot.lane.b32.xlu0 %v1628, 64
      %v1867 = vpop.permute.xlu0 %1866
      %1868 = vrot.lane.b32.xlu0 %v1629, 64
      %v1869 = vpop.permute.xlu0 %1868
      %1870 = vrot.lane.b32.xlu0 %v1630, 64
      %v1871 = vpop.permute.xlu0 %1870
      %1872 = vrot.lane.b32.xlu0 %v1631, 64
      %v1873 = vpop.permute.xlu0 %1872
      %1874 = vrot.lane.b32.xlu0 %v1632, 64
      %v1875 = vpop.permute.xlu0 %1874
      %1876 = vrot.lane.b32.xlu0 %v1633, 64
      %v1877 = vpop.permute.xlu0 %1876
      %1878 = vrot.lane.b32.xlu0 %v1634, 64
      %v1879 = vpop.permute.xlu0 %1878
      %1880 = vrot.lane.b32.xlu0 %v1635, 64
      %v1881 = vpop.permute.xlu0 %1880
      %1882 = vrot.lane.b32.xlu0 %v1636, 64
      %v1883 = vpop.permute.xlu0 %1882
      %1884 = vrot.lane.b32.xlu0 %v1637, 64
      %v1885 = vpop.permute.xlu0 %1884
      %1886 = vrot.lane.b32.xlu0 %v1638, 64
      %v1887 = vpop.permute.xlu0 %1886
      %1888 = vrot.lane.b32.xlu0 %v1639, 64
      %v1889 = vpop.permute.xlu0 %1888
      %1890 = vrot.lane.b32.xlu0 %v1640, 64
      %v1891 = vpop.permute.xlu0 %1890
      %1892 = vrot.lane.b32.xlu0 %v1641, 64
      %v1893 = vpop.permute.xlu0 %1892
      %1894 = vrot.lane.b32.xlu0 %v1642, 64
      %v1895 = vpop.permute.xlu0 %1894
      %1896 = vrot.lane.b32.xlu0 %v1643, 64
      %v1897 = vpop.permute.xlu0 %1896
      %1898 = vrot.lane.b32.xlu0 %v1644, 64
      %v1899 = vpop.permute.xlu0 %1898
      %1900 = vrot.lane.b32.xlu0 %v1645, 64
      %v1901 = vpop.permute.xlu0 %1900
      %1902 = vrot.lane.b32.xlu0 %v1646, 64
      %v1903 = vpop.permute.xlu0 %1902
      %v1936 = vadd.f32 %v1776, %v1841
      %v1937 = vadd.f32 %v1777, %v1843
      %v1938 = vadd.f32 %v1778, %v1845
      %v1939 = vadd.f32 %v1779, %v1847
      %v1940 = vadd.f32 %v1780, %v1849
      %v1941 = vadd.f32 %v1781, %v1851
      %v1942 = vadd.f32 %v1782, %v1853
      %v1943 = vadd.f32 %v1783, %v1855
      %v1944 = vadd.f32 %v1784, %v1857
      %v1945 = vadd.f32 %v1785, %v1859
      %v1946 = vadd.f32 %v1786, %v1861
      %v1947 = vadd.f32 %v1787, %v1863
      %v1948 = vadd.f32 %v1788, %v1865
      %v1949 = vadd.f32 %v1789, %v1867
      %v1950 = vadd.f32 %v1790, %v1869
      %v1951 = vadd.f32 %v1791, %v1871
      %v1952 = vadd.f32 %v1792, %v1873
      %v1953 = vadd.f32 %v1793, %v1875
      %v1954 = vadd.f32 %v1794, %v1877
      %v1955 = vadd.f32 %v1795, %v1879
      %v1956 = vadd.f32 %v1796, %v1881
      %v1957 = vadd.f32 %v1797, %v1883
      %v1958 = vadd.f32 %v1798, %v1885
      %v1959 = vadd.f32 %v1799, %v1887
      %v1960 = vadd.f32 %v1800, %v1889
      %v1961 = vadd.f32 %v1801, %v1891
      %v1962 = vadd.f32 %v1802, %v1893
      %v1963 = vadd.f32 %v1803, %v1895
      %v1964 = vadd.f32 %v1804, %v1897
      %v1965 = vadd.f32 %v1805, %v1899
      %v1966 = vadd.f32 %v1806, %v1901
      %v1967 = vadd.f32 %v1807, %v1903
      %v1968 = vmul.f32 %v800, 1.442695
      %v1969 = vpow.pop %v1968
      %v1970 = vmul.f32 %v802, 1.442695
      %v1971 = vpow.pop %v1970
      %v1972 = vmul.f32 %v805, 1.442695
      %v1973 = vpow.pop %v1972
      %v1974 = vmul.f32 %v807, 1.442695
      %v1975 = vpow.pop %v1974
      %v1976 = vmul.f32 %v810, 1.442695
      %v1977 = vpow.pop %v1976
      %v1978 = vmul.f32 %v812, 1.442695
      %v1979 = vpow.pop %v1978
      %v1980 = vmul.f32 %v815, 1.442695
      %v1981 = vpow.pop %v1980
      %v1982 = vmul.f32 %v817, 1.442695
      %v1983 = vpow.pop %v1982
      %v1984 = vmul.f32 %v820, 1.442695
      %v1985 = vpow.pop %v1984
      %v1986 = vmul.f32 %v822, 1.442695
      %v1987 = vpow.pop %v1986
      %v1988 = vmul.f32 %v825, 1.442695
      %v1989 = vpow.pop %v1988
      %v1990 = vmul.f32 %v827, 1.442695
      %v1991 = vpow.pop %v1990
      %v1992 = vmul.f32 %v830, 1.442695
      %v1993 = vpow.pop %v1992
      %v1994 = vmul.f32 %v832, 1.442695
      %v1995 = vpow.pop %v1994
      %v1996 = vmul.f32 %v835, 1.442695
      %v1997 = vpow.pop %v1996
      %v1998 = vmul.f32 %v837, 1.442695
      %v1999 = vpow.pop %v1998
      %v2000 = vmul.f32 %v840, 1.442695
      %v2001 = vpow.pop %v2000
      %v2002 = vmul.f32 %v842, 1.442695
      %v2003 = vpow.pop %v2002
      %v2004 = vmul.f32 %v845, 1.442695
      %v2005 = vpow.pop %v2004
      %v2006 = vmul.f32 %v847, 1.442695
      %v2007 = vpow.pop %v2006
      %v2008 = vmul.f32 %v850, 1.442695
      %v2009 = vpow.pop %v2008
      %v2010 = vmul.f32 %v852, 1.442695
      %v2011 = vpow.pop %v2010
      %v2012 = vmul.f32 %v855, 1.442695
      %v2013 = vpow.pop %v2012
      %v2014 = vmul.f32 %v857, 1.442695
      %v2015 = vpow.pop %v2014
      %v2016 = vmul.f32 %v860, 1.442695
      %v2017 = vpow.pop %v2016
      %v2018 = vmul.f32 %v862, 1.442695
      %v2019 = vpow.pop %v2018
      %v2020 = vmul.f32 %v865, 1.442695
      %v2021 = vpow.pop %v2020
      %v2022 = vmul.f32 %v867, 1.442695
      %v2023 = vpow.pop %v2022
      %v2024 = vmul.f32 %v870, 1.442695
      %v2025 = vpow.pop %v2024
      %v2026 = vmul.f32 %v872, 1.442695
      %v2027 = vpow.pop %v2026
      %v2028 = vmul.f32 %v875, 1.442695
      %v2029 = vpow.pop %v2028
      %v2030 = vmul.f32 %v877, 1.442695
      %v2031 = vpow.pop %v2030
      %2032 = vrot.lane.b32.xlu0 %v1583, 96
      %v2033 = vpop.permute.xlu0 %2032
      %2034 = vrot.lane.b32.xlu0 %v1584, 96
      %v2035 = vpop.permute.xlu0 %2034
      %2036 = vrot.lane.b32.xlu0 %v1585, 96
      %v2037 = vpop.permute.xlu0 %2036
      %2038 = vrot.lane.b32.xlu0 %v1586, 96
      %v2039 = vpop.permute.xlu0 %2038
      %2040 = vrot.lane.b32.xlu0 %v1587, 96
      %v2041 = vpop.permute.xlu0 %2040
      %2042 = vrot.lane.b32.xlu0 %v1588, 96
      %v2043 = vpop.permute.xlu0 %2042
      %2044 = vrot.lane.b32.xlu0 %v1589, 96
      %v2045 = vpop.permute.xlu0 %2044
      %2046 = vrot.lane.b32.xlu0 %v1590, 96
      %v2047 = vpop.permute.xlu0 %2046
      %2048 = vrot.lane.b32.xlu0 %v1591, 96
      %v2049 = vpop.permute.xlu0 %2048
      %2050 = vrot.lane.b32.xlu0 %v1592, 96
      %v2051 = vpop.permute.xlu0 %2050
      %2052 = vrot.lane.b32.xlu0 %v1593, 96
      %v2053 = vpop.permute.xlu0 %2052
      %2054 = vrot.lane.b32.xlu0 %v1594, 96
      %v2055 = vpop.permute.xlu0 %2054
      %2056 = vrot.lane.b32.xlu0 %v1595, 96
      %v2057 = vpop.permute.xlu0 %2056
      %2058 = vrot.lane.b32.xlu0 %v1596, 96
      %v2059 = vpop.permute.xlu0 %2058
      %2060 = vrot.lane.b32.xlu0 %v1597, 96
      %v2061 = vpop.permute.xlu0 %2060
      %2062 = vrot.lane.b32.xlu0 %v1598, 96
      %v2063 = vpop.permute.xlu0 %2062
      %2064 = vrot.lane.b32.xlu0 %v1599, 96
      %v2065 = vpop.permute.xlu0 %2064
      %2066 = vrot.lane.b32.xlu0 %v1600, 96
      %v2067 = vpop.permute.xlu0 %2066
      %2068 = vrot.lane.b32.xlu0 %v1601, 96
      %v2069 = vpop.permute.xlu0 %2068
      %2070 = vrot.lane.b32.xlu0 %v1602, 96
      %v2071 = vpop.permute.xlu0 %2070
      %2072 = vrot.lane.b32.xlu0 %v1603, 96
      %v2073 = vpop.permute.xlu0 %2072
      %2074 = vrot.lane.b32.xlu0 %v1604, 96
      %v2075 = vpop.permute.xlu0 %2074
      %2076 = vrot.lane.b32.xlu0 %v1605, 96
      %v2077 = vpop.permute.xlu0 %2076
      %2078 = vrot.lane.b32.xlu0 %v1606, 96
      %v2079 = vpop.permute.xlu0 %2078
      %2080 = vrot.lane.b32.xlu0 %v1607, 96
      %v2081 = vpop.permute.xlu0 %2080
      %2082 = vrot.lane.b32.xlu0 %v1608, 96
      %v2083 = vpop.permute.xlu0 %2082
      %2084 = vrot.lane.b32.xlu0 %v1609, 96
      %v2085 = vpop.permute.xlu0 %2084
      %2086 = vrot.lane.b32.xlu0 %v1610, 96
      %v2087 = vpop.permute.xlu0 %2086
      %2088 = vrot.lane.b32.xlu0 %v1611, 96
      %v2089 = vpop.permute.xlu0 %2088
      %2090 = vrot.lane.b32.xlu0 %v1612, 96
      %v2091 = vpop.permute.xlu0 %2090
      %2092 = vrot.lane.b32.xlu0 %v1613, 96
      %v2093 = vpop.permute.xlu0 %2092
      %2094 = vrot.lane.b32.xlu0 %v1614, 96
      %v2095 = vpop.permute.xlu0 %2094
      %v2128 = vmul.f32 %v1969, %v2033
      %v2129 = vmul.f32 %v1971, %v2035
      %v2130 = vmul.f32 %v1973, %v2037
      %v2131 = vmul.f32 %v1975, %v2039
      %v2132 = vmul.f32 %v1977, %v2041
      %v2133 = vmul.f32 %v1979, %v2043
      %v2134 = vmul.f32 %v1981, %v2045
      %v2135 = vmul.f32 %v1983, %v2047
      %v2136 = vmul.f32 %v1985, %v2049
      %v2137 = vmul.f32 %v1987, %v2051
      %v2138 = vmul.f32 %v1989, %v2053
      %v2139 = vmul.f32 %v1991, %v2055
      %v2140 = vmul.f32 %v1993, %v2057
      %v2141 = vmul.f32 %v1995, %v2059
      %v2142 = vmul.f32 %v1997, %v2061
      %v2143 = vmul.f32 %v1999, %v2063
      %v2144 = vmul.f32 %v2001, %v2065
      %v2145 = vmul.f32 %v2003, %v2067
      %v2146 = vmul.f32 %v2005, %v2069
      %v2147 = vmul.f32 %v2007, %v2071
      %v2148 = vmul.f32 %v2009, %v2073
      %v2149 = vmul.f32 %v2011, %v2075
      %v2150 = vmul.f32 %v2013, %v2077
      %v2151 = vmul.f32 %v2015, %v2079
      %v2152 = vmul.f32 %v2017, %v2081
      %v2153 = vmul.f32 %v2019, %v2083
      %v2154 = vmul.f32 %v2021, %v2085
      %v2155 = vmul.f32 %v2023, %v2087
      %v2156 = vmul.f32 %v2025, %v2089
      %v2157 = vmul.f32 %v2027, %v2091
      %v2158 = vmul.f32 %v2029, %v2093
      %v2159 = vmul.f32 %v2031, %v2095
      %v2160 = vmul.f32 %v2128, 0.5
      %v2161 = vmul.f32 %v2129, 0.5
      %v2162 = vmul.f32 %v2130, 0.5
      %v2163 = vmul.f32 %v2131, 0.5
      %v2164 = vmul.f32 %v2132, 0.5
      %v2165 = vmul.f32 %v2133, 0.5
      %v2166 = vmul.f32 %v2134, 0.5
      %v2167 = vmul.f32 %v2135, 0.5
      %v2168 = vmul.f32 %v2136, 0.5
      %v2169 = vmul.f32 %v2137, 0.5
      %v2170 = vmul.f32 %v2138, 0.5
      %v2171 = vmul.f32 %v2139, 0.5
      %v2172 = vmul.f32 %v2140, 0.5
      %v2173 = vmul.f32 %v2141, 0.5
      %v2174 = vmul.f32 %v2142, 0.5
      %v2175 = vmul.f32 %v2143, 0.5
      %v2176 = vmul.f32 %v2144, 0.5
      %v2177 = vmul.f32 %v2145, 0.5
      %v2178 = vmul.f32 %v2146, 0.5
      %v2179 = vmul.f32 %v2147, 0.5
      %v2180 = vmul.f32 %v2148, 0.5
      %v2181 = vmul.f32 %v2149, 0.5
      %v2182 = vmul.f32 %v2150, 0.5
      %v2183 = vmul.f32 %v2151, 0.5
      %v2184 = vmul.f32 %v2152, 0.5
      %v2185 = vmul.f32 %v2153, 0.5
      %v2186 = vmul.f32 %v2154, 0.5
      %v2187 = vmul.f32 %v2155, 0.5
      %v2188 = vmul.f32 %v2156, 0.5
      %v2189 = vmul.f32 %v2157, 0.5
      %v2190 = vmul.f32 %v2158, 0.5
      %v2191 = vmul.f32 %v2159, 0.5
      %2224 = vrot.lane.b32.xlu0 %v2160, 96
      %v2225 = vpop.permute.xlu0 %2224
      %2226 = vrot.lane.b32.xlu0 %v2161, 96
      %v2227 = vpop.permute.xlu0 %2226
      %2228 = vrot.lane.b32.xlu0 %v2162, 96
      %v2229 = vpop.permute.xlu0 %2228
      %2230 = vrot.lane.b32.xlu0 %v2163, 96
      %v2231 = vpop.permute.xlu0 %2230
      %2232 = vrot.lane.b32.xlu0 %v2164, 96
      %v2233 = vpop.permute.xlu0 %2232
      %2234 = vrot.lane.b32.xlu0 %v2165, 96
      %v2235 = vpop.permute.xlu0 %2234
      %2236 = vrot.lane.b32.xlu0 %v2166, 96
      %v2237 = vpop.permute.xlu0 %2236
      %2238 = vrot.lane.b32.xlu0 %v2167, 96
      %v2239 = vpop.permute.xlu0 %2238
      %2240 = vrot.lane.b32.xlu0 %v2168, 96
      %v2241 = vpop.permute.xlu0 %2240
      %2242 = vrot.lane.b32.xlu0 %v2169, 96
      %v2243 = vpop.permute.xlu0 %2242
      %2244 = vrot.lane.b32.xlu0 %v2170, 96
      %v2245 = vpop.permute.xlu0 %2244
      %2246 = vrot.lane.b32.xlu0 %v2171, 96
      %v2247 = vpop.permute.xlu0 %2246
      %2248 = vrot.lane.b32.xlu0 %v2172, 96
      %v2249 = vpop.permute.xlu0 %2248
      %2250 = vrot.lane.b32.xlu0 %v2173, 96
      %v2251 = vpop.permute.xlu0 %2250
      %2252 = vrot.lane.b32.xlu0 %v2174, 96
      %v2253 = vpop.permute.xlu0 %2252
      %2254 = vrot.lane.b32.xlu0 %v2175, 96
      %v2255 = vpop.permute.xlu0 %2254
      %2256 = vrot.lane.b32.xlu0 %v2176, 96
      %v2257 = vpop.permute.xlu0 %2256
      %2258 = vrot.lane.b32.xlu0 %v2177, 96
      %v2259 = vpop.permute.xlu0 %2258
      %2260 = vrot.lane.b32.xlu0 %v2178, 96
      %v2261 = vpop.permute.xlu0 %2260
      %2262 = vrot.lane.b32.xlu0 %v2179, 96
      %v2263 = vpop.permute.xlu0 %2262
      %2264 = vrot.lane.b32.xlu0 %v2180, 96
      %v2265 = vpop.permute.xlu0 %2264
      %2266 = vrot.lane.b32.xlu0 %v2181, 96
      %v2267 = vpop.permute.xlu0 %2266
      %2268 = vrot.lane.b32.xlu0 %v2182, 96
      %v2269 = vpop.permute.xlu0 %2268
      %2270 = vrot.lane.b32.xlu0 %v2183, 96
      %v2271 = vpop.permute.xlu0 %2270
      %2272 = vrot.lane.b32.xlu0 %v2184, 96
      %v2273 = vpop.permute.xlu0 %2272
      %2274 = vrot.lane.b32.xlu0 %v2185, 96
      %v2275 = vpop.permute.xlu0 %2274
      %2276 = vrot.lane.b32.xlu0 %v2186, 96
      %v2277 = vpop.permute.xlu0 %2276
      %2278 = vrot.lane.b32.xlu0 %v2187, 96
      %v2279 = vpop.permute.xlu0 %2278
      %2280 = vrot.lane.b32.xlu0 %v2188, 96
      %v2281 = vpop.permute.xlu0 %2280
      %2282 = vrot.lane.b32.xlu0 %v2189, 96
      %v2283 = vpop.permute.xlu0 %2282
      %2284 = vrot.lane.b32.xlu0 %v2190, 96
      %v2285 = vpop.permute.xlu0 %2284
      %2286 = vrot.lane.b32.xlu0 %v2191, 96
      %v2287 = vpop.permute.xlu0 %2286
      %v2320 = vsub.f32 %v1936, %v2225
      %v2321 = vsub.f32 %v1937, %v2227
      %v2322 = vsub.f32 %v1938, %v2229
      %v2323 = vsub.f32 %v1939, %v2231
      %v2324 = vsub.f32 %v1940, %v2233
      %v2325 = vsub.f32 %v1941, %v2235
      %v2326 = vsub.f32 %v1942, %v2237
      %v2327 = vsub.f32 %v1943, %v2239
      %v2328 = vsub.f32 %v1944, %v2241
      %v2329 = vsub.f32 %v1945, %v2243
      %v2330 = vsub.f32 %v1946, %v2245
      %v2331 = vsub.f32 %v1947, %v2247
      %v2332 = vsub.f32 %v1948, %v2249
      %v2333 = vsub.f32 %v1949, %v2251
      %v2334 = vsub.f32 %v1950, %v2253
      %v2335 = vsub.f32 %v1951, %v2255
      %v2336 = vsub.f32 %v1952, %v2257
      %v2337 = vsub.f32 %v1953, %v2259
      %v2338 = vsub.f32 %v1954, %v2261
      %v2339 = vsub.f32 %v1955, %v2263
      %v2340 = vsub.f32 %v1956, %v2265
      %v2341 = vsub.f32 %v1957, %v2267
      %v2342 = vsub.f32 %v1958, %v2269
      %v2343 = vsub.f32 %v1959, %v2271
      %v2344 = vsub.f32 %v1960, %v2273
      %v2345 = vsub.f32 %v1961, %v2275
      %v2346 = vsub.f32 %v1962, %v2277
      %v2347 = vsub.f32 %v1963, %v2279
      %v2348 = vsub.f32 %v1964, %v2281
      %v2349 = vsub.f32 %v1965, %v2283
      %v2350 = vsub.f32 %v1966, %v2285
      %v2351 = vsub.f32 %v1967, %v2287
      %v2352 = vmax.f32 %v2320, 0.0
      %v2353 = vmax.f32 %v2321, 0.0
      %v2354 = vmax.f32 %v2322, 0.0
      %v2355 = vmax.f32 %v2323, 0.0
      %v2356 = vmax.f32 %v2324, 0.0
      %v2357 = vmax.f32 %v2325, 0.0
      %v2358 = vmax.f32 %v2326, 0.0
      %v2359 = vmax.f32 %v2327, 0.0
      %v2360 = vmax.f32 %v2328, 0.0
      %v2361 = vmax.f32 %v2329, 0.0
      %v2362 = vmax.f32 %v2330, 0.0
      %v2363 = vmax.f32 %v2331, 0.0
      %v2364 = vmax.f32 %v2332, 0.0
      %v2365 = vmax.f32 %v2333, 0.0
      %v2366 = vmax.f32 %v2334, 0.0
      %v2367 = vmax.f32 %v2335, 0.0
      %v2368 = vmax.f32 %v2336, 0.0
      %v2369 = vmax.f32 %v2337, 0.0
      %v2370 = vmax.f32 %v2338, 0.0
      %v2371 = vmax.f32 %v2339, 0.0
      %v2372 = vmax.f32 %v2340, 0.0
      %v2373 = vmax.f32 %v2341, 0.0
      %v2374 = vmax.f32 %v2342, 0.0
      %v2375 = vmax.f32 %v2343, 0.0
      %v2376 = vmax.f32 %v2344, 0.0
      %v2377 = vmax.f32 %v2345, 0.0
      %v2378 = vmax.f32 %v2346, 0.0
      %v2379 = vmax.f32 %v2347, 0.0
      %v2380 = vmax.f32 %v2348, 0.0
      %v2381 = vmax.f32 %v2349, 0.0
      %v2382 = vmax.f32 %v2350, 0.0
      %v2383 = vmax.f32 %v2351, 0.0
      %v2385 = vperm.slane %v1647, 0
      %2419 = vrot.lane.b32.xlu0 %v2352, 64
      %v2420 = vpop.permute.xlu0 %2419
      %2421 = vrot.lane.b32.xlu0 %v2353, 64
      %v2422 = vpop.permute.xlu0 %2421
      %2423 = vrot.lane.b32.xlu0 %v2354, 64
      %v2424 = vpop.permute.xlu0 %2423
      %2425 = vrot.lane.b32.xlu0 %v2355, 64
      %v2426 = vpop.permute.xlu0 %2425
      %2427 = vrot.lane.b32.xlu0 %v2356, 64
      %v2428 = vpop.permute.xlu0 %2427
      %2429 = vrot.lane.b32.xlu0 %v2357, 64
      %v2430 = vpop.permute.xlu0 %2429
      %2431 = vrot.lane.b32.xlu0 %v2358, 64
      %v2432 = vpop.permute.xlu0 %2431
      %2433 = vrot.lane.b32.xlu0 %v2359, 64
      %v2434 = vpop.permute.xlu0 %2433
      %2435 = vrot.lane.b32.xlu0 %v2360, 64
      %v2436 = vpop.permute.xlu0 %2435
      %2437 = vrot.lane.b32.xlu0 %v2361, 64
      %v2438 = vpop.permute.xlu0 %2437
      %2439 = vrot.lane.b32.xlu0 %v2362, 64
      %v2440 = vpop.permute.xlu0 %2439
      %2441 = vrot.lane.b32.xlu0 %v2363, 64
      %v2442 = vpop.permute.xlu0 %2441
      %2443 = vrot.lane.b32.xlu0 %v2364, 64
      %v2444 = vpop.permute.xlu0 %2443
      %2445 = vrot.lane.b32.xlu0 %v2365, 64
      %v2446 = vpop.permute.xlu0 %2445
      %2447 = vrot.lane.b32.xlu0 %v2366, 64
      %v2448 = vpop.permute.xlu0 %2447
      %2449 = vrot.lane.b32.xlu0 %v2367, 64
      %v2450 = vpop.permute.xlu0 %2449
      %2451 = vrot.lane.b32.xlu0 %v2368, 64
      %v2452 = vpop.permute.xlu0 %2451
      %2453 = vrot.lane.b32.xlu0 %v2369, 64
      %v2454 = vpop.permute.xlu0 %2453
      %2455 = vrot.lane.b32.xlu0 %v2370, 64
      %v2456 = vpop.permute.xlu0 %2455
      %2457 = vrot.lane.b32.xlu0 %v2371, 64
      %v2458 = vpop.permute.xlu0 %2457
      %2459 = vrot.lane.b32.xlu0 %v2372, 64
      %v2460 = vpop.permute.xlu0 %2459
      %2461 = vrot.lane.b32.xlu0 %v2373, 64
      %v2462 = vpop.permute.xlu0 %2461
      %2463 = vrot.lane.b32.xlu0 %v2374, 64
      %v2464 = vpop.permute.xlu0 %2463
      %2465 = vrot.lane.b32.xlu0 %v2375, 64
      %v2466 = vpop.permute.xlu0 %2465
      %2467 = vrot.lane.b32.xlu0 %v2376, 64
      %v2468 = vpop.permute.xlu0 %2467
      %2469 = vrot.lane.b32.xlu0 %v2377, 64
      %v2470 = vpop.permute.xlu0 %2469
      %2471 = vrot.lane.b32.xlu0 %v2378, 64
      %v2472 = vpop.permute.xlu0 %2471
      %2473 = vrot.lane.b32.xlu0 %v2379, 64
      %v2474 = vpop.permute.xlu0 %2473
      %2475 = vrot.lane.b32.xlu0 %v2380, 64
      %v2476 = vpop.permute.xlu0 %2475
      %2477 = vrot.lane.b32.xlu0 %v2381, 64
      %v2478 = vpop.permute.xlu0 %2477
      %2479 = vrot.lane.b32.xlu0 %v2382, 64
      %v2480 = vpop.permute.xlu0 %2479
      %2481 = vrot.lane.b32.xlu0 %v2383, 64
      %v2482 = vpop.permute.xlu0 %2481
      %v2515 = vmin.f32 %v2385, %v2420
      %v2516 = vmin.f32 %v2385, %v2422
      %v2517 = vmin.f32 %v2385, %v2424
      %v2518 = vmin.f32 %v2385, %v2426
      %v2519 = vmin.f32 %v2385, %v2428
      %v2520 = vmin.f32 %v2385, %v2430
      %v2521 = vmin.f32 %v2385, %v2432
      %v2522 = vmin.f32 %v2385, %v2434
      %v2523 = vmin.f32 %v2385, %v2436
      %v2524 = vmin.f32 %v2385, %v2438
      %v2525 = vmin.f32 %v2385, %v2440
      %v2526 = vmin.f32 %v2385, %v2442
      %v2527 = vmin.f32 %v2385, %v2444
      %v2528 = vmin.f32 %v2385, %v2446
      %v2529 = vmin.f32 %v2385, %v2448
      %v2530 = vmin.f32 %v2385, %v2450
      %v2531 = vmin.f32 %v2385, %v2452
      %v2532 = vmin.f32 %v2385, %v2454
      %v2533 = vmin.f32 %v2385, %v2456
      %v2534 = vmin.f32 %v2385, %v2458
      %v2535 = vmin.f32 %v2385, %v2460
      %v2536 = vmin.f32 %v2385, %v2462
      %v2537 = vmin.f32 %v2385, %v2464
      %v2538 = vmin.f32 %v2385, %v2466
      %v2539 = vmin.f32 %v2385, %v2468
      %v2540 = vmin.f32 %v2385, %v2470
      %v2541 = vmin.f32 %v2385, %v2472
      %v2542 = vmin.f32 %v2385, %v2474
      %v2543 = vmin.f32 %v2385, %v2476
      %v2544 = vmin.f32 %v2385, %v2478
      %v2545 = vmin.f32 %v2385, %v2480
      %v2546 = vmin.f32 %v2385, %v2482
      %v2547 = vadd.f32 %v1936, %v2225
      %v2548 = vadd.f32 %v1937, %v2227
      %v2549 = vadd.f32 %v1938, %v2229
      %v2550 = vadd.f32 %v1939, %v2231
      %v2551 = vadd.f32 %v1940, %v2233
      %v2552 = vadd.f32 %v1941, %v2235
      %v2553 = vadd.f32 %v1942, %v2237
      %v2554 = vadd.f32 %v1943, %v2239
      %v2555 = vadd.f32 %v1944, %v2241
      %v2556 = vadd.f32 %v1945, %v2243
      %v2557 = vadd.f32 %v1946, %v2245
      %v2558 = vadd.f32 %v1947, %v2247
      %v2559 = vadd.f32 %v1948, %v2249
      %v2560 = vadd.f32 %v1949, %v2251
      %v2561 = vadd.f32 %v1950, %v2253
      %v2562 = vadd.f32 %v1951, %v2255
      %v2563 = vadd.f32 %v1952, %v2257
      %v2564 = vadd.f32 %v1953, %v2259
      %v2565 = vadd.f32 %v1954, %v2261
      %v2566 = vadd.f32 %v1955, %v2263
      %v2567 = vadd.f32 %v1956, %v2265
      %v2568 = vadd.f32 %v1957, %v2267
      %v2569 = vadd.f32 %v1958, %v2269
      %v2570 = vadd.f32 %v1959, %v2271
      %v2571 = vadd.f32 %v1960, %v2273
      %v2572 = vadd.f32 %v1961, %v2275
      %v2573 = vadd.f32 %v1962, %v2277
      %v2574 = vadd.f32 %v1963, %v2279
      %v2575 = vadd.f32 %v1964, %v2281
      %v2576 = vadd.f32 %v1965, %v2283
      %v2577 = vadd.f32 %v1966, %v2285
      %v2578 = vadd.f32 %v1967, %v2287
      %v2579 = vmax.f32 %v2547, 0.0
      %v2580 = vmax.f32 %v2548, 0.0
      %v2581 = vmax.f32 %v2549, 0.0
      %v2582 = vmax.f32 %v2550, 0.0
      %v2583 = vmax.f32 %v2551, 0.0
      %v2584 = vmax.f32 %v2552, 0.0
      %v2585 = vmax.f32 %v2553, 0.0
      %v2586 = vmax.f32 %v2554, 0.0
      %v2587 = vmax.f32 %v2555, 0.0
      %v2588 = vmax.f32 %v2556, 0.0
      %v2589 = vmax.f32 %v2557, 0.0
      %v2590 = vmax.f32 %v2558, 0.0
      %v2591 = vmax.f32 %v2559, 0.0
      %v2592 = vmax.f32 %v2560, 0.0
      %v2593 = vmax.f32 %v2561, 0.0
      %v2594 = vmax.f32 %v2562, 0.0
      %v2595 = vmax.f32 %v2563, 0.0
      %v2596 = vmax.f32 %v2564, 0.0
      %v2597 = vmax.f32 %v2565, 0.0
      %v2598 = vmax.f32 %v2566, 0.0
      %v2599 = vmax.f32 %v2567, 0.0
      %v2600 = vmax.f32 %v2568, 0.0
      %v2601 = vmax.f32 %v2569, 0.0
      %v2602 = vmax.f32 %v2570, 0.0
      %v2603 = vmax.f32 %v2571, 0.0
      %v2604 = vmax.f32 %v2572, 0.0
      %v2605 = vmax.f32 %v2573, 0.0
      %v2606 = vmax.f32 %v2574, 0.0
      %v2607 = vmax.f32 %v2575, 0.0
      %v2608 = vmax.f32 %v2576, 0.0
      %v2609 = vmax.f32 %v2577, 0.0
      %v2610 = vmax.f32 %v2578, 0.0
      %2643 = vrot.lane.b32.xlu0 %v2579, 64
      %v2644 = vpop.permute.xlu0 %2643
      %2645 = vrot.lane.b32.xlu0 %v2580, 64
      %v2646 = vpop.permute.xlu0 %2645
      %2647 = vrot.lane.b32.xlu0 %v2581, 64
      %v2648 = vpop.permute.xlu0 %2647
      %2649 = vrot.lane.b32.xlu0 %v2582, 64
      %v2650 = vpop.permute.xlu0 %2649
      %2651 = vrot.lane.b32.xlu0 %v2583, 64
      %v2652 = vpop.permute.xlu0 %2651
      %2653 = vrot.lane.b32.xlu0 %v2584, 64
      %v2654 = vpop.permute.xlu0 %2653
      %2655 = vrot.lane.b32.xlu0 %v2585, 64
      %v2656 = vpop.permute.xlu0 %2655
      %2657 = vrot.lane.b32.xlu0 %v2586, 64
      %v2658 = vpop.permute.xlu0 %2657
      %2659 = vrot.lane.b32.xlu0 %v2587, 64
      %v2660 = vpop.permute.xlu0 %2659
      %2661 = vrot.lane.b32.xlu0 %v2588, 64
      %v2662 = vpop.permute.xlu0 %2661
      %2663 = vrot.lane.b32.xlu0 %v2589, 64
      %v2664 = vpop.permute.xlu0 %2663
      %2665 = vrot.lane.b32.xlu0 %v2590, 64
      %v2666 = vpop.permute.xlu0 %2665
      %2667 = vrot.lane.b32.xlu0 %v2591, 64
      %v2668 = vpop.permute.xlu0 %2667
      %2669 = vrot.lane.b32.xlu0 %v2592, 64
      %v2670 = vpop.permute.xlu0 %2669
      %2671 = vrot.lane.b32.xlu0 %v2593, 64
      %v2672 = vpop.permute.xlu0 %2671
      %2673 = vrot.lane.b32.xlu0 %v2594, 64
      %v2674 = vpop.permute.xlu0 %2673
      %2675 = vrot.lane.b32.xlu0 %v2595, 64
      %v2676 = vpop.permute.xlu0 %2675
      %2677 = vrot.lane.b32.xlu0 %v2596, 64
      %v2678 = vpop.permute.xlu0 %2677
      %2679 = vrot.lane.b32.xlu0 %v2597, 64
      %v2680 = vpop.permute.xlu0 %2679
      %2681 = vrot.lane.b32.xlu0 %v2598, 64
      %v2682 = vpop.permute.xlu0 %2681
      %2683 = vrot.lane.b32.xlu0 %v2599, 64
      %v2684 = vpop.permute.xlu0 %2683
      %2685 = vrot.lane.b32.xlu0 %v2600, 64
      %v2686 = vpop.permute.xlu0 %2685
      %2687 = vrot.lane.b32.xlu0 %v2601, 64
      %v2688 = vpop.permute.xlu0 %2687
      %2689 = vrot.lane.b32.xlu0 %v2602, 64
      %v2690 = vpop.permute.xlu0 %2689
      %2691 = vrot.lane.b32.xlu0 %v2603, 64
      %v2692 = vpop.permute.xlu0 %2691
      %2693 = vrot.lane.b32.xlu0 %v2604, 64
      %v2694 = vpop.permute.xlu0 %2693
      %2695 = vrot.lane.b32.xlu0 %v2605, 64
      %v2696 = vpop.permute.xlu0 %2695
      %2697 = vrot.lane.b32.xlu0 %v2606, 64
      %v2698 = vpop.permute.xlu0 %2697
      %2699 = vrot.lane.b32.xlu0 %v2607, 64
      %v2700 = vpop.permute.xlu0 %2699
      %2701 = vrot.lane.b32.xlu0 %v2608, 64
      %v2702 = vpop.permute.xlu0 %2701
      %2703 = vrot.lane.b32.xlu0 %v2609, 64
      %v2704 = vpop.permute.xlu0 %2703
      %2705 = vrot.lane.b32.xlu0 %v2610, 64
      %v2706 = vpop.permute.xlu0 %2705
      %v2739 = vmin.f32 %v2385, %v2644
      %v2740 = vmin.f32 %v2385, %v2646
      %v2741 = vmin.f32 %v2385, %v2648
      %v2742 = vmin.f32 %v2385, %v2650
      %v2743 = vmin.f32 %v2385, %v2652
      %v2744 = vmin.f32 %v2385, %v2654
      %v2745 = vmin.f32 %v2385, %v2656
      %v2746 = vmin.f32 %v2385, %v2658
      %v2747 = vmin.f32 %v2385, %v2660
      %v2748 = vmin.f32 %v2385, %v2662
      %v2749 = vmin.f32 %v2385, %v2664
      %v2750 = vmin.f32 %v2385, %v2666
      %v2751 = vmin.f32 %v2385, %v2668
      %v2752 = vmin.f32 %v2385, %v2670
      %v2753 = vmin.f32 %v2385, %v2672
      %v2754 = vmin.f32 %v2385, %v2674
      %v2755 = vmin.f32 %v2385, %v2676
      %v2756 = vmin.f32 %v2385, %v2678
      %v2757 = vmin.f32 %v2385, %v2680
      %v2758 = vmin.f32 %v2385, %v2682
      %v2759 = vmin.f32 %v2385, %v2684
      %v2760 = vmin.f32 %v2385, %v2686
      %v2761 = vmin.f32 %v2385, %v2688
      %v2762 = vmin.f32 %v2385, %v2690
      %v2763 = vmin.f32 %v2385, %v2692
      %v2764 = vmin.f32 %v2385, %v2694
      %v2765 = vmin.f32 %v2385, %v2696
      %v2766 = vmin.f32 %v2385, %v2698
      %v2767 = vmin.f32 %v2385, %v2700
      %v2768 = vmin.f32 %v2385, %v2702
      %v2769 = vmin.f32 %v2385, %v2704
      %v2770 = vmin.f32 %v2385, %v2706
      %2803 = vrot.lane.b32.xlu0 %v2515, 32
      %v2804 = vpop.permute.xlu0 %2803
      %2805 = vrot.lane.b32.xlu0 %v2516, 32
      %v2806 = vpop.permute.xlu0 %2805
      %2807 = vrot.lane.b32.xlu0 %v2517, 32
      %v2808 = vpop.permute.xlu0 %2807
      %2809 = vrot.lane.b32.xlu0 %v2518, 32
      %v2810 = vpop.permute.xlu0 %2809
      %2811 = vrot.lane.b32.xlu0 %v2519, 32
      %v2812 = vpop.permute.xlu0 %2811
      %2813 = vrot.lane.b32.xlu0 %v2520, 32
      %v2814 = vpop.permute.xlu0 %2813
      %2815 = vrot.lane.b32.xlu0 %v2521, 32
      %v2816 = vpop.permute.xlu0 %2815
      %2817 = vrot.lane.b32.xlu0 %v2522, 32
      %v2818 = vpop.permute.xlu0 %2817
      %2819 = vrot.lane.b32.xlu0 %v2523, 32
      %v2820 = vpop.permute.xlu0 %2819
      %2821 = vrot.lane.b32.xlu0 %v2524, 32
      %v2822 = vpop.permute.xlu0 %2821
      %2823 = vrot.lane.b32.xlu0 %v2525, 32
      %v2824 = vpop.permute.xlu0 %2823
      %2825 = vrot.lane.b32.xlu0 %v2526, 32
      %v2826 = vpop.permute.xlu0 %2825
      %2827 = vrot.lane.b32.xlu0 %v2527, 32
      %v2828 = vpop.permute.xlu0 %2827
      %2829 = vrot.lane.b32.xlu0 %v2528, 32
      %v2830 = vpop.permute.xlu0 %2829
      %2831 = vrot.lane.b32.xlu0 %v2529, 32
      %v2832 = vpop.permute.xlu0 %2831
      %2833 = vrot.lane.b32.xlu0 %v2530, 32
      %v2834 = vpop.permute.xlu0 %2833
      %2835 = vrot.lane.b32.xlu0 %v2531, 32
      %v2836 = vpop.permute.xlu0 %2835
      %2837 = vrot.lane.b32.xlu0 %v2532, 32
      %v2838 = vpop.permute.xlu0 %2837
      %2839 = vrot.lane.b32.xlu0 %v2533, 32
      %v2840 = vpop.permute.xlu0 %2839
      %2841 = vrot.lane.b32.xlu0 %v2534, 32
      %v2842 = vpop.permute.xlu0 %2841
      %2843 = vrot.lane.b32.xlu0 %v2535, 32
      %v2844 = vpop.permute.xlu0 %2843
      %2845 = vrot.lane.b32.xlu0 %v2536, 32
      %v2846 = vpop.permute.xlu0 %2845
      %2847 = vrot.lane.b32.xlu0 %v2537, 32
      %v2848 = vpop.permute.xlu0 %2847
      %2849 = vrot.lane.b32.xlu0 %v2538, 32
      %v2850 = vpop.permute.xlu0 %2849
      %2851 = vrot.lane.b32.xlu0 %v2539, 32
      %v2852 = vpop.permute.xlu0 %2851
      %2853 = vrot.lane.b32.xlu0 %v2540, 32
      %v2854 = vpop.permute.xlu0 %2853
      %2855 = vrot.lane.b32.xlu0 %v2541, 32
      %v2856 = vpop.permute.xlu0 %2855
      %2857 = vrot.lane.b32.xlu0 %v2542, 32
      %v2858 = vpop.permute.xlu0 %2857
      %2859 = vrot.lane.b32.xlu0 %v2543, 32
      %v2860 = vpop.permute.xlu0 %2859
      %2861 = vrot.lane.b32.xlu0 %v2544, 32
      %v2862 = vpop.permute.xlu0 %2861
      %2863 = vrot.lane.b32.xlu0 %v2545, 32
      %v2864 = vpop.permute.xlu0 %2863
      %2865 = vrot.lane.b32.xlu0 %v2546, 32
      %v2866 = vpop.permute.xlu0 %2865
      %2931 = vrot.lane.b32.xlu0 %v2739, 64
      %v2932 = vpop.permute.xlu0 %2931
      %2933 = vrot.lane.b32.xlu0 %v2740, 64
      %v2934 = vpop.permute.xlu0 %2933
      %2935 = vrot.lane.b32.xlu0 %v2741, 64
      %v2936 = vpop.permute.xlu0 %2935
      %2937 = vrot.lane.b32.xlu0 %v2742, 64
      %v2938 = vpop.permute.xlu0 %2937
      %2939 = vrot.lane.b32.xlu0 %v2743, 64
      %v2940 = vpop.permute.xlu0 %2939
      %2941 = vrot.lane.b32.xlu0 %v2744, 64
      %v2942 = vpop.permute.xlu0 %2941
      %2943 = vrot.lane.b32.xlu0 %v2745, 64
      %v2944 = vpop.permute.xlu0 %2943
      %2945 = vrot.lane.b32.xlu0 %v2746, 64
      %v2946 = vpop.permute.xlu0 %2945
      %2947 = vrot.lane.b32.xlu0 %v2747, 64
      %v2948 = vpop.permute.xlu0 %2947
      %2949 = vrot.lane.b32.xlu0 %v2748, 64
      %v2950 = vpop.permute.xlu0 %2949
      %2951 = vrot.lane.b32.xlu0 %v2749, 64
      %v2952 = vpop.permute.xlu0 %2951
      %2953 = vrot.lane.b32.xlu0 %v2750, 64
      %v2954 = vpop.permute.xlu0 %2953
      %2955 = vrot.lane.b32.xlu0 %v2751, 64
      %v2956 = vpop.permute.xlu0 %2955
      %2957 = vrot.lane.b32.xlu0 %v2752, 64
      %v2958 = vpop.permute.xlu0 %2957
      %2959 = vrot.lane.b32.xlu0 %v2753, 64
      %v2960 = vpop.permute.xlu0 %2959
      %2961 = vrot.lane.b32.xlu0 %v2754, 64
      %v2962 = vpop.permute.xlu0 %2961
      %2963 = vrot.lane.b32.xlu0 %v2755, 64
      %v2964 = vpop.permute.xlu0 %2963
      %2965 = vrot.lane.b32.xlu0 %v2756, 64
      %v2966 = vpop.permute.xlu0 %2965
      %2967 = vrot.lane.b32.xlu0 %v2757, 64
      %v2968 = vpop.permute.xlu0 %2967
      %2969 = vrot.lane.b32.xlu0 %v2758, 64
      %v2970 = vpop.permute.xlu0 %2969
      %2971 = vrot.lane.b32.xlu0 %v2759, 64
      %v2972 = vpop.permute.xlu0 %2971
      %2973 = vrot.lane.b32.xlu0 %v2760, 64
      %v2974 = vpop.permute.xlu0 %2973
      %2975 = vrot.lane.b32.xlu0 %v2761, 64
      %v2976 = vpop.permute.xlu0 %2975
      %2977 = vrot.lane.b32.xlu0 %v2762, 64
      %v2978 = vpop.permute.xlu0 %2977
      %2979 = vrot.lane.b32.xlu0 %v2763, 64
      %v2980 = vpop.permute.xlu0 %2979
      %2981 = vrot.lane.b32.xlu0 %v2764, 64
      %v2982 = vpop.permute.xlu0 %2981
      %2983 = vrot.lane.b32.xlu0 %v2765, 64
      %v2984 = vpop.permute.xlu0 %2983
      %2985 = vrot.lane.b32.xlu0 %v2766, 64
      %v2986 = vpop.permute.xlu0 %2985
      %2987 = vrot.lane.b32.xlu0 %v2767, 64
      %v2988 = vpop.permute.xlu0 %2987
      %2989 = vrot.lane.b32.xlu0 %v2768, 64
      %v2990 = vpop.permute.xlu0 %2989
      %2991 = vrot.lane.b32.xlu0 %v2769, 64
      %v2992 = vpop.permute.xlu0 %2991
      %2993 = vrot.lane.b32.xlu0 %v2770, 64
      %v2994 = vpop.permute.xlu0 %2993
      %vm3027 = vcmask 261120
      %v3028 = vsel %vm3027, %v1148, %v2804
      %v3029 = vsel %vm3027, %v1162, %v2806
      %v3030 = vsel %vm3027, %v1176, %v2808
      %v3031 = vsel %vm3027, %v1190, %v2810
      %v3032 = vsel %vm3027, %v1204, %v2812
      %v3033 = vsel %vm3027, %v1218, %v2814
      %v3034 = vsel %vm3027, %v1232, %v2816
      %v3035 = vsel %vm3027, %v1246, %v2818
      %v3036 = vsel %vm3027, %v1260, %v2820
      %v3037 = vsel %vm3027, %v1274, %v2822
      %v3038 = vsel %vm3027, %v1288, %v2824
      %v3039 = vsel %vm3027, %v1302, %v2826
      %v3040 = vsel %vm3027, %v1316, %v2828
      %v3041 = vsel %vm3027, %v1330, %v2830
      %v3042 = vsel %vm3027, %v1344, %v2832
      %v3043 = vsel %vm3027, %v1358, %v2834
      %v3044 = vsel %vm3027, %v1372, %v2836
      %v3045 = vsel %vm3027, %v1386, %v2838
      %v3046 = vsel %vm3027, %v1400, %v2840
      %v3047 = vsel %vm3027, %v1414, %v2842
      %v3048 = vsel %vm3027, %v1428, %v2844
      %v3049 = vsel %vm3027, %v1442, %v2846
      %v3050 = vsel %vm3027, %v1456, %v2848
      %v3051 = vsel %vm3027, %v1470, %v2850
      %v3052 = vsel %vm3027, %v1484, %v2852
      %v3053 = vsel %vm3027, %v1498, %v2854
      %v3054 = vsel %vm3027, %v1512, %v2856
      %v3055 = vsel %vm3027, %v1526, %v2858
      %v3056 = vsel %vm3027, %v1540, %v2860
      %v3057 = vsel %vm3027, %v1554, %v2862
      %v3058 = vsel %vm3027, %v1568, %v2864
      %v3059 = vsel %vm3027, %v1582, %v2866
      %vm3060 = vcmask 523264
      %v3061 = vsel %vm3060, %v3028, %v2932
      %v3062 = vsel %vm3060, %v3029, %v2934
      %v3063 = vsel %vm3060, %v3030, %v2936
      %v3064 = vsel %vm3060, %v3031, %v2938
      %v3065 = vsel %vm3060, %v3032, %v2940
      %v3066 = vsel %vm3060, %v3033, %v2942
      %v3067 = vsel %vm3060, %v3034, %v2944
      %v3068 = vsel %vm3060, %v3035, %v2946
      %v3069 = vsel %vm3060, %v3036, %v2948
      %v3070 = vsel %vm3060, %v3037, %v2950
      %v3071 = vsel %vm3060, %v3038, %v2952
      %v3072 = vsel %vm3060, %v3039, %v2954
      %v3073 = vsel %vm3060, %v3040, %v2956
      %v3074 = vsel %vm3060, %v3041, %v2958
      %v3075 = vsel %vm3060, %v3042, %v2960
      %v3076 = vsel %vm3060, %v3043, %v2962
      %v3077 = vsel %vm3060, %v3044, %v2964
      %v3078 = vsel %vm3060, %v3045, %v2966
      %v3079 = vsel %vm3060, %v3046, %v2968
      %v3080 = vsel %vm3060, %v3047, %v2970
      %v3081 = vsel %vm3060, %v3048, %v2972
      %v3082 = vsel %vm3060, %v3049, %v2974
      %v3083 = vsel %vm3060, %v3050, %v2976
      %v3084 = vsel %vm3060, %v3051, %v2978
      %v3085 = vsel %vm3060, %v3052, %v2980
      %v3086 = vsel %vm3060, %v3053, %v2982
      %v3087 = vsel %vm3060, %v3054, %v2984
      %v3088 = vsel %vm3060, %v3055, %v2986
      %v3089 = vsel %vm3060, %v3056, %v2988
      %v3090 = vsel %vm3060, %v3057, %v2990
      %v3091 = vsel %vm3060, %v3058, %v2992
      %v3092 = vsel %vm3060, %v3059, %v2994
      %vm3093 = vcmask 785408
      %v3094 = vsel %vm3093, %v3061, 0.0
      %v3095 = vsel %vm3093, %v3062, 0.0
      %v3096 = vsel %vm3093, %v3063, 0.0
      %v3097 = vsel %vm3093, %v3064, 0.0
      %v3098 = vsel %vm3093, %v3065, 0.0
      %v3099 = vsel %vm3093, %v3066, 0.0
      %v3100 = vsel %vm3093, %v3067, 0.0
      %v3101 = vsel %vm3093, %v3068, 0.0
      %v3102 = vsel %vm3093, %v3069, 0.0
      %v3103 = vsel %vm3093, %v3070, 0.0
      %v3104 = vsel %vm3093, %v3071, 0.0
      %v3105 = vsel %vm3093, %v3072, 0.0
      %v3106 = vsel %vm3093, %v3073, 0.0
      %v3107 = vsel %vm3093, %v3074, 0.0
      %v3108 = vsel %vm3093, %v3075, 0.0
      %v3109 = vsel %vm3093, %v3076, 0.0
      %v3110 = vsel %vm3093, %v3077, 0.0
      %v3111 = vsel %vm3093, %v3078, 0.0
      %v3112 = vsel %vm3093, %v3079, 0.0
      %v3113 = vsel %vm3093, %v3080, 0.0
      %v3114 = vsel %vm3093, %v3081, 0.0
      %v3115 = vsel %vm3093, %v3082, 0.0
      %v3116 = vsel %vm3093, %v3083, 0.0
      %v3117 = vsel %vm3093, %v3084, 0.0
      %v3118 = vsel %vm3093, %v3085, 0.0
      %v3119 = vsel %vm3093, %v3086, 0.0
      %v3120 = vsel %vm3093, %v3087, 0.0
      %v3121 = vsel %vm3093, %v3088, 0.0
      %v3122 = vsel %vm3093, %v3089, 0.0
      %v3123 = vsel %vm3093, %v3090, 0.0
      %v3124 = vsel %vm3093, %v3091, 0.0
      %v3125 = vsel %vm3093, %v3092, 0.0
      %3126 = vst [vmem:[%s387] sm:$0xff] %v3094
      %3127 = vst [vmem:[%s387 + $0x8] sm:$0xff] %v3095
      %3128 = vst [vmem:[%s387 + $0x10] sm:$0xff] %v3096
      %3129 = vst [vmem:[%s387 + $0x18] sm:$0xff] %v3097
      %3130 = vst [vmem:[%s387 + $0x20] sm:$0xff] %v3098
      %3131 = vst [vmem:[%s387 + $0x28] sm:$0xff] %v3099
      %3132 = vst [vmem:[%s387 + $0x30] sm:$0xff] %v3100
      %3133 = vst [vmem:[%s387 + $0x38] sm:$0xff] %v3101
      %3134 = vst [vmem:[%s387 + $0x40] sm:$0xff] %v3102
      %3135 = vst [vmem:[%s387 + $0x48] sm:$0xff] %v3103
      %3136 = vst [vmem:[%s387 + $0x50] sm:$0xff] %v3104
      %3137 = vst [vmem:[%s387 + $0x58] sm:$0xff] %v3105
      %3138 = vst [vmem:[%s387 + $0x60] sm:$0xff] %v3106
      %3139 = vst [vmem:[%s387 + $0x68] sm:$0xff] %v3107
      %3140 = vst [vmem:[%s387 + $0x70] sm:$0xff] %v3108
      %3141 = vst [vmem:[%s387 + $0x78] sm:$0xff] %v3109
      %3142 = vst [vmem:[%s387 + $0x80] sm:$0xff] %v3110
      %3143 = vst [vmem:[%s387 + $0x88] sm:$0xff] %v3111
      %3144 = vst [vmem:[%s387 + $0x90] sm:$0xff] %v3112
      %3145 = vst [vmem:[%s387 + $0x98] sm:$0xff] %v3113
      %3146 = vst [vmem:[%s387 + $0xa0] sm:$0xff] %v3114
      %3147 = vst [vmem:[%s387 + $0xa8] sm:$0xff] %v3115
      %3148 = vst [vmem:[%s387 + $0xb0] sm:$0xff] %v3116
      %3149 = vst [vmem:[%s387 + $0xb8] sm:$0xff] %v3117
      %3150 = vst [vmem:[%s387 + $0xc0] sm:$0xff] %v3118
      %3151 = vst [vmem:[%s387 + $0xc8] sm:$0xff] %v3119
      %3152 = vst [vmem:[%s387 + $0xd0] sm:$0xff] %v3120
      %3153 = vst [vmem:[%s387 + $0xd8] sm:$0xff] %v3121
      %3154 = vst [vmem:[%s387 + $0xe0] sm:$0xff] %v3122
      %3155 = vst [vmem:[%s387 + $0xe8] sm:$0xff] %v3123
      %3156 = vst [vmem:[%s387 + $0xf0] sm:$0xff] %v3124
      %3157 = vst [vmem:[%s387 + $0xf8] sm:$0xff] %v3125
      %s3158 = smul.u32 32, %s23
      %p3159 = scmp.lt.s32.totalorder %s24, 1
      %s3160 = scalar_select %p3159, %s24, 1
      %p3161 = scmp.lt.s32.totalorder %s3158, 31
      %s3162 = scalar_select %p3161, %s3158, 31
      %s3163 = smul.addr %s3160, 32
      %s3164 = sadd.s32 %s3162, %s3163
      %s3165 = smul.addr %s3164, 8
      %s3166 = scalar_lea.vmem %s8, %s3165
      // Predicated region
      $region53: #{_rpn_forward_impl.1} parent=51 // pred_check
        %p3167 = pneg %p236
      $region54: #{_rpn_forward_impl.1} parent=51 // pred_check_branch
        %3169 = sbr.rel (%p3167) target = $region56
      $region55: #{_rpn_forward_impl.1} parent=51 // pred_region
        %s3170 = smul.u32 32, %s23
      $region56: #{_rpn_forward_impl.1} parent=51 // pred_fallthru
        _
    $region52: #{_rpn_forward_impl.1} parent=5 // pred_fallthru
      _
    %p3171 = scmp.le.s32.totalorder 2, %s14
    // Predicated region
    $region57: #{_rpn_forward_impl.1} parent=5 // pred_check
      %p3172 = pneg %p3171
    $region58: #{_rpn_forward_impl.1} parent=5 // pred_check_branch
      %3174 = sbr.rel (%p3172) target = $region60
    $region59: #{_rpn_forward_impl.1} parent=5 // pred_region
      %s3175 = ssub.s32 %s14, 2
      // Predicated region
      $region61: #{_rpn_forward_impl.1} parent=59 // pred_check
        %p3176 = pneg %p242
      $region62: #{_rpn_forward_impl.1} parent=59 // pred_check_branch
        %3178 = sbr.rel (%p3176) target = $region64
      $region63: #{_rpn_forward_impl.1} parent=59 // pred_region
        %s3179 = smul.u32 32, %s25
        %p3180 = scmp.lt.s32.totalorder %s26, 1
        %s3181 = scalar_select %p3180, %s26, 1
        %p3182 = scmp.lt.s32.totalorder %s3179, 31
        %s3183 = scalar_select %p3182, %s3179, 31
        %s3184 = smul.addr %s3181, 32
        %s3185 = sadd.s32 %s3183, %s3184
        %s3186 = smul.addr %s3185, 8
        %s3187 = scalar_lea.vmem %s8, %s3186
      $region64: #{_rpn_forward_impl.1} parent=59 // pred_fallthru
        _
    $region60: #{_rpn_forward_impl.1} parent=5 // pred_fallthru
      _
  $region6: #{_rpn_forward_impl.1} parent=0 // loop_footer
    %s18 = sadd.s32 1, %s14
  $region7: #{_rpn_forward_impl.1} parent=0 // loop_footer_branch
    %13 = sbr.rel target = $region3
  $region8: #{_rpn_forward_impl.1} parent=0 // loop_exit
    _

// kernel: _rpn_forward_impl.1
$region0: #{_rpn_forward_impl.1}
  #allocation0 [shape = 'u32[]', space=smem, size = 0x4, offset = 0x4, fixed_abs, tag = 'smem constant byte address 0x4 - core index']
  #allocation1 [shape = 'u32[72,128]{1,0:T(1,128)}', space=vmem, size = 0x9000, scoped, tag = 'internal scratch']
  %s0 = inlined_call_operand.vmem [shape: bf16[2,256,128], index: 0, kind: input, shape index: {}]
  %s1 = inlined_call_operand.vmem [shape: bf16[128,128], index: 1, kind: input, shape index: {}]
  %s2 = inlined_call_operand.vmem [shape: f32[1,128], index: 2, kind: input, shape index: {}]
  %s3 = inlined_call_operand.vmem [shape: bf16[128,128], index: 3, kind: input, shape index: {}]
  %s4 = inlined_call_operand.vmem [shape: f32[1,128], index: 4, kind: input, shape index: {}]
  %s5 = inlined_call_operand.vmem [shape: f32[256,32], index: 5, kind: input, shape index: {}]
  %s6 = inlined_call_operand.vmem [shape: f32[256,32], index: 6, kind: input, shape index: {}]
  %s7 = inlined_call_operand.vmem [shape: f32[1,32], index: 7, kind: input, shape index: {}]
  %s8 = inlined_call_operand.vmem [shape: f32[2,256,128], index: 8, kind: output, shape index: {}]
  %s9 = sld [smem:[#allocation0]]
  $region65: #{_rpn_forward_impl.1} parent=0
    _
  %s11 = ssub.s32 1, %s9
  %s12 = scalar_select 0, %s11, %s9
  loop: start=0, step=1, limit=4
  $region2: #{_rpn_forward_impl.1} parent=0 // loop_pre_header
    _
  $region3: #{_rpn_forward_impl.1} parent=0 // loop_header
    %s14 = sphi 0, %s18
    %p15 = scmp.ge.s32.totalorder %s14, 4
    %s21 = sphi 0, %s33
    %s22 = sphi 0, %s29
    %s23 = sphi 0, %s21
    %s24 = sphi 0, %s22
    %s25 = sphi 0, %s23
    %s26 = sphi 0, %s24
    %s38 = sphi 0, %s40
    %s41 = sphi 0, %s38
    %s42 = sphi 0, %s41
    %s58 = sphi 0, %s42
    %s62 = sphi 0, %s62
    %s64 = sphi 0, %s62
    %s65 = sphi 0, %s64
    %s79 = sphi 0, %s65
    %s83 = sphi 0, %s83
    %s85 = sphi 0, %s83
    %s86 = sphi 0, %s85
    %s100 = sphi 0, %s86
    %s104 = sphi 0, %s104
    %s106 = sphi 0, %s104
    %s107 = sphi 0, %s106
    %s121 = sphi 0, %s107
    %s125 = sphi 0, %s125
    %s127 = sphi 0, %s125
    %s128 = sphi 0, %s127
    %s142 = sphi 0, %s128
    %s148 = sphi 0, %s150
    %s151 = sphi 0, %s148
    %s152 = sphi 0, %s151
    %s168 = sphi 0, %s152
    %s174 = sphi 0, %s176
    %s177 = sphi 0, %s174
    %s178 = sphi 0, %s177
    %s194 = sphi 0, %s178
    %s198 = sphi 0, %s198
    %s200 = sphi 0, %s198
    %s201 = sphi 0, %s200
    %s215 = sphi 0, %s201
    %s223 = sphi 0, %s225
    %s226 = sphi 0, %s223
    %s227 = sphi 0, %s226
    %s243 = sphi 0, %s227
  $region4: #{_rpn_forward_impl.1} parent=0 // loop_header_branch
    %17 = sbr.rel (%p15) target = $region8
  $region5: #{_rpn_forward_impl.1} parent=0 // loop_body
    %s19 = ssub.s32 %s14, 1
    %s20 = ssub.s32 %s14, 2
    %s27 = sadd.s32 1, %s22
    %p28 = scmp.ge.s32.totalorder %s27, 2
    %s29 = scalar_select %p28, 0, %s27
    %s30 = sadd.s32 1, %s21
    %s31 = scalar_select %p28, %s30, %s21
    %p32 = scmp.ge.s32.totalorder %s31, 1
    %s33 = scalar_select %p32, 0, %s31
    %s34 = ssub.s32 %s22, %s29
    %s35 = ssub.s32 %s21, %s33
    %s36 = sor.u32 %s34, %s35
    %p37 = scmp.eq.s32.totalorder %s36, 0
    %s39 = sadd.s32 %s38, 1
    %s40 = scalar_select %p37, %s38, %s39
    %p43 = pneg %p37
    %p44 = scmp.eq.s32.totalorder %s14, 1
    %p45 = por %p43, %p44
    %p46 = scmp.ne.s32.totalorder %s38, %s41
    %p47 = scmp.eq.s32.totalorder %s14, 0
    %p48 = por %p46, %p47
    %p49 = scmp.ne.s32.totalorder %s38, %s41
    %p50 = scmp.eq.s32.totalorder %s19, 1
    %p51 = por %p49, %p50
    %p52 = scmp.ne.s32.totalorder %s41, %s42
    %p53 = scmp.eq.s32.totalorder %s19, 0
    %p54 = por %p52, %p53
    %p55 = scmp.ne.s32.totalorder %s41, %s42
    %p56 = scmp.eq.s32.totalorder %s20, 1
    %p57 = por %p55, %p56
    %p59 = scmp.ne.s32.totalorder %s42, %s58
    %p60 = scmp.eq.s32.totalorder %s20, 0
    %p61 = por %p59, %p60
    %s63 = sadd.s32 %s62, 1
    %p66 = scmp.eq.s32.totalorder %s14, 1
    %p67 = scmp.ne.s32.totalorder %s62, %s64
    %p68 = scmp.eq.s32.totalorder %s14, 0
    %p69 = por %p67, %p68
    %p70 = scmp.ne.s32.totalorder %s62, %s64
    %p71 = scmp.eq.s32.totalorder %s19, 1
    %p72 = por %p70, %p71
    %p73 = scmp.ne.s32.totalorder %s64, %s65
    %p74 = scmp.eq.s32.totalorder %s19, 0
    %p75 = por %p73, %p74
    %p76 = scmp.ne.s32.totalorder %s64, %s65
    %p77 = scmp.eq.s32.totalorder %s20, 1
    %p78 = por %p76, %p77
    %p80 = scmp.ne.s32.totalorder %s65, %s79
    %p81 = scmp.eq.s32.totalorder %s20, 0
    %p82 = por %p80, %p81
    %s84 = sadd.s32 %s83, 1
    %p87 = scmp.eq.s32.totalorder %s14, 1
    %p88 = scmp.ne.s32.totalorder %s83, %s85
    %p89 = scmp.eq.s32.totalorder %s14, 0
    %p90 = por %p88, %p89
    %p91 = scmp.ne.s32.totalorder %s83, %s85
    %p92 = scmp.eq.s32.totalorder %s19, 1
    %p93 = por %p91, %p92
    %p94 = scmp.ne.s32.totalorder %s85, %s86
    %p95 = scmp.eq.s32.totalorder %s19, 0
    %p96 = por %p94, %p95
    %p97 = scmp.ne.s32.totalorder %s85, %s86
    %p98 = scmp.eq.s32.totalorder %s20, 1
    %p99 = por %p97, %p98
    %p101 = scmp.ne.s32.totalorder %s86, %s100
    %p102 = scmp.eq.s32.totalorder %s20, 0
    %p103 = por %p101, %p102
    %s105 = sadd.s32 %s104, 1
    %p108 = scmp.eq.s32.totalorder %s14, 1
    %p109 = scmp.ne.s32.totalorder %s104, %s106
    %p110 = scmp.eq.s32.totalorder %s14, 0
    %p111 = por %p109, %p110
    %p112 = scmp.ne.s32.totalorder %s104, %s106
    %p113 = scmp.eq.s32.totalorder %s19, 1
    %p114 = por %p112, %p113
    %p115 = scmp.ne.s32.totalorder %s106, %s107
    %p116 = scmp.eq.s32.totalorder %s19, 0
    %p117 = por %p115, %p116
    %p118 = scmp.ne.s32.totalorder %s106, %s107
    %p119 = scmp.eq.s32.totalorder %s20, 1
    %p120 = por %p118, %p119
    %p122 = scmp.ne.s32.totalorder %s107, %s121
    %p123 = scmp.eq.s32.totalorder %s20, 0
    %p124 = por %p122, %p123
    %s126 = sadd.s32 %s125, 1
    %p129 = scmp.eq.s32.totalorder %s14, 1
    %p130 = scmp.ne.s32.totalorder %s125, %s127
    %p131 = scmp.eq.s32.totalorder %s14, 0
    %p132 = por %p130, %p131
    %p133 = scmp.ne.s32.totalorder %s125, %s127
    %p134 = scmp.eq.s32.totalorder %s19, 1
    %p135 = por %p133, %p134
    %p136 = scmp.ne.s32.totalorder %s127, %s128
    %p137 = scmp.eq.s32.totalorder %s19, 0
    %p138 = por %p136, %p137
    %p139 = scmp.ne.s32.totalorder %s127, %s128
    %p140 = scmp.eq.s32.totalorder %s20, 1
    %p141 = por %p139, %p140
    %p143 = scmp.ne.s32.totalorder %s128, %s142
    %p144 = scmp.eq.s32.totalorder %s20, 0
    %p145 = por %p143, %p144
    %s146 = ssub.s32 %s21, %s33
    %p147 = scmp.eq.s32.totalorder %s146, 0
    %s149 = sadd.s32 %s148, 1
    %s150 = scalar_select %p147, %s148, %s149
    %p153 = pneg %p147
    %p154 = scmp.eq.s32.totalorder %s14, 1
    %p155 = por %p153, %p154
    %p156 = scmp.ne.s32.totalorder %s148, %s151
    %p157 = scmp.eq.s32.totalorder %s14, 0
    %p158 = por %p156, %p157
    %p159 = scmp.ne.s32.totalorder %s148, %s151
    %p160 = scmp.eq.s32.totalorder %s19, 1
    %p161 = por %p159, %p160
    %p162 = scmp.ne.s32.totalorder %s151, %s152
    %p163 = scmp.eq.s32.totalorder %s19, 0
    %p164 = por %p162, %p163
    %p165 = scmp.ne.s32.totalorder %s151, %s152
    %p166 = scmp.eq.s32.totalorder %s20, 1
    %p167 = por %p165, %p166
    %p169 = scmp.ne.s32.totalorder %s152, %s168
    %p170 = scmp.eq.s32.totalorder %s20, 0
    %p171 = por %p169, %p170
    %s172 = ssub.s32 %s21, %s33
    %p173 = scmp.eq.s32.totalorder %s172, 0
    %s175 = sadd.s32 %s174, 1
    %s176 = scalar_select %p173, %s174, %s175
    %p179 = pneg %p173
    %p180 = scmp.eq.s32.totalorder %s14, 1
    %p181 = por %p179, %p180
    %p182 = scmp.ne.s32.totalorder %s174, %s177
    %p183 = scmp.eq.s32.totalorder %s14, 0
    %p184 = por %p182, %p183
    %p185 = scmp.ne.s32.totalorder %s174, %s177
    %p186 = scmp.eq.s32.totalorder %s19, 1
    %p187 = por %p185, %p186
    %p188 = scmp.ne.s32.totalorder %s177, %s178
    %p189 = scmp.eq.s32.totalorder %s19, 0
    %p190 = por %p188, %p189
    %p191 = scmp.ne.s32.totalorder %s177, %s178
    %p192 = scmp.eq.s32.totalorder %s20, 1
    %p193 = por %p191, %p192
    %p195 = scmp.ne.s32.totalorder %s178, %s194
    %p196 = scmp.eq.s32.totalorder %s20, 0
    %p197 = por %p195, %p196
    %s199 = sadd.s32 %s198, 1
    %p202 = scmp.eq.s32.totalorder %s14, 1
    %p203 = scmp.ne.s32.totalorder %s198, %s200
    %p204 = scmp.eq.s32.totalorder %s14, 0
    %p205 = por %p203, %p204
    %p206 = scmp.ne.s32.totalorder %s198, %s200
    %p207 = scmp.eq.s32.totalorder %s19, 1
    %p208 = por %p206, %p207
    %p209 = scmp.ne.s32.totalorder %s200, %s201
    %p210 = scmp.eq.s32.totalorder %s19, 0
    %p211 = por %p209, %p210
    %p212 = scmp.ne.s32.totalorder %s200, %s201
    %p213 = scmp.eq.s32.totalorder %s20, 1
    %p214 = por %p212, %p213
    %p216 = scmp.ne.s32.totalorder %s201, %s215
    %p217 = scmp.eq.s32.totalorder %s20, 0
    %p218 = por %p216, %p217
    %s219 = ssub.s32 %s22, %s29
    %s220 = ssub.s32 %s21, %s33
    %s221 = sor.u32 %s219, %s220
    %p222 = scmp.eq.s32.totalorder %s221, 0
    %s224 = sadd.s32 %s223, 1
    %s225 = scalar_select %p222, %s223, %s224
    %p228 = pneg %p222
    %p229 = scmp.eq.s32.totalorder %s14, 1
    %p230 = por %p228, %p229
    %p231 = scmp.ne.s32.totalorder %s223, %s226
    %p232 = scmp.eq.s32.totalorder %s14, 0
    %p233 = por %p231, %p232
    %p234 = scmp.ne.s32.totalorder %s223, %s226
    %p235 = scmp.eq.s32.totalorder %s19, 1
    %p236 = por %p234, %p235
    %p237 = scmp.ne.s32.totalorder %s226, %s227
    %p238 = scmp.eq.s32.totalorder %s19, 0
    %p239 = por %p237, %p238
    %p240 = scmp.ne.s32.totalorder %s226, %s227
    %p241 = scmp.eq.s32.totalorder %s20, 1
    %p242 = por %p240, %p241
    %p244 = scmp.ne.s32.totalorder %s227, %s243
    %p245 = scmp.eq.s32.totalorder %s20, 0
    %p246 = por %p244, %p245
    %p247 = scmp.le.s32.totalorder 1, %s14
    %p248 = scmp.lt.s32.totalorder %s14, 3
    %p249 = pnand %p247, %p248
    %p250 = pneg %p249
    // Predicated region
    $region9: #{_rpn_forward_impl.1} parent=5 // pred_check
      _
    $region10: #{_rpn_forward_impl.1} parent=5 // pred_check_branch
      %252 = sbr.rel (%p249) target = $region12
    $region11: #{_rpn_forward_impl.1} parent=5 // pred_region
      %s253 = ssub.s32 %s14, 1
      // Predicated region
      $region13: #{_rpn_forward_impl.1} parent=11 // pred_check
        %p254 = pneg %p75
      $region14: #{_rpn_forward_impl.1} parent=11 // pred_check_branch
        %256 = sbr.rel (%p254) target = $region16
      $region15: #{_rpn_forward_impl.1} parent=11 // pred_region
        _
      $region16: #{_rpn_forward_impl.1} parent=11 // pred_fallthru
        _
      // Predicated region
      $region17: #{_rpn_forward_impl.1} parent=11 // pred_check
        %p257 = pneg %p96
      $region18: #{_rpn_forward_impl.1} parent=11 // pred_check_branch
        %259 = sbr.rel (%p257) target = $region20
      $region19: #{_rpn_forward_impl.1} parent=11 // pred_region
        _
      $region20: #{_rpn_forward_impl.1} parent=11 // pred_fallthru
        _
      // Predicated region
      $region21: #{_rpn_forward_impl.1} parent=11 // pred_check
        %p260 = pneg %p117
      $region22: #{_rpn_forward_impl.1} parent=11 // pred_check_branch
        %262 = sbr.rel (%p260) target = $region24
      $region23: #{_rpn_forward_impl.1} parent=11 // pred_region
        _
      $region24: #{_rpn_forward_impl.1} parent=11 // pred_fallthru
        _
      // Predicated region
      $region25: #{_rpn_forward_impl.1} parent=11 // pred_check
        %p263 = pneg %p138
      $region26: #{_rpn_forward_impl.1} parent=11 // pred_check_branch
        %265 = sbr.rel (%p263) target = $region28
      $region27: #{_rpn_forward_impl.1} parent=11 // pred_region
        _
      $region28: #{_rpn_forward_impl.1} parent=11 // pred_fallthru
        _
      // Predicated region
      $region29: #{_rpn_forward_impl.1} parent=11 // pred_check
        %p266 = pneg %p164
      $region30: #{_rpn_forward_impl.1} parent=11 // pred_check_branch
        %268 = sbr.rel (%p266) target = $region32
      $region31: #{_rpn_forward_impl.1} parent=11 // pred_region
        %s269 = smul.u32 32, %s23
        %p270 = scmp.lt.s32.totalorder %s269, 31
        %s271 = scalar_select %p270, %s269, 31
        %s272 = smul.addr %s271, 8
        %s273 = scalar_lea.vmem %s5, %s272
        %s274 = smul.u32 32, %s23
      $region32: #{_rpn_forward_impl.1} parent=11 // pred_fallthru
        _
      // Predicated region
      $region33: #{_rpn_forward_impl.1} parent=11 // pred_check
        %p275 = pneg %p190
      $region34: #{_rpn_forward_impl.1} parent=11 // pred_check_branch
        %277 = sbr.rel (%p275) target = $region36
      $region35: #{_rpn_forward_impl.1} parent=11 // pred_region
        %s278 = smul.u32 32, %s23
        %p279 = scmp.lt.s32.totalorder %s278, 31
        %s280 = scalar_select %p279, %s278, 31
        %s281 = smul.addr %s280, 8
        %s282 = scalar_lea.vmem %s6, %s281
        %s283 = smul.u32 32, %s23
      $region36: #{_rpn_forward_impl.1} parent=11 // pred_fallthru
        _
      // Predicated region
      $region37: #{_rpn_forward_impl.1} parent=11 // pred_check
        %p284 = pneg %p211
      $region38: #{_rpn_forward_impl.1} parent=11 // pred_check_branch
        %286 = sbr.rel (%p284) target = $region40
      $region39: #{_rpn_forward_impl.1} parent=11 // pred_region
        _
      $region40: #{_rpn_forward_impl.1} parent=11 // pred_fallthru
        _
    $region12: #{_rpn_forward_impl.1} parent=5 // pred_fallthru
      _
    %p287 = scmp.lt.s32.totalorder %s14, 2
    // Predicated region
    $region41: #{_rpn_forward_impl.1} parent=5 // pred_check
      %p288 = pneg %p287
    $region42: #{_rpn_forward_impl.1} parent=5 // pred_check_branch
      %290 = sbr.rel (%p288) target = $region44
    $region43: #{_rpn_forward_impl.1} parent=5 // pred_region
      // Predicated region
      $region45: #{_rpn_forward_impl.1} parent=43 // pred_check
        %p291 = pneg %p48
      $region46: #{_rpn_forward_impl.1} parent=43 // pred_check_branch
        %293 = sbr.rel (%p291) target = $region48
      $region47: #{_rpn_forward_impl.1} parent=43 // pred_region
        %s294 = smul.u32 32, %s21
        %p295 = scmp.lt.s32.totalorder %s22, 1
        %s296 = scalar_select %p295, %s22, 1
        %p297 = scmp.lt.s32.totalorder %s294, 31
        %s298 = scalar_select %p297, %s294, 31
        %s299 = smul.addr %s296, 32
        %s300 = sadd.s32 %s298, %s299
        %s301 = smul.addr %s300, 4
        %s302 = scalar_lea.vmem %s0, %s301
        %s303 = smul.u32 32, %s21
      $region48: #{_rpn_forward_impl.1} parent=43 // pred_fallthru
        _
    $region44: #{_rpn_forward_impl.1} parent=5 // pred_fallthru
      _
    %p304 = scmp.le.s32.totalorder 1, %s14
    %p305 = scmp.lt.s32.totalorder %s14, 3
    %p306 = pnand %p304, %p305
    %p307 = pneg %p306
    // Predicated region
    $region49: #{_rpn_forward_impl.1} parent=5 // pred_check
      _
    $region50: #{_rpn_forward_impl.1} parent=5 // pred_check_branch
      %309 = sbr.rel (%p306) target = $region52
    $region51: #{_rpn_forward_impl.1} parent=5 // pred_region
      %s310 = ssub.s32 %s14, 1
      %s311 = smul.u32 32, %s23
      %p312 = scmp.lt.s32.totalorder %s24, 1
      %s313 = scalar_select %p312, %s24, 1
      %p314 = scmp.lt.s32.totalorder %s311, 31
      %s315 = scalar_select %p314, %s311, 31
      %s316 = smul.addr %s313, 32
      %s317 = sadd.s32 %s315, %s316
      %s318 = smul.addr %s317, 4
      %s319 = scalar_lea.vmem %s0, %s318
      %p320 = pneg %p54
      %p321 = pneg %p51
      %p322 = pneg %p75
      %p323 = pneg %p72
      %p324 = pneg %p96
      %p325 = pneg %p93
      %p326 = pneg %p117
      %p327 = pneg %p114
      %p328 = pneg %p138
      %p329 = pneg %p135
      %s330 = smul.u32 32, %s23
      %p331 = scmp.lt.s32.totalorder %s330, 31
      %s332 = scalar_select %p331, %s330, 31
      %s333 = smul.addr %s332, 8
      %s334 = scalar_lea.vmem %s5, %s333
      %p335 = pneg %p164
      %p336 = pneg %p161
      %s337 = smul.u32 32, %s23
      %p338 = scmp.lt.s32.totalorder %s337, 31
      %s339 = scalar_select %p338, %s337, 31
      %s340 = smul.addr %s339, 8
      %s341 = scalar_lea.vmem %s6, %s340
      %p342 = pneg %p190
      %p343 = pneg %p187
      %p344 = pneg %p211
      %p345 = pneg %p208
      %p346 = pneg %p239
      %p347 = pneg %p236
      %s348 = smul.u32 32, %s23
      %p349 = scmp.lt.s32.totalorder %s24, 1
      %s350 = scalar_select %p349, %s24, 1
      %p351 = scmp.lt.s32.totalorder %s348, 31
      %s352 = scalar_select %p351, %s348, 31
      %s353 = smul.addr %s350, 32
      %s354 = sadd.s32 %s352, %s353
      %s355 = smul.addr %s354, 8
      %s356 = scalar_lea.vmem %s8, %s355
      %s357 = smul.u32 32, %s23
      %p358 = scmp.lt.s32.totalorder %s24, 1
      %s359 = scalar_select %p358, %s24, 1
      %p360 = scmp.lt.s32.totalorder %s357, 31
      %s361 = scalar_select %p360, %s357, 31
      %s362 = smul.addr %s359, 32
      %s363 = sadd.s32 %s361, %s362
      %s364 = smul.addr %s363, 4
      %s365 = scalar_lea.vmem %s0, %s364
      %s366 = smul.u32 32, %s23
      %s367 = smul.u32 32, %s23
      %p368 = scmp.lt.s32.totalorder %s367, 31
      %s369 = scalar_select %p368, %s367, 31
      %s370 = smul.addr %s369, 8
      %s371 = scalar_lea.vmem %s5, %s370
      %s372 = smul.u32 32, %s23
      %s373 = smul.u32 32, %s23
      %p374 = scmp.lt.s32.totalorder %s373, 31
      %s375 = scalar_select %p374, %s373, 31
      %s376 = smul.addr %s375, 8
      %s377 = scalar_lea.vmem %s6, %s376
      %s378 = smul.u32 32, %s23
      %s379 = smul.u32 32, %s23
      %p380 = scmp.lt.s32.totalorder %s24, 1
      %s381 = scalar_select %p380, %s24, 1
      %p382 = scmp.lt.s32.totalorder %s379, 31
      %s383 = scalar_select %p382, %s379, 31
      %s384 = smul.addr %s381, 32
      %s385 = sadd.s32 %s383, %s384
      %s386 = smul.addr %s385, 8
      %s387 = scalar_lea.vmem %s8, %s386
      %s388 = smul.u32 32, %s23
      %v389 = vld [vmem:[%s365] sm:$0xf]
      %v390 = vld [vmem:[%s365 + $0x4] sm:$0xf]
      %v391 = vld [vmem:[%s365 + $0x8] sm:$0xf]
      %v392 = vld [vmem:[%s365 + $0xc] sm:$0xf]
      %v393 = vld [vmem:[%s365 + $0x10] sm:$0xf]
      %v394 = vld [vmem:[%s365 + $0x14] sm:$0xf]
      %v395 = vld [vmem:[%s365 + $0x18] sm:$0xf]
      %v396 = vld [vmem:[%s365 + $0x1c] sm:$0xf]
      %v397 = vld [vmem:[%s365 + $0x20] sm:$0xf]
      %v398 = vld [vmem:[%s365 + $0x24] sm:$0xf]
      %v399 = vld [vmem:[%s365 + $0x28] sm:$0xf]
      %v400 = vld [vmem:[%s365 + $0x2c] sm:$0xf]
      %v401 = vld [vmem:[%s365 + $0x30] sm:$0xf]
      %v402 = vld [vmem:[%s365 + $0x34] sm:$0xf]
      %v403 = vld [vmem:[%s365 + $0x38] sm:$0xf]
      %v404 = vld [vmem:[%s365 + $0x3c] sm:$0xf]
      %v405 = vld [vmem:[%s365 + $0x40] sm:$0xf]
      %v406 = vld [vmem:[%s365 + $0x44] sm:$0xf]
      %v407 = vld [vmem:[%s365 + $0x48] sm:$0xf]
      %v408 = vld [vmem:[%s365 + $0x4c] sm:$0xf]
      %v409 = vld [vmem:[%s365 + $0x50] sm:$0xf]
      %v410 = vld [vmem:[%s365 + $0x54] sm:$0xf]
      %v411 = vld [vmem:[%s365 + $0x58] sm:$0xf]
      %v412 = vld [vmem:[%s365 + $0x5c] sm:$0xf]
      %v413 = vld [vmem:[%s365 + $0x60] sm:$0xf]
      %v414 = vld [vmem:[%s365 + $0x64] sm:$0xf]
      %v415 = vld [vmem:[%s365 + $0x68] sm:$0xf]
      %v416 = vld [vmem:[%s365 + $0x6c] sm:$0xf]
      %v417 = vld [vmem:[%s365 + $0x70] sm:$0xf]
      %v418 = vld [vmem:[%s365 + $0x74] sm:$0xf]
      %v419 = vld [vmem:[%s365 + $0x78] sm:$0xf]
      %v420 = vld [vmem:[%s365 + $0x7c] sm:$0xf]
      %v421 = vld [vmem:[%s1] sm:$0xf]
      %v422 = vld [vmem:[%s1 + $0x4] sm:$0xf]
      %v423 = vld [vmem:[%s1 + $0x8] sm:$0xf]
      %v424 = vld [vmem:[%s1 + $0xc] sm:$0xf]
      %v425 = vld [vmem:[%s1 + $0x10] sm:$0xf]
      %v426 = vld [vmem:[%s1 + $0x14] sm:$0xf]
      %v427 = vld [vmem:[%s1 + $0x18] sm:$0xf]
      %v428 = vld [vmem:[%s1 + $0x1c] sm:$0xf]
      %v429 = vld [vmem:[%s1 + $0x20] sm:$0xf]
      %v430 = vld [vmem:[%s1 + $0x24] sm:$0xf]
      %v431 = vld [vmem:[%s1 + $0x28] sm:$0xf]
      %v432 = vld [vmem:[%s1 + $0x2c] sm:$0xf]
      %v433 = vld [vmem:[%s1 + $0x30] sm:$0xf]
      %v434 = vld [vmem:[%s1 + $0x34] sm:$0xf]
      %v435 = vld [vmem:[%s1 + $0x38] sm:$0xf]
      %v436 = vld [vmem:[%s1 + $0x3c] sm:$0xf]
      %v437 = vld [vmem:[%s2] sm:$0x1]
      %v439 = vperm.slane %v437, 0
      %v473 = vunpack.c.l.b16 %v389
      %v474 = vunpack.c.l.b16 %v390
      %v475 = vunpack.c.l.b16 %v391
      %v476 = vunpack.c.l.b16 %v392
      %v477 = vunpack.c.l.b16 %v393
      %v478 = vunpack.c.l.b16 %v394
      %v479 = vunpack.c.l.b16 %v395
      %v480 = vunpack.c.l.b16 %v396
      %v481 = vunpack.c.l.b16 %v397
      %v482 = vunpack.c.l.b16 %v398
      %v483 = vunpack.c.l.b16 %v399
      %v484 = vunpack.c.l.b16 %v400
      %v485 = vunpack.c.l.b16 %v401
      %v486 = vunpack.c.l.b16 %v402
      %v487 = vunpack.c.l.b16 %v403
      %v488 = vunpack.c.l.b16 %v404
      %v489 = vunpack.c.l.b16 %v405
      %v490 = vunpack.c.l.b16 %v406
      %v491 = vunpack.c.l.b16 %v407
      %v492 = vunpack.c.l.b16 %v408
      %v493 = vunpack.c.l.b16 %v409
      %v494 = vunpack.c.l.b16 %v410
      %v495 = vunpack.c.l.b16 %v411
      %v496 = vunpack.c.l.b16 %v412
      %v497 = vunpack.c.l.b16 %v413
      %v498 = vunpack.c.l.b16 %v414
      %v499 = vunpack.c.l.b16 %v415
      %v500 = vunpack.c.l.b16 %v416
      %v501 = vunpack.c.l.b16 %v417
      %v502 = vunpack.c.l.b16 %v418
      %v503 = vunpack.c.l.b16 %v419
      %v504 = vunpack.c.l.b16 %v420
      %v505 = vpack.c.b16 %v474, %v473
      %v506 = vpack.c.b16 %v476, %v475
      %v507 = vpack.c.b16 %v478, %v477
      %v508 = vpack.c.b16 %v480, %v479
      %v509 = vpack.c.b16 %v482, %v481
      %v510 = vpack.c.b16 %v484, %v483
      %v511 = vpack.c.b16 %v486, %v485
      %v512 = vpack.c.b16 %v488, %v487
      %v513 = vpack.c.b16 %v490, %v489
      %v514 = vpack.c.b16 %v492, %v491
      %v515 = vpack.c.b16 %v494, %v493
      %v516 = vpack.c.b16 %v496, %v495
      %v517 = vpack.c.b16 %v498, %v497
      %v518 = vpack.c.b16 %v500, %v499
      %v519 = vpack.c.b16 %v502, %v501
      %v520 = vpack.c.b16 %v504, %v503
      %v553 = vunpack.c.l.b16 %v421
      %v554 = vunpack.c.l.b16 %v422
      %v555 = vunpack.c.l.b16 %v423
      %v556 = vunpack.c.l.b16 %v424
      %v557 = vunpack.c.l.b16 %v425
      %v558 = vunpack.c.l.b16 %v426
      %v559 = vunpack.c.l.b16 %v427
      %v560 = vunpack.c.l.b16 %v428
      %v561 = vunpack.c.l.b16 %v429
      %v562 = vunpack.c.l.b16 %v430
      %v563 = vunpack.c.l.b16 %v431
      %v564 = vunpack.c.l.b16 %v432
      %v565 = vunpack.c.l.b16 %v433
      %v566 = vunpack.c.l.b16 %v434
      %v567 = vunpack.c.l.b16 %v435
      %v568 = vunpack.c.l.b16 %v436
      %v569 = vpack.c.b16 %v554, %v553
      %v570 = vpack.c.b16 %v556, %v555
      %v571 = vpack.c.b16 %v558, %v557
      %v572 = vpack.c.b16 %v560, %v559
      %v573 = vpack.c.b16 %v562, %v561
      %v574 = vpack.c.b16 %v564, %v563
      %v575 = vpack.c.b16 %v566, %v565
      %v576 = vpack.c.b16 %v568, %v567
      %585 = vmatpush.bf16.msra.mxu0 %v576
      %586 = vmatpush.bf16.msra.mxu0 %v575
      %587 = vmatpush.bf16.msra.mxu0 %v574
      %588 = vmatpush.bf16.msra.mxu0 %v573
      %589 = vmatpush.bf16.msra.mxu0 %v572
      %590 = vmatpush.bf16.msra.mxu0 %v571
      %591 = vmatpush.bf16.msra.mxu0 %v570
      %592 = vmatpush.bf16.msra.mxu0 %v569
      %593 = vmatmul.bf16.gmra.mxu0 %v505
      %v594 = vpop.f32.mrf.mxu0
      %v595 = vadd.f32 %v439, %v594
      %v596 = vpop.f32.mrf.mxu0
      %v597 = vadd.f32 %v439, %v596
      %598 = vmatmul.bf16.gmra.mxu0 %v506
      %v599 = vpop.f32.mrf.mxu0
      %v600 = vadd.f32 %v439, %v599
      %v601 = vpop.f32.mrf.mxu0
      %v602 = vadd.f32 %v439, %v601
      %603 = vmatmul.bf16.gmra.mxu0 %v507
      %v604 = vpop.f32.mrf.mxu0
      %v605 = vadd.f32 %v439, %v604
      %v606 = vpop.f32.mrf.mxu0
      %v607 = vadd.f32 %v439, %v606
      %608 = vmatmul.bf16.gmra.mxu0 %v508
      %v609 = vpop.f32.mrf.mxu0
      %v610 = vadd.f32 %v439, %v609
      %v611 = vpop.f32.mrf.mxu0
      %v612 = vadd.f32 %v439, %v611
      %613 = vmatmul.bf16.gmra.mxu0 %v509
      %v614 = vpop.f32.mrf.mxu0
      %v615 = vadd.f32 %v439, %v614
      %v616 = vpop.f32.mrf.mxu0
      %v617 = vadd.f32 %v439, %v616
      %618 = vmatmul.bf16.gmra.mxu0 %v510
      %v619 = vpop.f32.mrf.mxu0
      %v620 = vadd.f32 %v439, %v619
      %v621 = vpop.f32.mrf.mxu0
      %v622 = vadd.f32 %v439, %v621
      %623 = vmatmul.bf16.gmra.mxu0 %v511
      %v624 = vpop.f32.mrf.mxu0
      %v625 = vadd.f32 %v439, %v624
      %v626 = vpop.f32.mrf.mxu0
      %v627 = vadd.f32 %v439, %v626
      %628 = vmatmul.bf16.gmra.mxu0 %v512
      %v629 = vpop.f32.mrf.mxu0
      %v630 = vadd.f32 %v439, %v629
      %v631 = vpop.f32.mrf.mxu0
      %v632 = vadd.f32 %v439, %v631
      %633 = vmatmul.bf16.gmra.mxu0 %v513
      %v634 = vpop.f32.mrf.mxu0
      %v635 = vadd.f32 %v439, %v634
      %v636 = vpop.f32.mrf.mxu0
      %v637 = vadd.f32 %v439, %v636
      %638 = vmatmul.bf16.gmra.mxu0 %v514
      %v639 = vpop.f32.mrf.mxu0
      %v640 = vadd.f32 %v439, %v639
      %v641 = vpop.f32.mrf.mxu0
      %v642 = vadd.f32 %v439, %v641
      %643 = vmatmul.bf16.gmra.mxu0 %v515
      %v644 = vpop.f32.mrf.mxu0
      %v645 = vadd.f32 %v439, %v644
      %v646 = vpop.f32.mrf.mxu0
      %v647 = vadd.f32 %v439, %v646
      %648 = vmatmul.bf16.gmra.mxu0 %v516
      %v649 = vpop.f32.mrf.mxu0
      %v650 = vadd.f32 %v439, %v649
      %v651 = vpop.f32.mrf.mxu0
      %v652 = vadd.f32 %v439, %v651
      %653 = vmatmul.bf16.gmra.mxu0 %v517
      %v654 = vpop.f32.mrf.mxu0
      %v655 = vadd.f32 %v439, %v654
      %v656 = vpop.f32.mrf.mxu0
      %v657 = vadd.f32 %v439, %v656
      %658 = vmatmul.bf16.gmra.mxu0 %v518
      %v659 = vpop.f32.mrf.mxu0
      %v660 = vadd.f32 %v439, %v659
      %v661 = vpop.f32.mrf.mxu0
      %v662 = vadd.f32 %v439, %v661
      %663 = vmatmul.bf16.gmra.mxu0 %v519
      %v664 = vpop.f32.mrf.mxu0
      %v665 = vadd.f32 %v439, %v664
      %v666 = vpop.f32.mrf.mxu0
      %v667 = vadd.f32 %v439, %v666
      %668 = vmatmul.bf16.gmra.mxu0 %v520
      %v669 = vpop.f32.mrf.mxu0
      %v670 = vadd.f32 %v439, %v669
      %v671 = vpop.f32.mrf.mxu0
      %v672 = vadd.f32 %v439, %v671
      %673 = vdwg.mxu0
      %v674 = vmax.f32 %v595, 0.0
      %v675 = vmax.f32 %v597, 0.0
      %v676 = vmax.f32 %v600, 0.0
      %v677 = vmax.f32 %v602, 0.0
      %v678 = vmax.f32 %v605, 0.0
      %v679 = vmax.f32 %v607, 0.0
      %v680 = vmax.f32 %v610, 0.0
      %v681 = vmax.f32 %v612, 0.0
      %v682 = vmax.f32 %v615, 0.0
      %v683 = vmax.f32 %v617, 0.0
      %v684 = vmax.f32 %v620, 0.0
      %v685 = vmax.f32 %v622, 0.0
      %v686 = vmax.f32 %v625, 0.0
      %v687 = vmax.f32 %v627, 0.0
      %v688 = vmax.f32 %v630, 0.0
      %v689 = vmax.f32 %v632, 0.0
      %v690 = vmax.f32 %v635, 0.0
      %v691 = vmax.f32 %v637, 0.0
      %v692 = vmax.f32 %v640, 0.0
      %v693 = vmax.f32 %v642, 0.0
      %v694 = vmax.f32 %v645, 0.0
      %v695 = vmax.f32 %v647, 0.0
      %v696 = vmax.f32 %v650, 0.0
      %v697 = vmax.f32 %v652, 0.0
      %v698 = vmax.f32 %v655, 0.0
      %v699 = vmax.f32 %v657, 0.0
      %v700 = vmax.f32 %v660, 0.0
      %v701 = vmax.f32 %v662, 0.0
      %v702 = vmax.f32 %v665, 0.0
      %v703 = vmax.f32 %v667, 0.0
      %v704 = vmax.f32 %v670, 0.0
      %v705 = vmax.f32 %v672, 0.0
      %v706 = vpack.c.bf16 %v675, %v674
      %v707 = vpack.c.bf16 %v677, %v676
      %v708 = vpack.c.bf16 %v679, %v678
      %v709 = vpack.c.bf16 %v681, %v680
      %v710 = vpack.c.bf16 %v683, %v682
      %v711 = vpack.c.bf16 %v685, %v684
      %v712 = vpack.c.bf16 %v687, %v686
      %v713 = vpack.c.bf16 %v689, %v688
      %v714 = vpack.c.bf16 %v691, %v690
      %v715 = vpack.c.bf16 %v693, %v692
      %v716 = vpack.c.bf16 %v695, %v694
      %v717 = vpack.c.bf16 %v697, %v696
      %v718 = vpack.c.bf16 %v699, %v698
      %v719 = vpack.c.bf16 %v701, %v700
      %v720 = vpack.c.bf16 %v703, %v702
      %v721 = vpack.c.bf16 %v705, %v704
      %v722 = vld [vmem:[%s3] sm:$0xf]
      %v723 = vld [vmem:[%s3 + $0x4] sm:$0xf]
      %v724 = vld [vmem:[%s3 + $0x8] sm:$0xf]
      %v725 = vld [vmem:[%s3 + $0xc] sm:$0xf]
      %v726 = vld [vmem:[%s3 + $0x10] sm:$0xf]
      %v727 = vld [vmem:[%s3 + $0x14] sm:$0xf]
      %v728 = vld [vmem:[%s3 + $0x18] sm:$0xf]
      %v729 = vld [vmem:[%s3 + $0x1c] sm:$0xf]
      %v730 = vld [vmem:[%s3 + $0x20] sm:$0xf]
      %v731 = vld [vmem:[%s3 + $0x24] sm:$0xf]
      %v732 = vld [vmem:[%s3 + $0x28] sm:$0xf]
      %v733 = vld [vmem:[%s3 + $0x2c] sm:$0xf]
      %v734 = vld [vmem:[%s3 + $0x30] sm:$0xf]
      %v735 = vld [vmem:[%s3 + $0x34] sm:$0xf]
      %v736 = vld [vmem:[%s3 + $0x38] sm:$0xf]
      %v737 = vld [vmem:[%s3 + $0x3c] sm:$0xf]
      %v738 = vld [vmem:[%s4] sm:$0x1]
      %v740 = vperm.slane %v738, 0
      %v758 = vunpack.c.l.b16 %v722
      %v759 = vunpack.c.l.b16 %v723
      %v760 = vunpack.c.l.b16 %v724
      %v761 = vunpack.c.l.b16 %v725
      %v762 = vunpack.c.l.b16 %v726
      %v763 = vunpack.c.l.b16 %v727
      %v764 = vunpack.c.l.b16 %v728
      %v765 = vunpack.c.l.b16 %v729
      %v766 = vunpack.c.l.b16 %v730
      %v767 = vunpack.c.l.b16 %v731
      %v768 = vunpack.c.l.b16 %v732
      %v769 = vunpack.c.l.b16 %v733
      %v770 = vunpack.c.l.b16 %v734
      %v771 = vunpack.c.l.b16 %v735
      %v772 = vunpack.c.l.b16 %v736
      %v773 = vunpack.c.l.b16 %v737
      %v774 = vpack.c.b16 %v759, %v758
      %v775 = vpack.c.b16 %v761, %v760
      %v776 = vpack.c.b16 %v763, %v762
      %v777 = vpack.c.b16 %v765, %v764
      %v778 = vpack.c.b16 %v767, %v766
      %v779 = vpack.c.b16 %v769, %v768
      %v780 = vpack.c.b16 %v771, %v770
      %v781 = vpack.c.b16 %v773, %v772
      %790 = vmatpush.bf16.msra.mxu0 %v781
      %791 = vmatpush.bf16.msra.mxu0 %v780
      %792 = vmatpush.bf16.msra.mxu0 %v779
      %793 = vmatpush.bf16.msra.mxu0 %v778
      %794 = vmatpush.bf16.msra.mxu0 %v777
      %795 = vmatpush.bf16.msra.mxu0 %v776
      %796 = vmatpush.bf16.msra.mxu0 %v775
      %797 = vmatpush.bf16.msra.mxu0 %v774
      %798 = vmatmul.bf16.gmra.mxu0 %v706
      %v799 = vpop.f32.mrf.mxu0
      %v800 = vadd.f32 %v740, %v799
      %v801 = vpop.f32.mrf.mxu0
      %v802 = vadd.f32 %v740, %v801
      %803 = vmatmul.bf16.gmra.mxu0 %v707
      %v804 = vpop.f32.mrf.mxu0
      %v805 = vadd.f32 %v740, %v804
      %v806 = vpop.f32.mrf.mxu0
      %v807 = vadd.f32 %v740, %v806
      %808 = vmatmul.bf16.gmra.mxu0 %v708
      %v809 = vpop.f32.mrf.mxu0
      %v810 = vadd.f32 %v740, %v809
      %v811 = vpop.f32.mrf.mxu0
      %v812 = vadd.f32 %v740, %v811
      %813 = vmatmul.bf16.gmra.mxu0 %v709
      %v814 = vpop.f32.mrf.mxu0
      %v815 = vadd.f32 %v740, %v814
      %v816 = vpop.f32.mrf.mxu0
      %v817 = vadd.f32 %v740, %v816
      %818 = vmatmul.bf16.gmra.mxu0 %v710
      %v819 = vpop.f32.mrf.mxu0
      %v820 = vadd.f32 %v740, %v819
      %v821 = vpop.f32.mrf.mxu0
      %v822 = vadd.f32 %v740, %v821
      %823 = vmatmul.bf16.gmra.mxu0 %v711
      %v824 = vpop.f32.mrf.mxu0
      %v825 = vadd.f32 %v740, %v824
      %v826 = vpop.f32.mrf.mxu0
      %v827 = vadd.f32 %v740, %v826
      %828 = vmatmul.bf16.gmra.mxu0 %v712
      %v829 = vpop.f32.mrf.mxu0
      %v830 = vadd.f32 %v740, %v829
      %v831 = vpop.f32.mrf.mxu0
      %v832 = vadd.f32 %v740, %v831
      %833 = vmatmul.bf16.gmra.mxu0 %v713
      %v834 = vpop.f32.mrf.mxu0
      %v835 = vadd.f32 %v740, %v834
      %v836 = vpop.f32.mrf.mxu0
      %v837 = vadd.f32 %v740, %v836
      %838 = vmatmul.bf16.gmra.mxu0 %v714
      %v839 = vpop.f32.mrf.mxu0
      %v840 = vadd.f32 %v740, %v839
      %v841 = vpop.f32.mrf.mxu0
      %v842 = vadd.f32 %v740, %v841
      %843 = vmatmul.bf16.gmra.mxu0 %v715
      %v844 = vpop.f32.mrf.mxu0
      %v845 = vadd.f32 %v740, %v844
      %v846 = vpop.f32.mrf.mxu0
      %v847 = vadd.f32 %v740, %v846
      %848 = vmatmul.bf16.gmra.mxu0 %v716
      %v849 = vpop.f32.mrf.mxu0
      %v850 = vadd.f32 %v740, %v849
      %v851 = vpop.f32.mrf.mxu0
      %v852 = vadd.f32 %v740, %v851
      %853 = vmatmul.bf16.gmra.mxu0 %v717
      %v854 = vpop.f32.mrf.mxu0
      %v855 = vadd.f32 %v740, %v854
      %v856 = vpop.f32.mrf.mxu0
      %v857 = vadd.f32 %v740, %v856
      %858 = vmatmul.bf16.gmra.mxu0 %v718
      %v859 = vpop.f32.mrf.mxu0
      %v860 = vadd.f32 %v740, %v859
      %v861 = vpop.f32.mrf.mxu0
      %v862 = vadd.f32 %v740, %v861
      %863 = vmatmul.bf16.gmra.mxu0 %v719
      %v864 = vpop.f32.mrf.mxu0
      %v865 = vadd.f32 %v740, %v864
      %v866 = vpop.f32.mrf.mxu0
      %v867 = vadd.f32 %v740, %v866
      %868 = vmatmul.bf16.gmra.mxu0 %v720
      %v869 = vpop.f32.mrf.mxu0
      %v870 = vadd.f32 %v740, %v869
      %v871 = vpop.f32.mrf.mxu0
      %v872 = vadd.f32 %v740, %v871
      %873 = vmatmul.bf16.gmra.mxu0 %v721
      %v874 = vpop.f32.mrf.mxu0
      %v875 = vadd.f32 %v740, %v874
      %v876 = vpop.f32.mrf.mxu0
      %v877 = vadd.f32 %v740, %v876
      %878 = vdwg.mxu0
      %911 = vrot.lane.b32.xlu0 %v800, 96
      %v912 = vpop.permute.xlu0 %911
      %913 = vrot.lane.b32.xlu0 %v802, 96
      %v914 = vpop.permute.xlu0 %913
      %915 = vrot.lane.b32.xlu0 %v805, 96
      %v916 = vpop.permute.xlu0 %915
      %917 = vrot.lane.b32.xlu0 %v807, 96
      %v918 = vpop.permute.xlu0 %917
      %919 = vrot.lane.b32.xlu0 %v810, 96
      %v920 = vpop.permute.xlu0 %919
      %921 = vrot.lane.b32.xlu0 %v812, 96
      %v922 = vpop.permute.xlu0 %921
      %923 = vrot.lane.b32.xlu0 %v815, 96
      %v924 = vpop.permute.xlu0 %923
      %925 = vrot.lane.b32.xlu0 %v817, 96
      %v926 = vpop.permute.xlu0 %925
      %927 = vrot.lane.b32.xlu0 %v820, 96
      %v928 = vpop.permute.xlu0 %927
      %929 = vrot.lane.b32.xlu0 %v822, 96
      %v930 = vpop.permute.xlu0 %929
      %931 = vrot.lane.b32.xlu0 %v825, 96
      %v932 = vpop.permute.xlu0 %931
      %933 = vrot.lane.b32.xlu0 %v827, 96
      %v934 = vpop.permute.xlu0 %933
      %935 = vrot.lane.b32.xlu0 %v830, 96
      %v936 = vpop.permute.xlu0 %935
      %937 = vrot.lane.b32.xlu0 %v832, 96
      %v938 = vpop.permute.xlu0 %937
      %939 = vrot.lane.b32.xlu0 %v835, 96
      %v940 = vpop.permute.xlu0 %939
      %941 = vrot.lane.b32.xlu0 %v837, 96
      %v942 = vpop.permute.xlu0 %941
      %943 = vrot.lane.b32.xlu0 %v840, 96
      %v944 = vpop.permute.xlu0 %943
      %945 = vrot.lane.b32.xlu0 %v842, 96
      %v946 = vpop.permute.xlu0 %945
      %947 = vrot.lane.b32.xlu0 %v845, 96
      %v948 = vpop.permute.xlu0 %947
      %949 = vrot.lane.b32.xlu0 %v847, 96
      %v950 = vpop.permute.xlu0 %949
      %951 = vrot.lane.b32.xlu0 %v850, 96
      %v952 = vpop.permute.xlu0 %951
      %953 = vrot.lane.b32.xlu0 %v852, 96
      %v954 = vpop.permute.xlu0 %953
      %955 = vrot.lane.b32.xlu0 %v855, 96
      %v956 = vpop.permute.xlu0 %955
      %957 = vrot.lane.b32.xlu0 %v857, 96
      %v958 = vpop.permute.xlu0 %957
      %959 = vrot.lane.b32.xlu0 %v860, 96
      %v960 = vpop.permute.xlu0 %959
      %961 = vrot.lane.b32.xlu0 %v862, 96
      %v962 = vpop.permute.xlu0 %961
      %963 = vrot.lane.b32.xlu0 %v865, 96
      %v964 = vpop.permute.xlu0 %963
      %965 = vrot.lane.b32.xlu0 %v867, 96
      %v966 = vpop.permute.xlu0 %965
      %967 = vrot.lane.b32.xlu0 %v870, 96
      %v968 = vpop.permute.xlu0 %967
      %969 = vrot.lane.b32.xlu0 %v872, 96
      %v970 = vpop.permute.xlu0 %969
      %971 = vrot.lane.b32.xlu0 %v875, 96
      %v972 = vpop.permute.xlu0 %971
      %973 = vrot.lane.b32.xlu0 %v877, 96
      %v974 = vpop.permute.xlu0 %973
      %v1007 = vsub.f32 %v800, %v912
      %v1008 = vsub.f32 %v802, %v914
      %v1009 = vsub.f32 %v805, %v916
      %v1010 = vsub.f32 %v807, %v918
      %v1011 = vsub.f32 %v810, %v920
      %v1012 = vsub.f32 %v812, %v922
      %v1013 = vsub.f32 %v815, %v924
      %v1014 = vsub.f32 %v817, %v926
      %v1015 = vsub.f32 %v820, %v928
      %v1016 = vsub.f32 %v822, %v930
      %v1017 = vsub.f32 %v825, %v932
      %v1018 = vsub.f32 %v827, %v934
      %v1019 = vsub.f32 %v830, %v936
      %v1020 = vsub.f32 %v832, %v938
      %v1021 = vsub.f32 %v835, %v940
      %v1022 = vsub.f32 %v837, %v942
      %v1023 = vsub.f32 %v840, %v944
      %v1024 = vsub.f32 %v842, %v946
      %v1025 = vsub.f32 %v845, %v948
      %v1026 = vsub.f32 %v847, %v950
      %v1027 = vsub.f32 %v850, %v952
      %v1028 = vsub.f32 %v852, %v954
      %v1029 = vsub.f32 %v855, %v956
      %v1030 = vsub.f32 %v857, %v958
      %v1031 = vsub.f32 %v860, %v960
      %v1032 = vsub.f32 %v862, %v962
      %v1033 = vsub.f32 %v865, %v964
      %v1034 = vsub.f32 %v867, %v966
      %v1035 = vsub.f32 %v870, %v968
      %v1036 = vsub.f32 %v872, %v970
      %v1037 = vsub.f32 %v875, %v972
      %v1038 = vsub.f32 %v877, %v974
      %v1039 = vmul.f32 %v1007, 1.442695
      %v1040 = vpow.pop %v1039
      %v1041 = vmul.f32 %v1008, 1.442695
      %v1042 = vpow.pop %v1041
      %v1043 = vmul.f32 %v1009, 1.442695
      %v1044 = vpow.pop %v1043
      %v1045 = vmul.f32 %v1010, 1.442695
      %v1046 = vpow.pop %v1045
      %v1047 = vmul.f32 %v1011, 1.442695
      %v1048 = vpow.pop %v1047
      %v1049 = vmul.f32 %v1012, 1.442695
      %v1050 = vpow.pop %v1049
      %v1051 = vmul.f32 %v1013, 1.442695
      %v1052 = vpow.pop %v1051
      %v1053 = vmul.f32 %v1014, 1.442695
      %v1054 = vpow.pop %v1053
      %v1055 = vmul.f32 %v1015, 1.442695
      %v1056 = vpow.pop %v1055
      %v1057 = vmul.f32 %v1016, 1.442695
      %v1058 = vpow.pop %v1057
      %v1059 = vmul.f32 %v1017, 1.442695
      %v1060 = vpow.pop %v1059
      %v1061 = vmul.f32 %v1018, 1.442695
      %v1062 = vpow.pop %v1061
      %v1063 = vmul.f32 %v1019, 1.442695
      %v1064 = vpow.pop %v1063
      %v1065 = vmul.f32 %v1020, 1.442695
      %v1066 = vpow.pop %v1065
      %v1067 = vmul.f32 %v1021, 1.442695
      %v1068 = vpow.pop %v1067
      %v1069 = vmul.f32 %v1022, 1.442695
      %v1070 = vpow.pop %v1069
      %v1071 = vmul.f32 %v1023, 1.442695
      %v1072 = vpow.pop %v1071
      %v1073 = vmul.f32 %v1024, 1.442695
      %v1074 = vpow.pop %v1073
      %v1075 = vmul.f32 %v1025, 1.442695
      %v1076 = vpow.pop %v1075
      %v1077 = vmul.f32 %v1026, 1.442695
      %v1078 = vpow.pop %v1077
      %v1079 = vmul.f32 %v1027, 1.442695
      %v1080 = vpow.pop %v1079
      %v1081 = vmul.f32 %v1028, 1.442695
      %v1082 = vpow.pop %v1081
      %v1083 = vmul.f32 %v1029, 1.442695
      %v1084 = vpow.pop %v1083
      %v1085 = vmul.f32 %v1030, 1.442695
      %v1086 = vpow.pop %v1085
      %v1087 = vmul.f32 %v1031, 1.442695
      %v1088 = vpow.pop %v1087
      %v1089 = vmul.f32 %v1032, 1.442695
      %v1090 = vpow.pop %v1089
      %v1091 = vmul.f32 %v1033, 1.442695
      %v1092 = vpow.pop %v1091
      %v1093 = vmul.f32 %v1034, 1.442695
      %v1094 = vpow.pop %v1093
      %v1095 = vmul.f32 %v1035, 1.442695
      %v1096 = vpow.pop %v1095
      %v1097 = vmul.f32 %v1036, 1.442695
      %v1098 = vpow.pop %v1097
      %v1099 = vmul.f32 %v1037, 1.442695
      %v1100 = vpow.pop %v1099
      %v1101 = vmul.f32 %v1038, 1.442695
      %v1102 = vpow.pop %v1101
      %v1103 = vadd.f32 %v1040, 1.0
      %v1104 = vadd.f32 %v1042, 1.0
      %v1105 = vadd.f32 %v1044, 1.0
      %v1106 = vadd.f32 %v1046, 1.0
      %v1107 = vadd.f32 %v1048, 1.0
      %v1108 = vadd.f32 %v1050, 1.0
      %v1109 = vadd.f32 %v1052, 1.0
      %v1110 = vadd.f32 %v1054, 1.0
      %v1111 = vadd.f32 %v1056, 1.0
      %v1112 = vadd.f32 %v1058, 1.0
      %v1113 = vadd.f32 %v1060, 1.0
      %v1114 = vadd.f32 %v1062, 1.0
      %v1115 = vadd.f32 %v1064, 1.0
      %v1116 = vadd.f32 %v1066, 1.0
      %v1117 = vadd.f32 %v1068, 1.0
      %v1118 = vadd.f32 %v1070, 1.0
      %v1119 = vadd.f32 %v1072, 1.0
      %v1120 = vadd.f32 %v1074, 1.0
      %v1121 = vadd.f32 %v1076, 1.0
      %v1122 = vadd.f32 %v1078, 1.0
      %v1123 = vadd.f32 %v1080, 1.0
      %v1124 = vadd.f32 %v1082, 1.0
      %v1125 = vadd.f32 %v1084, 1.0
      %v1126 = vadd.f32 %v1086, 1.0
      %v1127 = vadd.f32 %v1088, 1.0
      %v1128 = vadd.f32 %v1090, 1.0
      %v1129 = vadd.f32 %v1092, 1.0
      %v1130 = vadd.f32 %v1094, 1.0
      %v1131 = vadd.f32 %v1096, 1.0
      %v1132 = vadd.f32 %v1098, 1.0
      %v1133 = vadd.f32 %v1100, 1.0
      %v1134 = vadd.f32 %v1102, 1.0
      %v1135 = vrcp.pop %v1103
      %v1136 = vmul.f32 %v1103, %v1135
      %v1137 = vsub.f32 1.0, %v1136
      %v1138 = vmul.f32 %v1135, %v1137
      %v1139 = vadd.f32 %v1135, %v1138
      %vm1140 = vweird.f32 %v1103
      %vm1141 = vweird.f32 %v1135
      %vm1142 = vmor %vm1140, %vm1141
      %v1143 = vsel %vm1142, %v1135, %v1139
      %v1144 = vand.u32 2147483647, %v1103
      %vm1145 = vcmp.eq.f32.partialorder %v1144, 8.507059e+37
      %v1146 = vand.u32 %v1103, 2147483648
      %v1147 = vor.u32 1.1754944e-38, %v1146
      %v1148 = vsel %vm1145, %v1147, %v1143
      %v1149 = vrcp.pop %v1104
      %v1150 = vmul.f32 %v1104, %v1149
      %v1151 = vsub.f32 1.0, %v1150
      %v1152 = vmul.f32 %v1149, %v1151
      %v1153 = vadd.f32 %v1149, %v1152
      %vm1154 = vweird.f32 %v1104
      %vm1155 = vweird.f32 %v1149
      %vm1156 = vmor %vm1154, %vm1155
      %v1157 = vsel %vm1156, %v1149, %v1153
      %v1158 = vand.u32 2147483647, %v1104
      %vm1159 = vcmp.eq.f32.partialorder %v1158, 8.507059e+37
      %v1160 = vand.u32 %v1104, 2147483648
      %v1161 = vor.u32 1.1754944e-38, %v1160
      %v1162 = vsel %vm1159, %v1161, %v1157
      %v1163 = vrcp.pop %v1105
      %v1164 = vmul.f32 %v1105, %v1163
      %v1165 = vsub.f32 1.0, %v1164
      %v1166 = vmul.f32 %v1163, %v1165
      %v1167 = vadd.f32 %v1163, %v1166
      %vm1168 = vweird.f32 %v1105
      %vm1169 = vweird.f32 %v1163
      %vm1170 = vmor %vm1168, %vm1169
      %v1171 = vsel %vm1170, %v1163, %v1167
      %v1172 = vand.u32 2147483647, %v1105
      %vm1173 = vcmp.eq.f32.partialorder %v1172, 8.507059e+37
      %v1174 = vand.u32 %v1105, 2147483648
      %v1175 = vor.u32 1.1754944e-38, %v1174
      %v1176 = vsel %vm1173, %v1175, %v1171
      %v1177 = vrcp.pop %v1106
      %v1178 = vmul.f32 %v1106, %v1177
      %v1179 = vsub.f32 1.0, %v1178
      %v1180 = vmul.f32 %v1177, %v1179
      %v1181 = vadd.f32 %v1177, %v1180
      %vm1182 = vweird.f32 %v1106
      %vm1183 = vweird.f32 %v1177
      %vm1184 = vmor %vm1182, %vm1183
      %v1185 = vsel %vm1184, %v1177, %v1181
      %v1186 = vand.u32 2147483647, %v1106
      %vm1187 = vcmp.eq.f32.partialorder %v1186, 8.507059e+37
      %v1188 = vand.u32 %v1106, 2147483648
      %v1189 = vor.u32 1.1754944e-38, %v1188
      %v1190 = vsel %vm1187, %v1189, %v1185
      %v1191 = vrcp.pop %v1107
      %v1192 = vmul.f32 %v1107, %v1191
      %v1193 = vsub.f32 1.0, %v1192
      %v1194 = vmul.f32 %v1191, %v1193
      %v1195 = vadd.f32 %v1191, %v1194
      %vm1196 = vweird.f32 %v1107
      %vm1197 = vweird.f32 %v1191
      %vm1198 = vmor %vm1196, %vm1197
      %v1199 = vsel %vm1198, %v1191, %v1195
      %v1200 = vand.u32 2147483647, %v1107
      %vm1201 = vcmp.eq.f32.partialorder %v1200, 8.507059e+37
      %v1202 = vand.u32 %v1107, 2147483648
      %v1203 = vor.u32 1.1754944e-38, %v1202
      %v1204 = vsel %vm1201, %v1203, %v1199
      %v1205 = vrcp.pop %v1108
      %v1206 = vmul.f32 %v1108, %v1205
      %v1207 = vsub.f32 1.0, %v1206
      %v1208 = vmul.f32 %v1205, %v1207
      %v1209 = vadd.f32 %v1205, %v1208
      %vm1210 = vweird.f32 %v1108
      %vm1211 = vweird.f32 %v1205
      %vm1212 = vmor %vm1210, %vm1211
      %v1213 = vsel %vm1212, %v1205, %v1209
      %v1214 = vand.u32 2147483647, %v1108
      %vm1215 = vcmp.eq.f32.partialorder %v1214, 8.507059e+37
      %v1216 = vand.u32 %v1108, 2147483648
      %v1217 = vor.u32 1.1754944e-38, %v1216
      %v1218 = vsel %vm1215, %v1217, %v1213
      %v1219 = vrcp.pop %v1109
      %v1220 = vmul.f32 %v1109, %v1219
      %v1221 = vsub.f32 1.0, %v1220
      %v1222 = vmul.f32 %v1219, %v1221
      %v1223 = vadd.f32 %v1219, %v1222
      %vm1224 = vweird.f32 %v1109
      %vm1225 = vweird.f32 %v1219
      %vm1226 = vmor %vm1224, %vm1225
      %v1227 = vsel %vm1226, %v1219, %v1223
      %v1228 = vand.u32 2147483647, %v1109
      %vm1229 = vcmp.eq.f32.partialorder %v1228, 8.507059e+37
      %v1230 = vand.u32 %v1109, 2147483648
      %v1231 = vor.u32 1.1754944e-38, %v1230
      %v1232 = vsel %vm1229, %v1231, %v1227
      %v1233 = vrcp.pop %v1110
      %v1234 = vmul.f32 %v1110, %v1233
      %v1235 = vsub.f32 1.0, %v1234
      %v1236 = vmul.f32 %v1233, %v1235
      %v1237 = vadd.f32 %v1233, %v1236
      %vm1238 = vweird.f32 %v1110
      %vm1239 = vweird.f32 %v1233
      %vm1240 = vmor %vm1238, %vm1239
      %v1241 = vsel %vm1240, %v1233, %v1237
      %v1242 = vand.u32 2147483647, %v1110
      %vm1243 = vcmp.eq.f32.partialorder %v1242, 8.507059e+37
      %v1244 = vand.u32 %v1110, 2147483648
      %v1245 = vor.u32 1.1754944e-38, %v1244
      %v1246 = vsel %vm1243, %v1245, %v1241
      %v1247 = vrcp.pop %v1111
      %v1248 = vmul.f32 %v1111, %v1247
      %v1249 = vsub.f32 1.0, %v1248
      %v1250 = vmul.f32 %v1247, %v1249
      %v1251 = vadd.f32 %v1247, %v1250
      %vm1252 = vweird.f32 %v1111
      %vm1253 = vweird.f32 %v1247
      %vm1254 = vmor %vm1252, %vm1253
      %v1255 = vsel %vm1254, %v1247, %v1251
      %v1256 = vand.u32 2147483647, %v1111
      %vm1257 = vcmp.eq.f32.partialorder %v1256, 8.507059e+37
      %v1258 = vand.u32 %v1111, 2147483648
      %v1259 = vor.u32 1.1754944e-38, %v1258
      %v1260 = vsel %vm1257, %v1259, %v1255
      %v1261 = vrcp.pop %v1112
      %v1262 = vmul.f32 %v1112, %v1261
      %v1263 = vsub.f32 1.0, %v1262
      %v1264 = vmul.f32 %v1261, %v1263
      %v1265 = vadd.f32 %v1261, %v1264
      %vm1266 = vweird.f32 %v1112
      %vm1267 = vweird.f32 %v1261
      %vm1268 = vmor %vm1266, %vm1267
      %v1269 = vsel %vm1268, %v1261, %v1265
      %v1270 = vand.u32 2147483647, %v1112
      %vm1271 = vcmp.eq.f32.partialorder %v1270, 8.507059e+37
      %v1272 = vand.u32 %v1112, 2147483648
      %v1273 = vor.u32 1.1754944e-38, %v1272
      %v1274 = vsel %vm1271, %v1273, %v1269
      %v1275 = vrcp.pop %v1113
      %v1276 = vmul.f32 %v1113, %v1275
      %v1277 = vsub.f32 1.0, %v1276
      %v1278 = vmul.f32 %v1275, %v1277
      %v1279 = vadd.f32 %v1275, %v1278
      %vm1280 = vweird.f32 %v1113
      %vm1281 = vweird.f32 %v1275
      %vm1282 = vmor %vm1280, %vm1281
      %v1283 = vsel %vm1282, %v1275, %v1279
      %v1284 = vand.u32 2147483647, %v1113
      %vm1285 = vcmp.eq.f32.partialorder %v1284, 8.507059e+37
      %v1286 = vand.u32 %v1113, 2147483648
      %v1287 = vor.u32 1.1754944e-38, %v1286
      %v1288 = vsel %vm1285, %v1287, %v1283
      %v1289 = vrcp.pop %v1114
      %v1290 = vmul.f32 %v1114, %v1289
      %v1291 = vsub.f32 1.0, %v1290
      %v1292 = vmul.f32 %v1289, %v1291
      %v1293 = vadd.f32 %v1289, %v1292
      %vm1294 = vweird.f32 %v1114
      %vm1295 = vweird.f32 %v1289
      %vm1296 = vmor %vm1294, %vm1295
      %v1297 = vsel %vm1296, %v1289, %v1293
      %v1298 = vand.u32 2147483647, %v1114
      %vm1299 = vcmp.eq.f32.partialorder %v1298, 8.507059e+37
      %v1300 = vand.u32 %v1114, 2147483648
      %v1301 = vor.u32 1.1754944e-38, %v1300
      %v1302 = vsel %vm1299, %v1301, %v1297
      %v1303 = vrcp.pop %v1115
      %v1304 = vmul.f32 %v1115, %v1303
      %v1305 = vsub.f32 1.0, %v1304
      %v1306 = vmul.f32 %v1303, %v1305
      %v1307 = vadd.f32 %v1303, %v1306
      %vm1308 = vweird.f32 %v1115
      %vm1309 = vweird.f32 %v1303
      %vm1310 = vmor %vm1308, %vm1309
      %v1311 = vsel %vm1310, %v1303, %v1307
      %v1312 = vand.u32 2147483647, %v1115
      %vm1313 = vcmp.eq.f32.partialorder %v1312, 8.507059e+37
      %v1314 = vand.u32 %v1115, 2147483648
      %v1315 = vor.u32 1.1754944e-38, %v1314
      %v1316 = vsel %vm1313, %v1315, %v1311
      %v1317 = vrcp.pop %v1116
      %v1318 = vmul.f32 %v1116, %v1317
      %v1319 = vsub.f32 1.0, %v1318
      %v1320 = vmul.f32 %v1317, %v1319
      %v1321 = vadd.f32 %v1317, %v1320
      %vm1322 = vweird.f32 %v1116
      %vm1323 = vweird.f32 %v1317
      %vm1324 = vmor %vm1322, %vm1323
      %v1325 = vsel %vm1324, %v1317, %v1321
      %v1326 = vand.u32 2147483647, %v1116
      %vm1327 = vcmp.eq.f32.partialorder %v1326, 8.507059e+37
      %v1328 = vand.u32 %v1116, 2147483648
      %v1329 = vor.u32 1.1754944e-38, %v1328
      %v1330 = vsel %vm1327, %v1329, %v1325
      %v1331 = vrcp.pop %v1117
      %v1332 = vmul.f32 %v1117, %v1331
      %v1333 = vsub.f32 1.0, %v1332
      %v1334 = vmul.f32 %v1331, %v1333
      %v1335 = vadd.f32 %v1331, %v1334
      %vm1336 = vweird.f32 %v1117
      %vm1337 = vweird.f32 %v1331
      %vm1338 = vmor %vm1336, %vm1337
      %v1339 = vsel %vm1338, %v1331, %v1335
      %v1340 = vand.u32 2147483647, %v1117
      %vm1341 = vcmp.eq.f32.partialorder %v1340, 8.507059e+37
      %v1342 = vand.u32 %v1117, 2147483648
      %v1343 = vor.u32 1.1754944e-38, %v1342
      %v1344 = vsel %vm1341, %v1343, %v1339
      %v1345 = vrcp.pop %v1118
      %v1346 = vmul.f32 %v1118, %v1345
      %v1347 = vsub.f32 1.0, %v1346
      %v1348 = vmul.f32 %v1345, %v1347
      %v1349 = vadd.f32 %v1345, %v1348
      %vm1350 = vweird.f32 %v1118
      %vm1351 = vweird.f32 %v1345
      %vm1352 = vmor %vm1350, %vm1351
      %v1353 = vsel %vm1352, %v1345, %v1349
      %v1354 = vand.u32 2147483647, %v1118
      %vm1355 = vcmp.eq.f32.partialorder %v1354, 8.507059e+37
      %v1356 = vand.u32 %v1118, 2147483648
      %v1357 = vor.u32 1.1754944e-38, %v1356
      %v1358 = vsel %vm1355, %v1357, %v1353
      %v1359 = vrcp.pop %v1119
      %v1360 = vmul.f32 %v1119, %v1359
      %v1361 = vsub.f32 1.0, %v1360
      %v1362 = vmul.f32 %v1359, %v1361
      %v1363 = vadd.f32 %v1359, %v1362
      %vm1364 = vweird.f32 %v1119
      %vm1365 = vweird.f32 %v1359
      %vm1366 = vmor %vm1364, %vm1365
      %v1367 = vsel %vm1366, %v1359, %v1363
      %v1368 = vand.u32 2147483647, %v1119
      %vm1369 = vcmp.eq.f32.partialorder %v1368, 8.507059e+37
      %v1370 = vand.u32 %v1119, 2147483648
      %v1371 = vor.u32 1.1754944e-38, %v1370
      %v1372 = vsel %vm1369, %v1371, %v1367
      %v1373 = vrcp.pop %v1120
      %v1374 = vmul.f32 %v1120, %v1373
      %v1375 = vsub.f32 1.0, %v1374
      %v1376 = vmul.f32 %v1373, %v1375
      %v1377 = vadd.f32 %v1373, %v1376
      %vm1378 = vweird.f32 %v1120
      %vm1379 = vweird.f32 %v1373
      %vm1380 = vmor %vm1378, %vm1379
      %v1381 = vsel %vm1380, %v1373, %v1377
      %v1382 = vand.u32 2147483647, %v1120
      %vm1383 = vcmp.eq.f32.partialorder %v1382, 8.507059e+37
      %v1384 = vand.u32 %v1120, 2147483648
      %v1385 = vor.u32 1.1754944e-38, %v1384
      %v1386 = vsel %vm1383, %v1385, %v1381
      %v1387 = vrcp.pop %v1121
      %v1388 = vmul.f32 %v1121, %v1387
      %v1389 = vsub.f32 1.0, %v1388
      %v1390 = vmul.f32 %v1387, %v1389
      %v1391 = vadd.f32 %v1387, %v1390
      %vm1392 = vweird.f32 %v1121
      %vm1393 = vweird.f32 %v1387
      %vm1394 = vmor %vm1392, %vm1393
      %v1395 = vsel %vm1394, %v1387, %v1391
      %v1396 = vand.u32 2147483647, %v1121
      %vm1397 = vcmp.eq.f32.partialorder %v1396, 8.507059e+37
      %v1398 = vand.u32 %v1121, 2147483648
      %v1399 = vor.u32 1.1754944e-38, %v1398
      %v1400 = vsel %vm1397, %v1399, %v1395
      %v1401 = vrcp.pop %v1122
      %v1402 = vmul.f32 %v1122, %v1401
      %v1403 = vsub.f32 1.0, %v1402
      %v1404 = vmul.f32 %v1401, %v1403
      %v1405 = vadd.f32 %v1401, %v1404
      %vm1406 = vweird.f32 %v1122
      %vm1407 = vweird.f32 %v1401
      %vm1408 = vmor %vm1406, %vm1407
      %v1409 = vsel %vm1408, %v1401, %v1405
      %v1410 = vand.u32 2147483647, %v1122
      %vm1411 = vcmp.eq.f32.partialorder %v1410, 8.507059e+37
      %v1412 = vand.u32 %v1122, 2147483648
      %v1413 = vor.u32 1.1754944e-38, %v1412
      %v1414 = vsel %vm1411, %v1413, %v1409
      %v1415 = vrcp.pop %v1123
      %v1416 = vmul.f32 %v1123, %v1415
      %v1417 = vsub.f32 1.0, %v1416
      %v1418 = vmul.f32 %v1415, %v1417
      %v1419 = vadd.f32 %v1415, %v1418
      %vm1420 = vweird.f32 %v1123
      %vm1421 = vweird.f32 %v1415
      %vm1422 = vmor %vm1420, %vm1421
      %v1423 = vsel %vm1422, %v1415, %v1419
      %v1424 = vand.u32 2147483647, %v1123
      %vm1425 = vcmp.eq.f32.partialorder %v1424, 8.507059e+37
      %v1426 = vand.u32 %v1123, 2147483648
      %v1427 = vor.u32 1.1754944e-38, %v1426
      %v1428 = vsel %vm1425, %v1427, %v1423
      %v1429 = vrcp.pop %v1124
      %v1430 = vmul.f32 %v1124, %v1429
      %v1431 = vsub.f32 1.0, %v1430
      %v1432 = vmul.f32 %v1429, %v1431
      %v1433 = vadd.f32 %v1429, %v1432
      %vm1434 = vweird.f32 %v1124
      %vm1435 = vweird.f32 %v1429
      %vm1436 = vmor %vm1434, %vm1435
      %v1437 = vsel %vm1436, %v1429, %v1433
      %v1438 = vand.u32 2147483647, %v1124
      %vm1439 = vcmp.eq.f32.partialorder %v1438, 8.507059e+37
      %v1440 = vand.u32 %v1124, 2147483648
      %v1441 = vor.u32 1.1754944e-38, %v1440
      %v1442 = vsel %vm1439, %v1441, %v1437
      %v1443 = vrcp.pop %v1125
      %v1444 = vmul.f32 %v1125, %v1443
      %v1445 = vsub.f32 1.0, %v1444
      %v1446 = vmul.f32 %v1443, %v1445
      %v1447 = vadd.f32 %v1443, %v1446
      %vm1448 = vweird.f32 %v1125
      %vm1449 = vweird.f32 %v1443
      %vm1450 = vmor %vm1448, %vm1449
      %v1451 = vsel %vm1450, %v1443, %v1447
      %v1452 = vand.u32 2147483647, %v1125
      %vm1453 = vcmp.eq.f32.partialorder %v1452, 8.507059e+37
      %v1454 = vand.u32 %v1125, 2147483648
      %v1455 = vor.u32 1.1754944e-38, %v1454
      %v1456 = vsel %vm1453, %v1455, %v1451
      %v1457 = vrcp.pop %v1126
      %v1458 = vmul.f32 %v1126, %v1457
      %v1459 = vsub.f32 1.0, %v1458
      %v1460 = vmul.f32 %v1457, %v1459
      %v1461 = vadd.f32 %v1457, %v1460
      %vm1462 = vweird.f32 %v1126
      %vm1463 = vweird.f32 %v1457
      %vm1464 = vmor %vm1462, %vm1463
      %v1465 = vsel %vm1464, %v1457, %v1461
      %v1466 = vand.u32 2147483647, %v1126
      %vm1467 = vcmp.eq.f32.partialorder %v1466, 8.507059e+37
      %v1468 = vand.u32 %v1126, 2147483648
      %v1469 = vor.u32 1.1754944e-38, %v1468
      %v1470 = vsel %vm1467, %v1469, %v1465
      %v1471 = vrcp.pop %v1127
      %v1472 = vmul.f32 %v1127, %v1471
      %v1473 = vsub.f32 1.0, %v1472
      %v1474 = vmul.f32 %v1471, %v1473
      %v1475 = vadd.f32 %v1471, %v1474
      %vm1476 = vweird.f32 %v1127
      %vm1477 = vweird.f32 %v1471
      %vm1478 = vmor %vm1476, %vm1477
      %v1479 = vsel %vm1478, %v1471, %v1475
      %v1480 = vand.u32 2147483647, %v1127
      %vm1481 = vcmp.eq.f32.partialorder %v1480, 8.507059e+37
      %v1482 = vand.u32 %v1127, 2147483648
      %v1483 = vor.u32 1.1754944e-38, %v1482
      %v1484 = vsel %vm1481, %v1483, %v1479
      %v1485 = vrcp.pop %v1128
      %v1486 = vmul.f32 %v1128, %v1485
      %v1487 = vsub.f32 1.0, %v1486
      %v1488 = vmul.f32 %v1485, %v1487
      %v1489 = vadd.f32 %v1485, %v1488
      %vm1490 = vweird.f32 %v1128
      %vm1491 = vweird.f32 %v1485
      %vm1492 = vmor %vm1490, %vm1491
      %v1493 = vsel %vm1492, %v1485, %v1489
      %v1494 = vand.u32 2147483647, %v1128
      %vm1495 = vcmp.eq.f32.partialorder %v1494, 8.507059e+37
      %v1496 = vand.u32 %v1128, 2147483648
      %v1497 = vor.u32 1.1754944e-38, %v1496
      %v1498 = vsel %vm1495, %v1497, %v1493
      %v1499 = vrcp.pop %v1129
      %v1500 = vmul.f32 %v1129, %v1499
      %v1501 = vsub.f32 1.0, %v1500
      %v1502 = vmul.f32 %v1499, %v1501
      %v1503 = vadd.f32 %v1499, %v1502
      %vm1504 = vweird.f32 %v1129
      %vm1505 = vweird.f32 %v1499
      %vm1506 = vmor %vm1504, %vm1505
      %v1507 = vsel %vm1506, %v1499, %v1503
      %v1508 = vand.u32 2147483647, %v1129
      %vm1509 = vcmp.eq.f32.partialorder %v1508, 8.507059e+37
      %v1510 = vand.u32 %v1129, 2147483648
      %v1511 = vor.u32 1.1754944e-38, %v1510
      %v1512 = vsel %vm1509, %v1511, %v1507
      %v1513 = vrcp.pop %v1130
      %v1514 = vmul.f32 %v1130, %v1513
      %v1515 = vsub.f32 1.0, %v1514
      %v1516 = vmul.f32 %v1513, %v1515
      %v1517 = vadd.f32 %v1513, %v1516
      %vm1518 = vweird.f32 %v1130
      %vm1519 = vweird.f32 %v1513
      %vm1520 = vmor %vm1518, %vm1519
      %v1521 = vsel %vm1520, %v1513, %v1517
      %v1522 = vand.u32 2147483647, %v1130
      %vm1523 = vcmp.eq.f32.partialorder %v1522, 8.507059e+37
      %v1524 = vand.u32 %v1130, 2147483648
      %v1525 = vor.u32 1.1754944e-38, %v1524
      %v1526 = vsel %vm1523, %v1525, %v1521
      %v1527 = vrcp.pop %v1131
      %v1528 = vmul.f32 %v1131, %v1527
      %v1529 = vsub.f32 1.0, %v1528
      %v1530 = vmul.f32 %v1527, %v1529
      %v1531 = vadd.f32 %v1527, %v1530
      %vm1532 = vweird.f32 %v1131
      %vm1533 = vweird.f32 %v1527
      %vm1534 = vmor %vm1532, %vm1533
      %v1535 = vsel %vm1534, %v1527, %v1531
      %v1536 = vand.u32 2147483647, %v1131
      %vm1537 = vcmp.eq.f32.partialorder %v1536, 8.507059e+37
      %v1538 = vand.u32 %v1131, 2147483648
      %v1539 = vor.u32 1.1754944e-38, %v1538
      %v1540 = vsel %vm1537, %v1539, %v1535
      %v1541 = vrcp.pop %v1132
      %v1542 = vmul.f32 %v1132, %v1541
      %v1543 = vsub.f32 1.0, %v1542
      %v1544 = vmul.f32 %v1541, %v1543
      %v1545 = vadd.f32 %v1541, %v1544
      %vm1546 = vweird.f32 %v1132
      %vm1547 = vweird.f32 %v1541
      %vm1548 = vmor %vm1546, %vm1547
      %v1549 = vsel %vm1548, %v1541, %v1545
      %v1550 = vand.u32 2147483647, %v1132
      %vm1551 = vcmp.eq.f32.partialorder %v1550, 8.507059e+37
      %v1552 = vand.u32 %v1132, 2147483648
      %v1553 = vor.u32 1.1754944e-38, %v1552
      %v1554 = vsel %vm1551, %v1553, %v1549
      %v1555 = vrcp.pop %v1133
      %v1556 = vmul.f32 %v1133, %v1555
      %v1557 = vsub.f32 1.0, %v1556
      %v1558 = vmul.f32 %v1555, %v1557
      %v1559 = vadd.f32 %v1555, %v1558
      %vm1560 = vweird.f32 %v1133
      %vm1561 = vweird.f32 %v1555
      %vm1562 = vmor %vm1560, %vm1561
      %v1563 = vsel %vm1562, %v1555, %v1559
      %v1564 = vand.u32 2147483647, %v1133
      %vm1565 = vcmp.eq.f32.partialorder %v1564, 8.507059e+37
      %v1566 = vand.u32 %v1133, 2147483648
      %v1567 = vor.u32 1.1754944e-38, %v1566
      %v1568 = vsel %vm1565, %v1567, %v1563
      %v1569 = vrcp.pop %v1134
      %v1570 = vmul.f32 %v1134, %v1569
      %v1571 = vsub.f32 1.0, %v1570
      %v1572 = vmul.f32 %v1569, %v1571
      %v1573 = vadd.f32 %v1569, %v1572
      %vm1574 = vweird.f32 %v1134
      %vm1575 = vweird.f32 %v1569
      %vm1576 = vmor %vm1574, %vm1575
      %v1577 = vsel %vm1576, %v1569, %v1573
      %v1578 = vand.u32 2147483647, %v1134
      %vm1579 = vcmp.eq.f32.partialorder %v1578, 8.507059e+37
      %v1580 = vand.u32 %v1134, 2147483648
      %v1581 = vor.u32 1.1754944e-38, %v1580
      %v1582 = vsel %vm1579, %v1581, %v1577
      %v1583 = vld [vmem:[%s371] sm:$0xff]
      %v1584 = vld [vmem:[%s371 + $0x8] sm:$0xff]
      %v1585 = vld [vmem:[%s371 + $0x10] sm:$0xff]
      %v1586 = vld [vmem:[%s371 + $0x18] sm:$0xff]
      %v1587 = vld [vmem:[%s371 + $0x20] sm:$0xff]
      %v1588 = vld [vmem:[%s371 + $0x28] sm:$0xff]
      %v1589 = vld [vmem:[%s371 + $0x30] sm:$0xff]
      %v1590 = vld [vmem:[%s371 + $0x38] sm:$0xff]
      %v1591 = vld [vmem:[%s371 + $0x40] sm:$0xff]
      %v1592 = vld [vmem:[%s371 + $0x48] sm:$0xff]
      %v1593 = vld [vmem:[%s371 + $0x50] sm:$0xff]
      %v1594 = vld [vmem:[%s371 + $0x58] sm:$0xff]
      %v1595 = vld [vmem:[%s371 + $0x60] sm:$0xff]
      %v1596 = vld [vmem:[%s371 + $0x68] sm:$0xff]
      %v1597 = vld [vmem:[%s371 + $0x70] sm:$0xff]
      %v1598 = vld [vmem:[%s371 + $0x78] sm:$0xff]
      %v1599 = vld [vmem:[%s371 + $0x80] sm:$0xff]
      %v1600 = vld [vmem:[%s371 + $0x88] sm:$0xff]
      %v1601 = vld [vmem:[%s371 + $0x90] sm:$0xff]
      %v1602 = vld [vmem:[%s371 + $0x98] sm:$0xff]
      %v1603 = vld [vmem:[%s371 + $0xa0] sm:$0xff]
      %v1604 = vld [vmem:[%s371 + $0xa8] sm:$0xff]
      %v1605 = vld [vmem:[%s371 + $0xb0] sm:$0xff]
      %v1606 = vld [vmem:[%s371 + $0xb8] sm:$0xff]
      %v1607 = vld [vmem:[%s371 + $0xc0] sm:$0xff]
      %v1608 = vld [vmem:[%s371 + $0xc8] sm:$0xff]
      %v1609 = vld [vmem:[%s371 + $0xd0] sm:$0xff]
      %v1610 = vld [vmem:[%s371 + $0xd8] sm:$0xff]
      %v1611 = vld [vmem:[%s371 + $0xe0] sm:$0xff]
      %v1612 = vld [vmem:[%s371 + $0xe8] sm:$0xff]
      %v1613 = vld [vmem:[%s371 + $0xf0] sm:$0xff]
      %v1614 = vld [vmem:[%s371 + $0xf8] sm:$0xff]
      %v1615 = vld [vmem:[%s377] sm:$0xff]
      %v1616 = vld [vmem:[%s377 + $0x8] sm:$0xff]
      %v1617 = vld [vmem:[%s377 + $0x10] sm:$0xff]
      %v1618 = vld [vmem:[%s377 + $0x18] sm:$0xff]
      %v1619 = vld [vmem:[%s377 + $0x20] sm:$0xff]
      %v1620 = vld [vmem:[%s377 + $0x28] sm:$0xff]
      %v1621 = vld [vmem:[%s377 + $0x30] sm:$0xff]
      %v1622 = vld [vmem:[%s377 + $0x38] sm:$0xff]
      %v1623 = vld [vmem:[%s377 + $0x40] sm:$0xff]
      %v1624 = vld [vmem:[%s377 + $0x48] sm:$0xff]
      %v1625 = vld [vmem:[%s377 + $0x50] sm:$0xff]
      %v1626 = vld [vmem:[%s377 + $0x58] sm:$0xff]
      %v1627 = vld [vmem:[%s377 + $0x60] sm:$0xff]
      %v1628 = vld [vmem:[%s377 + $0x68] sm:$0xff]
      %v1629 = vld [vmem:[%s377 + $0x70] sm:$0xff]
      %v1630 = vld [vmem:[%s377 + $0x78] sm:$0xff]
      %v1631 = vld [vmem:[%s377 + $0x80] sm:$0xff]
      %v1632 = vld [vmem:[%s377 + $0x88] sm:$0xff]
      %v1633 = vld [vmem:[%s377 + $0x90] sm:$0xff]
      %v1634 = vld [vmem:[%s377 + $0x98] sm:$0xff]
      %v1635 = vld [vmem:[%s377 + $0xa0] sm:$0xff]
      %v1636 = vld [vmem:[%s377 + $0xa8] sm:$0xff]
      %v1637 = vld [vmem:[%s377 + $0xb0] sm:$0xff]
      %v1638 = vld [vmem:[%s377 + $0xb8] sm:$0xff]
      %v1639 = vld [vmem:[%s377 + $0xc0] sm:$0xff]
      %v1640 = vld [vmem:[%s377 + $0xc8] sm:$0xff]
      %v1641 = vld [vmem:[%s377 + $0xd0] sm:$0xff]
      %v1642 = vld [vmem:[%s377 + $0xd8] sm:$0xff]
      %v1643 = vld [vmem:[%s377 + $0xe0] sm:$0xff]
      %v1644 = vld [vmem:[%s377 + $0xe8] sm:$0xff]
      %v1645 = vld [vmem:[%s377 + $0xf0] sm:$0xff]
      %v1646 = vld [vmem:[%s377 + $0xf8] sm:$0xff]
      %v1647 = vld [vmem:[%s7] sm:$0x1]
      %1680 = vrot.lane.b32.xlu0 %v1583, 64
      %v1681 = vpop.permute.xlu0 %1680
      %1682 = vrot.lane.b32.xlu0 %v1584, 64
      %v1683 = vpop.permute.xlu0 %1682
      %1684 = vrot.lane.b32.xlu0 %v1585, 64
      %v1685 = vpop.permute.xlu0 %1684
      %1686 = vrot.lane.b32.xlu0 %v1586, 64
      %v1687 = vpop.permute.xlu0 %1686
      %1688 = vrot.lane.b32.xlu0 %v1587, 64
      %v1689 = vpop.permute.xlu0 %1688
      %1690 = vrot.lane.b32.xlu0 %v1588, 64
      %v1691 = vpop.permute.xlu0 %1690
      %1692 = vrot.lane.b32.xlu0 %v1589, 64
      %v1693 = vpop.permute.xlu0 %1692
      %1694 = vrot.lane.b32.xlu0 %v1590, 64
      %v1695 = vpop.permute.xlu0 %1694
      %1696 = vrot.lane.b32.xlu0 %v1591, 64
      %v1697 = vpop.permute.xlu0 %1696
      %1698 = vrot.lane.b32.xlu0 %v1592, 64
      %v1699 = vpop.permute.xlu0 %1698
      %1700 = vrot.lane.b32.xlu0 %v1593, 64
      %v1701 = vpop.permute.xlu0 %1700
      %1702 = vrot.lane.b32.xlu0 %v1594, 64
      %v1703 = vpop.permute.xlu0 %1702
      %1704 = vrot.lane.b32.xlu0 %v1595, 64
      %v1705 = vpop.permute.xlu0 %1704
      %1706 = vrot.lane.b32.xlu0 %v1596, 64
      %v1707 = vpop.permute.xlu0 %1706
      %1708 = vrot.lane.b32.xlu0 %v1597, 64
      %v1709 = vpop.permute.xlu0 %1708
      %1710 = vrot.lane.b32.xlu0 %v1598, 64
      %v1711 = vpop.permute.xlu0 %1710
      %1712 = vrot.lane.b32.xlu0 %v1599, 64
      %v1713 = vpop.permute.xlu0 %1712
      %1714 = vrot.lane.b32.xlu0 %v1600, 64
      %v1715 = vpop.permute.xlu0 %1714
      %1716 = vrot.lane.b32.xlu0 %v1601, 64
      %v1717 = vpop.permute.xlu0 %1716
      %1718 = vrot.lane.b32.xlu0 %v1602, 64
      %v1719 = vpop.permute.xlu0 %1718
      %1720 = vrot.lane.b32.xlu0 %v1603, 64
      %v1721 = vpop.permute.xlu0 %1720
      %1722 = vrot.lane.b32.xlu0 %v1604, 64
      %v1723 = vpop.permute.xlu0 %1722
      %1724 = vrot.lane.b32.xlu0 %v1605, 64
      %v1725 = vpop.permute.xlu0 %1724
      %1726 = vrot.lane.b32.xlu0 %v1606, 64
      %v1727 = vpop.permute.xlu0 %1726
      %1728 = vrot.lane.b32.xlu0 %v1607, 64
      %v1729 = vpop.permute.xlu0 %1728
      %1730 = vrot.lane.b32.xlu0 %v1608, 64
      %v1731 = vpop.permute.xlu0 %1730
      %1732 = vrot.lane.b32.xlu0 %v1609, 64
      %v1733 = vpop.permute.xlu0 %1732
      %1734 = vrot.lane.b32.xlu0 %v1610, 64
      %v1735 = vpop.permute.xlu0 %1734
      %1736 = vrot.lane.b32.xlu0 %v1611, 64
      %v1737 = vpop.permute.xlu0 %1736
      %1738 = vrot.lane.b32.xlu0 %v1612, 64
      %v1739 = vpop.permute.xlu0 %1738
      %1740 = vrot.lane.b32.xlu0 %v1613, 64
      %v1741 = vpop.permute.xlu0 %1740
      %1742 = vrot.lane.b32.xlu0 %v1614, 64
      %v1743 = vpop.permute.xlu0 %1742
      %v1776 = vmul.f32 %v800, %v1681
      %v1777 = vmul.f32 %v802, %v1683
      %v1778 = vmul.f32 %v805, %v1685
      %v1779 = vmul.f32 %v807, %v1687
      %v1780 = vmul.f32 %v810, %v1689
      %v1781 = vmul.f32 %v812, %v1691
      %v1782 = vmul.f32 %v815, %v1693
      %v1783 = vmul.f32 %v817, %v1695
      %v1784 = vmul.f32 %v820, %v1697
      %v1785 = vmul.f32 %v822, %v1699
      %v1786 = vmul.f32 %v825, %v1701
      %v1787 = vmul.f32 %v827, %v1703
      %v1788 = vmul.f32 %v830, %v1705
      %v1789 = vmul.f32 %v832, %v1707
      %v1790 = vmul.f32 %v835, %v1709
      %v1791 = vmul.f32 %v837, %v1711
      %v1792 = vmul.f32 %v840, %v1713
      %v1793 = vmul.f32 %v842, %v1715
      %v1794 = vmul.f32 %v845, %v1717
      %v1795 = vmul.f32 %v847, %v1719
      %v1796 = vmul.f32 %v850, %v1721
      %v1797 = vmul.f32 %v852, %v1723
      %v1798 = vmul.f32 %v855, %v1725
      %v1799 = vmul.f32 %v857, %v1727
      %v1800 = vmul.f32 %v860, %v1729
      %v1801 = vmul.f32 %v862, %v1731
      %v1802 = vmul.f32 %v865, %v1733
      %v1803 = vmul.f32 %v867, %v1735
      %v1804 = vmul.f32 %v870, %v1737
      %v1805 = vmul.f32 %v872, %v1739
      %v1806 = vmul.f32 %v875, %v1741
      %v1807 = vmul.f32 %v877, %v1743
      %1840 = vrot.lane.b32.xlu0 %v1615, 64
      %v1841 = vpop.permute.xlu0 %1840
      %1842 = vrot.lane.b32.xlu0 %v1616, 64
      %v1843 = vpop.permute.xlu0 %1842
      %1844 = vrot.lane.b32.xlu0 %v1617, 64
      %v1845 = vpop.permute.xlu0 %1844
      %1846 = vrot.lane.b32.xlu0 %v1618, 64
      %v1847 = vpop.permute.xlu0 %1846
      %1848 = vrot.lane.b32.xlu0 %v1619, 64
      %v1849 = vpop.permute.xlu0 %1848
      %1850 = vrot.lane.b32.xlu0 %v1620, 64
      %v1851 = vpop.permute.xlu0 %1850
      %1852 = vrot.lane.b32.xlu0 %v1621, 64
      %v1853 = vpop.permute.xlu0 %1852
      %1854 = vrot.lane.b32.xlu0 %v1622, 64
      %v1855 = vpop.permute.xlu0 %1854
      %1856 = vrot.lane.b32.xlu0 %v1623, 64
      %v1857 = vpop.permute.xlu0 %1856
      %1858 = vrot.lane.b32.xlu0 %v1624, 64
      %v1859 = vpop.permute.xlu0 %1858
      %1860 = vrot.lane.b32.xlu0 %v1625, 64
      %v1861 = vpop.permute.xlu0 %1860
      %1862 = vrot.lane.b32.xlu0 %v1626, 64
      %v1863 = vpop.permute.xlu0 %1862
      %1864 = vrot.lane.b32.xlu0 %v1627, 64
      %v1865 = vpop.permute.xlu0 %1864
      %1866 = vrot.lane.b32.xlu0 %v1628, 64
      %v1867 = vpop.permute.xlu0 %1866
      %1868 = vrot.lane.b32.xlu0 %v1629, 64
      %v1869 = vpop.permute.xlu0 %1868
      %1870 = vrot.lane.b32.xlu0 %v1630, 64
      %v1871 = vpop.permute.xlu0 %1870
      %1872 = vrot.lane.b32.xlu0 %v1631, 64
      %v1873 = vpop.permute.xlu0 %1872
      %1874 = vrot.lane.b32.xlu0 %v1632, 64
      %v1875 = vpop.permute.xlu0 %1874
      %1876 = vrot.lane.b32.xlu0 %v1633, 64
      %v1877 = vpop.permute.xlu0 %1876
      %1878 = vrot.lane.b32.xlu0 %v1634, 64
      %v1879 = vpop.permute.xlu0 %1878
      %1880 = vrot.lane.b32.xlu0 %v1635, 64
      %v1881 = vpop.permute.xlu0 %1880
      %1882 = vrot.lane.b32.xlu0 %v1636, 64
      %v1883 = vpop.permute.xlu0 %1882
      %1884 = vrot.lane.b32.xlu0 %v1637, 64
      %v1885 = vpop.permute.xlu0 %1884
      %1886 = vrot.lane.b32.xlu0 %v1638, 64
      %v1887 = vpop.permute.xlu0 %1886
      %1888 = vrot.lane.b32.xlu0 %v1639, 64
      %v1889 = vpop.permute.xlu0 %1888
      %1890 = vrot.lane.b32.xlu0 %v1640, 64
      %v1891 = vpop.permute.xlu0 %1890
      %1892 = vrot.lane.b32.xlu0 %v1641, 64
      %v1893 = vpop.permute.xlu0 %1892
      %1894 = vrot.lane.b32.xlu0 %v1642, 64
      %v1895 = vpop.permute.xlu0 %1894
      %1896 = vrot.lane.b32.xlu0 %v1643, 64
      %v1897 = vpop.permute.xlu0 %1896
      %1898 = vrot.lane.b32.xlu0 %v1644, 64
      %v1899 = vpop.permute.xlu0 %1898
      %1900 = vrot.lane.b32.xlu0 %v1645, 64
      %v1901 = vpop.permute.xlu0 %1900
      %1902 = vrot.lane.b32.xlu0 %v1646, 64
      %v1903 = vpop.permute.xlu0 %1902
      %v1936 = vadd.f32 %v1776, %v1841
      %v1937 = vadd.f32 %v1777, %v1843
      %v1938 = vadd.f32 %v1778, %v1845
      %v1939 = vadd.f32 %v1779, %v1847
      %v1940 = vadd.f32 %v1780, %v1849
      %v1941 = vadd.f32 %v1781, %v1851
      %v1942 = vadd.f32 %v1782, %v1853
      %v1943 = vadd.f32 %v1783, %v1855
      %v1944 = vadd.f32 %v1784, %v1857
      %v1945 = vadd.f32 %v1785, %v1859
      %v1946 = vadd.f32 %v1786, %v1861
      %v1947 = vadd.f32 %v1787, %v1863
      %v1948 = vadd.f32 %v1788, %v1865
      %v1949 = vadd.f32 %v1789, %v1867
      %v1950 = vadd.f32 %v1790, %v1869
      %v1951 = vadd.f32 %v1791, %v1871
      %v1952 = vadd.f32 %v1792, %v1873
      %v1953 = vadd.f32 %v1793, %v1875
      %v1954 = vadd.f32 %v1794, %v1877
      %v1955 = vadd.f32 %v1795, %v1879
      %v1956 = vadd.f32 %v1796, %v1881
      %v1957 = vadd.f32 %v1797, %v1883
      %v1958 = vadd.f32 %v1798, %v1885
      %v1959 = vadd.f32 %v1799, %v1887
      %v1960 = vadd.f32 %v1800, %v1889
      %v1961 = vadd.f32 %v1801, %v1891
      %v1962 = vadd.f32 %v1802, %v1893
      %v1963 = vadd.f32 %v1803, %v1895
      %v1964 = vadd.f32 %v1804, %v1897
      %v1965 = vadd.f32 %v1805, %v1899
      %v1966 = vadd.f32 %v1806, %v1901
      %v1967 = vadd.f32 %v1807, %v1903
      %v1968 = vmul.f32 %v800, 1.442695
      %v1969 = vpow.pop %v1968
      %v1970 = vmul.f32 %v802, 1.442695
      %v1971 = vpow.pop %v1970
      %v1972 = vmul.f32 %v805, 1.442695
      %v1973 = vpow.pop %v1972
      %v1974 = vmul.f32 %v807, 1.442695
      %v1975 = vpow.pop %v1974
      %v1976 = vmul.f32 %v810, 1.442695
      %v1977 = vpow.pop %v1976
      %v1978 = vmul.f32 %v812, 1.442695
      %v1979 = vpow.pop %v1978
      %v1980 = vmul.f32 %v815, 1.442695
      %v1981 = vpow.pop %v1980
      %v1982 = vmul.f32 %v817, 1.442695
      %v1983 = vpow.pop %v1982
      %v1984 = vmul.f32 %v820, 1.442695
      %v1985 = vpow.pop %v1984
      %v1986 = vmul.f32 %v822, 1.442695
      %v1987 = vpow.pop %v1986
      %v1988 = vmul.f32 %v825, 1.442695
      %v1989 = vpow.pop %v1988
      %v1990 = vmul.f32 %v827, 1.442695
      %v1991 = vpow.pop %v1990
      %v1992 = vmul.f32 %v830, 1.442695
      %v1993 = vpow.pop %v1992
      %v1994 = vmul.f32 %v832, 1.442695
      %v1995 = vpow.pop %v1994
      %v1996 = vmul.f32 %v835, 1.442695
      %v1997 = vpow.pop %v1996
      %v1998 = vmul.f32 %v837, 1.442695
      %v1999 = vpow.pop %v1998
      %v2000 = vmul.f32 %v840, 1.442695
      %v2001 = vpow.pop %v2000
      %v2002 = vmul.f32 %v842, 1.442695
      %v2003 = vpow.pop %v2002
      %v2004 = vmul.f32 %v845, 1.442695
      %v2005 = vpow.pop %v2004
      %v2006 = vmul.f32 %v847, 1.442695
      %v2007 = vpow.pop %v2006
      %v2008 = vmul.f32 %v850, 1.442695
      %v2009 = vpow.pop %v2008
      %v2010 = vmul.f32 %v852, 1.442695
      %v2011 = vpow.pop %v2010
      %v2012 = vmul.f32 %v855, 1.442695
      %v2013 = vpow.pop %v2012
      %v2014 = vmul.f32 %v857, 1.442695
      %v2015 = vpow.pop %v2014
      %v2016 = vmul.f32 %v860, 1.442695
      %v2017 = vpow.pop %v2016
      %v2018 = vmul.f32 %v862, 1.442695
      %v2019 = vpow.pop %v2018
      %v2020 = vmul.f32 %v865, 1.442695
      %v2021 = vpow.pop %v2020
      %v2022 = vmul.f32 %v867, 1.442695
      %v2023 = vpow.pop %v2022
      %v2024 = vmul.f32 %v870, 1.442695
      %v2025 = vpow.pop %v2024
      %v2026 = vmul.f32 %v872, 1.442695
      %v2027 = vpow.pop %v2026
      %v2028 = vmul.f32 %v875, 1.442695
      %v2029 = vpow.pop %v2028
      %v2030 = vmul.f32 %v877, 1.442695
      %v2031 = vpow.pop %v2030
      %2032 = vrot.lane.b32.xlu0 %v1583, 96
      %v2033 = vpop.permute.xlu0 %2032
      %2034 = vrot.lane.b32.xlu0 %v1584, 96
      %v2035 = vpop.permute.xlu0 %2034
      %2036 = vrot.lane.b32.xlu0 %v1585, 96
      %v2037 = vpop.permute.xlu0 %2036
      %2038 = vrot.lane.b32.xlu0 %v1586, 96
      %v2039 = vpop.permute.xlu0 %2038
      %2040 = vrot.lane.b32.xlu0 %v1587, 96
      %v2041 = vpop.permute.xlu0 %2040
      %2042 = vrot.lane.b32.xlu0 %v1588, 96
      %v2043 = vpop.permute.xlu0 %2042
      %2044 = vrot.lane.b32.xlu0 %v1589, 96
      %v2045 = vpop.permute.xlu0 %2044
      %2046 = vrot.lane.b32.xlu0 %v1590, 96
      %v2047 = vpop.permute.xlu0 %2046
      %2048 = vrot.lane.b32.xlu0 %v1591, 96
      %v2049 = vpop.permute.xlu0 %2048
      %2050 = vrot.lane.b32.xlu0 %v1592, 96
      %v2051 = vpop.permute.xlu0 %2050
      %2052 = vrot.lane.b32.xlu0 %v1593, 96
      %v2053 = vpop.permute.xlu0 %2052
      %2054 = vrot.lane.b32.xlu0 %v1594, 96
      %v2055 = vpop.permute.xlu0 %2054
      %2056 = vrot.lane.b32.xlu0 %v1595, 96
      %v2057 = vpop.permute.xlu0 %2056
      %2058 = vrot.lane.b32.xlu0 %v1596, 96
      %v2059 = vpop.permute.xlu0 %2058
      %2060 = vrot.lane.b32.xlu0 %v1597, 96
      %v2061 = vpop.permute.xlu0 %2060
      %2062 = vrot.lane.b32.xlu0 %v1598, 96
      %v2063 = vpop.permute.xlu0 %2062
      %2064 = vrot.lane.b32.xlu0 %v1599, 96
      %v2065 = vpop.permute.xlu0 %2064
      %2066 = vrot.lane.b32.xlu0 %v1600, 96
      %v2067 = vpop.permute.xlu0 %2066
      %2068 = vrot.lane.b32.xlu0 %v1601, 96
      %v2069 = vpop.permute.xlu0 %2068
      %2070 = vrot.lane.b32.xlu0 %v1602, 96
      %v2071 = vpop.permute.xlu0 %2070
      %2072 = vrot.lane.b32.xlu0 %v1603, 96
      %v2073 = vpop.permute.xlu0 %2072
      %2074 = vrot.lane.b32.xlu0 %v1604, 96
      %v2075 = vpop.permute.xlu0 %2074
      %2076 = vrot.lane.b32.xlu0 %v1605, 96
      %v2077 = vpop.permute.xlu0 %2076
      %2078 = vrot.lane.b32.xlu0 %v1606, 96
      %v2079 = vpop.permute.xlu0 %2078
      %2080 = vrot.lane.b32.xlu0 %v1607, 96
      %v2081 = vpop.permute.xlu0 %2080
      %2082 = vrot.lane.b32.xlu0 %v1608, 96
      %v2083 = vpop.permute.xlu0 %2082
      %2084 = vrot.lane.b32.xlu0 %v1609, 96
      %v2085 = vpop.permute.xlu0 %2084
      %2086 = vrot.lane.b32.xlu0 %v1610, 96
      %v2087 = vpop.permute.xlu0 %2086
      %2088 = vrot.lane.b32.xlu0 %v1611, 96
      %v2089 = vpop.permute.xlu0 %2088
      %2090 = vrot.lane.b32.xlu0 %v1612, 96
      %v2091 = vpop.permute.xlu0 %2090
      %2092 = vrot.lane.b32.xlu0 %v1613, 96
      %v2093 = vpop.permute.xlu0 %2092
      %2094 = vrot.lane.b32.xlu0 %v1614, 96
      %v2095 = vpop.permute.xlu0 %2094
      %v2128 = vmul.f32 %v1969, %v2033
      %v2129 = vmul.f32 %v1971, %v2035
      %v2130 = vmul.f32 %v1973, %v2037
      %v2131 = vmul.f32 %v1975, %v2039
      %v2132 = vmul.f32 %v1977, %v2041
      %v2133 = vmul.f32 %v1979, %v2043
      %v2134 = vmul.f32 %v1981, %v2045
      %v2135 = vmul.f32 %v1983, %v2047
      %v2136 = vmul.f32 %v1985, %v2049
      %v2137 = vmul.f32 %v1987, %v2051
      %v2138 = vmul.f32 %v1989, %v2053
      %v2139 = vmul.f32 %v1991, %v2055
      %v2140 = vmul.f32 %v1993, %v2057
      %v2141 = vmul.f32 %v1995, %v2059
      %v2142 = vmul.f32 %v1997, %v2061
      %v2143 = vmul.f32 %v1999, %v2063
      %v2144 = vmul.f32 %v2001, %v2065
      %v2145 = vmul.f32 %v2003, %v2067
      %v2146 = vmul.f32 %v2005, %v2069
      %v2147 = vmul.f32 %v2007, %v2071
      %v2148 = vmul.f32 %v2009, %v2073
      %v2149 = vmul.f32 %v2011, %v2075
      %v2150 = vmul.f32 %v2013, %v2077
      %v2151 = vmul.f32 %v2015, %v2079
      %v2152 = vmul.f32 %v2017, %v2081
      %v2153 = vmul.f32 %v2019, %v2083
      %v2154 = vmul.f32 %v2021, %v2085
      %v2155 = vmul.f32 %v2023, %v2087
      %v2156 = vmul.f32 %v2025, %v2089
      %v2157 = vmul.f32 %v2027, %v2091
      %v2158 = vmul.f32 %v2029, %v2093
      %v2159 = vmul.f32 %v2031, %v2095
      %v2160 = vmul.f32 %v2128, 0.5
      %v2161 = vmul.f32 %v2129, 0.5
      %v2162 = vmul.f32 %v2130, 0.5
      %v2163 = vmul.f32 %v2131, 0.5
      %v2164 = vmul.f32 %v2132, 0.5
      %v2165 = vmul.f32 %v2133, 0.5
      %v2166 = vmul.f32 %v2134, 0.5
      %v2167 = vmul.f32 %v2135, 0.5
      %v2168 = vmul.f32 %v2136, 0.5
      %v2169 = vmul.f32 %v2137, 0.5
      %v2170 = vmul.f32 %v2138, 0.5
      %v2171 = vmul.f32 %v2139, 0.5
      %v2172 = vmul.f32 %v2140, 0.5
      %v2173 = vmul.f32 %v2141, 0.5
      %v2174 = vmul.f32 %v2142, 0.5
      %v2175 = vmul.f32 %v2143, 0.5
      %v2176 = vmul.f32 %v2144, 0.5
      %v2177 = vmul.f32 %v2145, 0.5
      %v2178 = vmul.f32 %v2146, 0.5
      %v2179 = vmul.f32 %v2147, 0.5
      %v2180 = vmul.f32 %v2148, 0.5
      %v2181 = vmul.f32 %v2149, 0.5
      %v2182 = vmul.f32 %v2150, 0.5
      %v2183 = vmul.f32 %v2151, 0.5
      %v2184 = vmul.f32 %v2152, 0.5
      %v2185 = vmul.f32 %v2153, 0.5
      %v2186 = vmul.f32 %v2154, 0.5
      %v2187 = vmul.f32 %v2155, 0.5
      %v2188 = vmul.f32 %v2156, 0.5
      %v2189 = vmul.f32 %v2157, 0.5
      %v2190 = vmul.f32 %v2158, 0.5
      %v2191 = vmul.f32 %v2159, 0.5
      %2224 = vrot.lane.b32.xlu0 %v2160, 96
      %v2225 = vpop.permute.xlu0 %2224
      %2226 = vrot.lane.b32.xlu0 %v2161, 96
      %v2227 = vpop.permute.xlu0 %2226
      %2228 = vrot.lane.b32.xlu0 %v2162, 96
      %v2229 = vpop.permute.xlu0 %2228
      %2230 = vrot.lane.b32.xlu0 %v2163, 96
      %v2231 = vpop.permute.xlu0 %2230
      %2232 = vrot.lane.b32.xlu0 %v2164, 96
      %v2233 = vpop.permute.xlu0 %2232
      %2234 = vrot.lane.b32.xlu0 %v2165, 96
      %v2235 = vpop.permute.xlu0 %2234
      %2236 = vrot.lane.b32.xlu0 %v2166, 96
      %v2237 = vpop.permute.xlu0 %2236
      %2238 = vrot.lane.b32.xlu0 %v2167, 96
      %v2239 = vpop.permute.xlu0 %2238
      %2240 = vrot.lane.b32.xlu0 %v2168, 96
      %v2241 = vpop.permute.xlu0 %2240
      %2242 = vrot.lane.b32.xlu0 %v2169, 96
      %v2243 = vpop.permute.xlu0 %2242
      %2244 = vrot.lane.b32.xlu0 %v2170, 96
      %v2245 = vpop.permute.xlu0 %2244
      %2246 = vrot.lane.b32.xlu0 %v2171, 96
      %v2247 = vpop.permute.xlu0 %2246
      %2248 = vrot.lane.b32.xlu0 %v2172, 96
      %v2249 = vpop.permute.xlu0 %2248
      %2250 = vrot.lane.b32.xlu0 %v2173, 96
      %v2251 = vpop.permute.xlu0 %2250
      %2252 = vrot.lane.b32.xlu0 %v2174, 96
      %v2253 = vpop.permute.xlu0 %2252
      %2254 = vrot.lane.b32.xlu0 %v2175, 96
      %v2255 = vpop.permute.xlu0 %2254
      %2256 = vrot.lane.b32.xlu0 %v2176, 96
      %v2257 = vpop.permute.xlu0 %2256
      %2258 = vrot.lane.b32.xlu0 %v2177, 96
      %v2259 = vpop.permute.xlu0 %2258
      %2260 = vrot.lane.b32.xlu0 %v2178, 96
      %v2261 = vpop.permute.xlu0 %2260
      %2262 = vrot.lane.b32.xlu0 %v2179, 96
      %v2263 = vpop.permute.xlu0 %2262
      %2264 = vrot.lane.b32.xlu0 %v2180, 96
      %v2265 = vpop.permute.xlu0 %2264
      %2266 = vrot.lane.b32.xlu0 %v2181, 96
      %v2267 = vpop.permute.xlu0 %2266
      %2268 = vrot.lane.b32.xlu0 %v2182, 96
      %v2269 = vpop.permute.xlu0 %2268
      %2270 = vrot.lane.b32.xlu0 %v2183, 96
      %v2271 = vpop.permute.xlu0 %2270
      %2272 = vrot.lane.b32.xlu0 %v2184, 96
      %v2273 = vpop.permute.xlu0 %2272
      %2274 = vrot.lane.b32.xlu0 %v2185, 96
      %v2275 = vpop.permute.xlu0 %2274
      %2276 = vrot.lane.b32.xlu0 %v2186, 96
      %v2277 = vpop.permute.xlu0 %2276
      %2278 = vrot.lane.b32.xlu0 %v2187, 96
      %v2279 = vpop.permute.xlu0 %2278
      %2280 = vrot.lane.b32.xlu0 %v2188, 96
      %v2281 = vpop.permute.xlu0 %2280
      %2282 = vrot.lane.b32.xlu0 %v2189, 96
      %v2283 = vpop.permute.xlu0 %2282
      %2284 = vrot.lane.b32.xlu0 %v2190, 96
      %v2285 = vpop.permute.xlu0 %2284
      %2286 = vrot.lane.b32.xlu0 %v2191, 96
      %v2287 = vpop.permute.xlu0 %2286
      %v2320 = vsub.f32 %v1936, %v2225
      %v2321 = vsub.f32 %v1937, %v2227
      %v2322 = vsub.f32 %v1938, %v2229
      %v2323 = vsub.f32 %v1939, %v2231
      %v2324 = vsub.f32 %v1940, %v2233
      %v2325 = vsub.f32 %v1941, %v2235
      %v2326 = vsub.f32 %v1942, %v2237
      %v2327 = vsub.f32 %v1943, %v2239
      %v2328 = vsub.f32 %v1944, %v2241
      %v2329 = vsub.f32 %v1945, %v2243
      %v2330 = vsub.f32 %v1946, %v2245
      %v2331 = vsub.f32 %v1947, %v2247
      %v2332 = vsub.f32 %v1948, %v2249
      %v2333 = vsub.f32 %v1949, %v2251
      %v2334 = vsub.f32 %v1950, %v2253
      %v2335 = vsub.f32 %v1951, %v2255
      %v2336 = vsub.f32 %v1952, %v2257
      %v2337 = vsub.f32 %v1953, %v2259
      %v2338 = vsub.f32 %v1954, %v2261
      %v2339 = vsub.f32 %v1955, %v2263
      %v2340 = vsub.f32 %v1956, %v2265
      %v2341 = vsub.f32 %v1957, %v2267
      %v2342 = vsub.f32 %v1958, %v2269
      %v2343 = vsub.f32 %v1959, %v2271
      %v2344 = vsub.f32 %v1960, %v2273
      %v2345 = vsub.f32 %v1961, %v2275
      %v2346 = vsub.f32 %v1962, %v2277
      %v2347 = vsub.f32 %v1963, %v2279
      %v2348 = vsub.f32 %v1964, %v2281
      %v2349 = vsub.f32 %v1965, %v2283
      %v2350 = vsub.f32 %v1966, %v2285
      %v2351 = vsub.f32 %v1967, %v2287
      %v2352 = vmax.f32 %v2320, 0.0
      %v2353 = vmax.f32 %v2321, 0.0
      %v2354 = vmax.f32 %v2322, 0.0
      %v2355 = vmax.f32 %v2323, 0.0
      %v2356 = vmax.f32 %v2324, 0.0
      %v2357 = vmax.f32 %v2325, 0.0
      %v2358 = vmax.f32 %v2326, 0.0
      %v2359 = vmax.f32 %v2327, 0.0
      %v2360 = vmax.f32 %v2328, 0.0
      %v2361 = vmax.f32 %v2329, 0.0
      %v2362 = vmax.f32 %v2330, 0.0
      %v2363 = vmax.f32 %v2331, 0.0
      %v2364 = vmax.f32 %v2332, 0.0
      %v2365 = vmax.f32 %v2333, 0.0
      %v2366 = vmax.f32 %v2334, 0.0
      %v2367 = vmax.f32 %v2335, 0.0
      %v2368 = vmax.f32 %v2336, 0.0
      %v2369 = vmax.f32 %v2337, 0.0
      %v2370 = vmax.f32 %v2338, 0.0
      %v2371 = vmax.f32 %v2339, 0.0
      %v2372 = vmax.f32 %v2340, 0.0
      %v2373 = vmax.f32 %v2341, 0.0
      %v2374 = vmax.f32 %v2342, 0.0
      %v2375 = vmax.f32 %v2343, 0.0
      %v2376 = vmax.f32 %v2344, 0.0
      %v2377 = vmax.f32 %v2345, 0.0
      %v2378 = vmax.f32 %v2346, 0.0
      %v2379 = vmax.f32 %v2347, 0.0
      %v2380 = vmax.f32 %v2348, 0.0
      %v2381 = vmax.f32 %v2349, 0.0
      %v2382 = vmax.f32 %v2350, 0.0
      %v2383 = vmax.f32 %v2351, 0.0
      %v2385 = vperm.slane %v1647, 0
      %2419 = vrot.lane.b32.xlu0 %v2352, 64
      %v2420 = vpop.permute.xlu0 %2419
      %2421 = vrot.lane.b32.xlu0 %v2353, 64
      %v2422 = vpop.permute.xlu0 %2421
      %2423 = vrot.lane.b32.xlu0 %v2354, 64
      %v2424 = vpop.permute.xlu0 %2423
      %2425 = vrot.lane.b32.xlu0 %v2355, 64
      %v2426 = vpop.permute.xlu0 %2425
      %2427 = vrot.lane.b32.xlu0 %v2356, 64
      %v2428 = vpop.permute.xlu0 %2427
      %2429 = vrot.lane.b32.xlu0 %v2357, 64
      %v2430 = vpop.permute.xlu0 %2429
      %2431 = vrot.lane.b32.xlu0 %v2358, 64
      %v2432 = vpop.permute.xlu0 %2431
      %2433 = vrot.lane.b32.xlu0 %v2359, 64
      %v2434 = vpop.permute.xlu0 %2433
      %2435 = vrot.lane.b32.xlu0 %v2360, 64
      %v2436 = vpop.permute.xlu0 %2435
      %2437 = vrot.lane.b32.xlu0 %v2361, 64
      %v2438 = vpop.permute.xlu0 %2437
      %2439 = vrot.lane.b32.xlu0 %v2362, 64
      %v2440 = vpop.permute.xlu0 %2439
      %2441 = vrot.lane.b32.xlu0 %v2363, 64
      %v2442 = vpop.permute.xlu0 %2441
      %2443 = vrot.lane.b32.xlu0 %v2364, 64
      %v2444 = vpop.permute.xlu0 %2443
      %2445 = vrot.lane.b32.xlu0 %v2365, 64
      %v2446 = vpop.permute.xlu0 %2445
      %2447 = vrot.lane.b32.xlu0 %v2366, 64
      %v2448 = vpop.permute.xlu0 %2447
      %2449 = vrot.lane.b32.xlu0 %v2367, 64
      %v2450 = vpop.permute.xlu0 %2449
      %2451 = vrot.lane.b32.xlu0 %v2368, 64
      %v2452 = vpop.permute.xlu0 %2451
      %2453 = vrot.lane.b32.xlu0 %v2369, 64
      %v2454 = vpop.permute.xlu0 %2453
      %2455 = vrot.lane.b32.xlu0 %v2370, 64
      %v2456 = vpop.permute.xlu0 %2455
      %2457 = vrot.lane.b32.xlu0 %v2371, 64
      %v2458 = vpop.permute.xlu0 %2457
      %2459 = vrot.lane.b32.xlu0 %v2372, 64
      %v2460 = vpop.permute.xlu0 %2459
      %2461 = vrot.lane.b32.xlu0 %v2373, 64
      %v2462 = vpop.permute.xlu0 %2461
      %2463 = vrot.lane.b32.xlu0 %v2374, 64
      %v2464 = vpop.permute.xlu0 %2463
      %2465 = vrot.lane.b32.xlu0 %v2375, 64
      %v2466 = vpop.permute.xlu0 %2465
      %2467 = vrot.lane.b32.xlu0 %v2376, 64
      %v2468 = vpop.permute.xlu0 %2467
      %2469 = vrot.lane.b32.xlu0 %v2377, 64
      %v2470 = vpop.permute.xlu0 %2469
      %2471 = vrot.lane.b32.xlu0 %v2378, 64
      %v2472 = vpop.permute.xlu0 %2471
      %2473 = vrot.lane.b32.xlu0 %v2379, 64
      %v2474 = vpop.permute.xlu0 %2473
      %2475 = vrot.lane.b32.xlu0 %v2380, 64
      %v2476 = vpop.permute.xlu0 %2475
      %2477 = vrot.lane.b32.xlu0 %v2381, 64
      %v2478 = vpop.permute.xlu0 %2477
      %2479 = vrot.lane.b32.xlu0 %v2382, 64
      %v2480 = vpop.permute.xlu0 %2479
      %2481 = vrot.lane.b32.xlu0 %v2383, 64
      %v2482 = vpop.permute.xlu0 %2481
      %v2515 = vmin.f32 %v2385, %v2420
      %v2516 = vmin.f32 %v2385, %v2422
      %v2517 = vmin.f32 %v2385, %v2424
      %v2518 = vmin.f32 %v2385, %v2426
      %v2519 = vmin.f32 %v2385, %v2428
      %v2520 = vmin.f32 %v2385, %v2430
      %v2521 = vmin.f32 %v2385, %v2432
      %v2522 = vmin.f32 %v2385, %v2434
      %v2523 = vmin.f32 %v2385, %v2436
      %v2524 = vmin.f32 %v2385, %v2438
      %v2525 = vmin.f32 %v2385, %v2440
      %v2526 = vmin.f32 %v2385, %v2442
      %v2527 = vmin.f32 %v2385, %v2444
      %v2528 = vmin.f32 %v2385, %v2446
      %v2529 = vmin.f32 %v2385, %v2448
      %v2530 = vmin.f32 %v2385, %v2450
      %v2531 = vmin.f32 %v2385, %v2452
      %v2532 = vmin.f32 %v2385, %v2454
      %v2533 = vmin.f32 %v2385, %v2456
      %v2534 = vmin.f32 %v2385, %v2458
      %v2535 = vmin.f32 %v2385, %v2460
      %v2536 = vmin.f32 %v2385, %v2462
      %v2537 = vmin.f32 %v2385, %v2464
      %v2538 = vmin.f32 %v2385, %v2466
      %v2539 = vmin.f32 %v2385, %v2468
      %v2540 = vmin.f32 %v2385, %v2470
      %v2541 = vmin.f32 %v2385, %v2472
      %v2542 = vmin.f32 %v2385, %v2474
      %v2543 = vmin.f32 %v2385, %v2476
      %v2544 = vmin.f32 %v2385, %v2478
      %v2545 = vmin.f32 %v2385, %v2480
      %v2546 = vmin.f32 %v2385, %v2482
      %v2547 = vadd.f32 %v1936, %v2225
      %v2548 = vadd.f32 %v1937, %v2227
      %v2549 = vadd.f32 %v1938, %v2229
      %v2550 = vadd.f32 %v1939, %v2231
      %v2551 = vadd.f32 %v1940, %v2233
      %v2552 = vadd.f32 %v1941, %v2235
      %v2553 = vadd.f32 %v1942, %v2237
      %v2554 = vadd.f32 %v1943, %v2239
      %v2555 = vadd.f32 %v1944, %v2241
      %v2556 = vadd.f32 %v1945, %v2243
      %v2557 = vadd.f32 %v1946, %v2245
      %v2558 = vadd.f32 %v1947, %v2247
      %v2559 = vadd.f32 %v1948, %v2249
      %v2560 = vadd.f32 %v1949, %v2251
      %v2561 = vadd.f32 %v1950, %v2253
      %v2562 = vadd.f32 %v1951, %v2255
      %v2563 = vadd.f32 %v1952, %v2257
      %v2564 = vadd.f32 %v1953, %v2259
      %v2565 = vadd.f32 %v1954, %v2261
      %v2566 = vadd.f32 %v1955, %v2263
      %v2567 = vadd.f32 %v1956, %v2265
      %v2568 = vadd.f32 %v1957, %v2267
      %v2569 = vadd.f32 %v1958, %v2269
      %v2570 = vadd.f32 %v1959, %v2271
      %v2571 = vadd.f32 %v1960, %v2273
      %v2572 = vadd.f32 %v1961, %v2275
      %v2573 = vadd.f32 %v1962, %v2277
      %v2574 = vadd.f32 %v1963, %v2279
      %v2575 = vadd.f32 %v1964, %v2281
      %v2576 = vadd.f32 %v1965, %v2283
      %v2577 = vadd.f32 %v1966, %v2285
      %v2578 = vadd.f32 %v1967, %v2287
      %v2579 = vmax.f32 %v2547, 0.0
      %v2580 = vmax.f32 %v2548, 0.0
      %v2581 = vmax.f32 %v2549, 0.0
      %v2582 = vmax.f32 %v2550, 0.0
      %v2583 = vmax.f32 %v2551, 0.0
      %v2584 = vmax.f32 %v2552, 0.0
      %v2585 = vmax.f32 %v2553, 0.0
      %v2586 = vmax.f32 %v2554, 0.0
      %v2587 = vmax.f32 %v2555, 0.0
      %v2588 = vmax.f32 %v2556, 0.0
      %v2589 = vmax.f32 %v2557, 0.0
      %v2590 = vmax.f32 %v2558, 0.0
      %v2591 = vmax.f32 %v2559, 0.0
      %v2592 = vmax.f32 %v2560, 0.0
      %v2593 = vmax.f32 %v2561, 0.0
      %v2594 = vmax.f32 %v2562, 0.0
      %v2595 = vmax.f32 %v2563, 0.0
      %v2596 = vmax.f32 %v2564, 0.0
      %v2597 = vmax.f32 %v2565, 0.0
      %v2598 = vmax.f32 %v2566, 0.0
      %v2599 = vmax.f32 %v2567, 0.0
      %v2600 = vmax.f32 %v2568, 0.0
      %v2601 = vmax.f32 %v2569, 0.0
      %v2602 = vmax.f32 %v2570, 0.0
      %v2603 = vmax.f32 %v2571, 0.0
      %v2604 = vmax.f32 %v2572, 0.0
      %v2605 = vmax.f32 %v2573, 0.0
      %v2606 = vmax.f32 %v2574, 0.0
      %v2607 = vmax.f32 %v2575, 0.0
      %v2608 = vmax.f32 %v2576, 0.0
      %v2609 = vmax.f32 %v2577, 0.0
      %v2610 = vmax.f32 %v2578, 0.0
      %2643 = vrot.lane.b32.xlu0 %v2579, 64
      %v2644 = vpop.permute.xlu0 %2643
      %2645 = vrot.lane.b32.xlu0 %v2580, 64
      %v2646 = vpop.permute.xlu0 %2645
      %2647 = vrot.lane.b32.xlu0 %v2581, 64
      %v2648 = vpop.permute.xlu0 %2647
      %2649 = vrot.lane.b32.xlu0 %v2582, 64
      %v2650 = vpop.permute.xlu0 %2649
      %2651 = vrot.lane.b32.xlu0 %v2583, 64
      %v2652 = vpop.permute.xlu0 %2651
      %2653 = vrot.lane.b32.xlu0 %v2584, 64
      %v2654 = vpop.permute.xlu0 %2653
      %2655 = vrot.lane.b32.xlu0 %v2585, 64
      %v2656 = vpop.permute.xlu0 %2655
      %2657 = vrot.lane.b32.xlu0 %v2586, 64
      %v2658 = vpop.permute.xlu0 %2657
      %2659 = vrot.lane.b32.xlu0 %v2587, 64
      %v2660 = vpop.permute.xlu0 %2659
      %2661 = vrot.lane.b32.xlu0 %v2588, 64
      %v2662 = vpop.permute.xlu0 %2661
      %2663 = vrot.lane.b32.xlu0 %v2589, 64
      %v2664 = vpop.permute.xlu0 %2663
      %2665 = vrot.lane.b32.xlu0 %v2590, 64
      %v2666 = vpop.permute.xlu0 %2665
      %2667 = vrot.lane.b32.xlu0 %v2591, 64
      %v2668 = vpop.permute.xlu0 %2667
      %2669 = vrot.lane.b32.xlu0 %v2592, 64
      %v2670 = vpop.permute.xlu0 %2669
      %2671 = vrot.lane.b32.xlu0 %v2593, 64
      %v2672 = vpop.permute.xlu0 %2671
      %2673 = vrot.lane.b32.xlu0 %v2594, 64
      %v2674 = vpop.permute.xlu0 %2673
      %2675 = vrot.lane.b32.xlu0 %v2595, 64
      %v2676 = vpop.permute.xlu0 %2675
      %2677 = vrot.lane.b32.xlu0 %v2596, 64
      %v2678 = vpop.permute.xlu0 %2677
      %2679 = vrot.lane.b32.xlu0 %v2597, 64
      %v2680 = vpop.permute.xlu0 %2679
      %2681 = vrot.lane.b32.xlu0 %v2598, 64
      %v2682 = vpop.permute.xlu0 %2681
      %2683 = vrot.lane.b32.xlu0 %v2599, 64
      %v2684 = vpop.permute.xlu0 %2683
      %2685 = vrot.lane.b32.xlu0 %v2600, 64
      %v2686 = vpop.permute.xlu0 %2685
      %2687 = vrot.lane.b32.xlu0 %v2601, 64
      %v2688 = vpop.permute.xlu0 %2687
      %2689 = vrot.lane.b32.xlu0 %v2602, 64
      %v2690 = vpop.permute.xlu0 %2689
      %2691 = vrot.lane.b32.xlu0 %v2603, 64
      %v2692 = vpop.permute.xlu0 %2691
      %2693 = vrot.lane.b32.xlu0 %v2604, 64
      %v2694 = vpop.permute.xlu0 %2693
      %2695 = vrot.lane.b32.xlu0 %v2605, 64
      %v2696 = vpop.permute.xlu0 %2695
      %2697 = vrot.lane.b32.xlu0 %v2606, 64
      %v2698 = vpop.permute.xlu0 %2697
      %2699 = vrot.lane.b32.xlu0 %v2607, 64
      %v2700 = vpop.permute.xlu0 %2699
      %2701 = vrot.lane.b32.xlu0 %v2608, 64
      %v2702 = vpop.permute.xlu0 %2701
      %2703 = vrot.lane.b32.xlu0 %v2609, 64
      %v2704 = vpop.permute.xlu0 %2703
      %2705 = vrot.lane.b32.xlu0 %v2610, 64
      %v2706 = vpop.permute.xlu0 %2705
      %v2739 = vmin.f32 %v2385, %v2644
      %v2740 = vmin.f32 %v2385, %v2646
      %v2741 = vmin.f32 %v2385, %v2648
      %v2742 = vmin.f32 %v2385, %v2650
      %v2743 = vmin.f32 %v2385, %v2652
      %v2744 = vmin.f32 %v2385, %v2654
      %v2745 = vmin.f32 %v2385, %v2656
      %v2746 = vmin.f32 %v2385, %v2658
      %v2747 = vmin.f32 %v2385, %v2660
      %v2748 = vmin.f32 %v2385, %v2662
      %v2749 = vmin.f32 %v2385, %v2664
      %v2750 = vmin.f32 %v2385, %v2666
      %v2751 = vmin.f32 %v2385, %v2668
      %v2752 = vmin.f32 %v2385, %v2670
      %v2753 = vmin.f32 %v2385, %v2672
      %v2754 = vmin.f32 %v2385, %v2674
      %v2755 = vmin.f32 %v2385, %v2676
      %v2756 = vmin.f32 %v2385, %v2678
      %v2757 = vmin.f32 %v2385, %v2680
      %v2758 = vmin.f32 %v2385, %v2682
      %v2759 = vmin.f32 %v2385, %v2684
      %v2760 = vmin.f32 %v2385, %v2686
      %v2761 = vmin.f32 %v2385, %v2688
      %v2762 = vmin.f32 %v2385, %v2690
      %v2763 = vmin.f32 %v2385, %v2692
      %v2764 = vmin.f32 %v2385, %v2694
      %v2765 = vmin.f32 %v2385, %v2696
      %v2766 = vmin.f32 %v2385, %v2698
      %v2767 = vmin.f32 %v2385, %v2700
      %v2768 = vmin.f32 %v2385, %v2702
      %v2769 = vmin.f32 %v2385, %v2704
      %v2770 = vmin.f32 %v2385, %v2706
      %2803 = vrot.lane.b32.xlu0 %v2515, 32
      %v2804 = vpop.permute.xlu0 %2803
      %2805 = vrot.lane.b32.xlu0 %v2516, 32
      %v2806 = vpop.permute.xlu0 %2805
      %2807 = vrot.lane.b32.xlu0 %v2517, 32
      %v2808 = vpop.permute.xlu0 %2807
      %2809 = vrot.lane.b32.xlu0 %v2518, 32
      %v2810 = vpop.permute.xlu0 %2809
      %2811 = vrot.lane.b32.xlu0 %v2519, 32
      %v2812 = vpop.permute.xlu0 %2811
      %2813 = vrot.lane.b32.xlu0 %v2520, 32
      %v2814 = vpop.permute.xlu0 %2813
      %2815 = vrot.lane.b32.xlu0 %v2521, 32
      %v2816 = vpop.permute.xlu0 %2815
      %2817 = vrot.lane.b32.xlu0 %v2522, 32
      %v2818 = vpop.permute.xlu0 %2817
      %2819 = vrot.lane.b32.xlu0 %v2523, 32
      %v2820 = vpop.permute.xlu0 %2819
      %2821 = vrot.lane.b32.xlu0 %v2524, 32
      %v2822 = vpop.permute.xlu0 %2821
      %2823 = vrot.lane.b32.xlu0 %v2525, 32
      %v2824 = vpop.permute.xlu0 %2823
      %2825 = vrot.lane.b32.xlu0 %v2526, 32
      %v2826 = vpop.permute.xlu0 %2825
      %2827 = vrot.lane.b32.xlu0 %v2527, 32
      %v2828 = vpop.permute.xlu0 %2827
      %2829 = vrot.lane.b32.xlu0 %v2528, 32
      %v2830 = vpop.permute.xlu0 %2829
      %2831 = vrot.lane.b32.xlu0 %v2529, 32
      %v2832 = vpop.permute.xlu0 %2831
      %2833 = vrot.lane.b32.xlu0 %v2530, 32
      %v2834 = vpop.permute.xlu0 %2833
      %2835 = vrot.lane.b32.xlu0 %v2531, 32
      %v2836 = vpop.permute.xlu0 %2835
      %2837 = vrot.lane.b32.xlu0 %v2532, 32
      %v2838 = vpop.permute.xlu0 %2837
      %2839 = vrot.lane.b32.xlu0 %v2533, 32
      %v2840 = vpop.permute.xlu0 %2839
      %2841 = vrot.lane.b32.xlu0 %v2534, 32
      %v2842 = vpop.permute.xlu0 %2841
      %2843 = vrot.lane.b32.xlu0 %v2535, 32
      %v2844 = vpop.permute.xlu0 %2843
      %2845 = vrot.lane.b32.xlu0 %v2536, 32
      %v2846 = vpop.permute.xlu0 %2845
      %2847 = vrot.lane.b32.xlu0 %v2537, 32
      %v2848 = vpop.permute.xlu0 %2847
      %2849 = vrot.lane.b32.xlu0 %v2538, 32
      %v2850 = vpop.permute.xlu0 %2849
      %2851 = vrot.lane.b32.xlu0 %v2539, 32
      %v2852 = vpop.permute.xlu0 %2851
      %2853 = vrot.lane.b32.xlu0 %v2540, 32
      %v2854 = vpop.permute.xlu0 %2853
      %2855 = vrot.lane.b32.xlu0 %v2541, 32
      %v2856 = vpop.permute.xlu0 %2855
      %2857 = vrot.lane.b32.xlu0 %v2542, 32
      %v2858 = vpop.permute.xlu0 %2857
      %2859 = vrot.lane.b32.xlu0 %v2543, 32
      %v2860 = vpop.permute.xlu0 %2859
      %2861 = vrot.lane.b32.xlu0 %v2544, 32
      %v2862 = vpop.permute.xlu0 %2861
      %2863 = vrot.lane.b32.xlu0 %v2545, 32
      %v2864 = vpop.permute.xlu0 %2863
      %2865 = vrot.lane.b32.xlu0 %v2546, 32
      %v2866 = vpop.permute.xlu0 %2865
      %2931 = vrot.lane.b32.xlu0 %v2739, 64
      %v2932 = vpop.permute.xlu0 %2931
      %2933 = vrot.lane.b32.xlu0 %v2740, 64
      %v2934 = vpop.permute.xlu0 %2933
      %2935 = vrot.lane.b32.xlu0 %v2741, 64
      %v2936 = vpop.permute.xlu0 %2935
      %2937 = vrot.lane.b32.xlu0 %v2742, 64
      %v2938 = vpop.permute.xlu0 %2937
      %2939 = vrot.lane.b32.xlu0 %v2743, 64
      %v2940 = vpop.permute.xlu0 %2939
      %2941 = vrot.lane.b32.xlu0 %v2744, 64
      %v2942 = vpop.permute.xlu0 %2941
      %2943 = vrot.lane.b32.xlu0 %v2745, 64
      %v2944 = vpop.permute.xlu0 %2943
      %2945 = vrot.lane.b32.xlu0 %v2746, 64
      %v2946 = vpop.permute.xlu0 %2945
      %2947 = vrot.lane.b32.xlu0 %v2747, 64
      %v2948 = vpop.permute.xlu0 %2947
      %2949 = vrot.lane.b32.xlu0 %v2748, 64
      %v2950 = vpop.permute.xlu0 %2949
      %2951 = vrot.lane.b32.xlu0 %v2749, 64
      %v2952 = vpop.permute.xlu0 %2951
      %2953 = vrot.lane.b32.xlu0 %v2750, 64
      %v2954 = vpop.permute.xlu0 %2953
      %2955 = vrot.lane.b32.xlu0 %v2751, 64
      %v2956 = vpop.permute.xlu0 %2955
      %2957 = vrot.lane.b32.xlu0 %v2752, 64
      %v2958 = vpop.permute.xlu0 %2957
      %2959 = vrot.lane.b32.xlu0 %v2753, 64
      %v2960 = vpop.permute.xlu0 %2959
      %2961 = vrot.lane.b32.xlu0 %v2754, 64
      %v2962 = vpop.permute.xlu0 %2961
      %2963 = vrot.lane.b32.xlu0 %v2755, 64
      %v2964 = vpop.permute.xlu0 %2963
      %2965 = vrot.lane.b32.xlu0 %v2756, 64
      %v2966 = vpop.permute.xlu0 %2965
      %2967 = vrot.lane.b32.xlu0 %v2757, 64
      %v2968 = vpop.permute.xlu0 %2967
      %2969 = vrot.lane.b32.xlu0 %v2758, 64
      %v2970 = vpop.permute.xlu0 %2969
      %2971 = vrot.lane.b32.xlu0 %v2759, 64
      %v2972 = vpop.permute.xlu0 %2971
      %2973 = vrot.lane.b32.xlu0 %v2760, 64
      %v2974 = vpop.permute.xlu0 %2973
      %2975 = vrot.lane.b32.xlu0 %v2761, 64
      %v2976 = vpop.permute.xlu0 %2975
      %2977 = vrot.lane.b32.xlu0 %v2762, 64
      %v2978 = vpop.permute.xlu0 %2977
      %2979 = vrot.lane.b32.xlu0 %v2763, 64
      %v2980 = vpop.permute.xlu0 %2979
      %2981 = vrot.lane.b32.xlu0 %v2764, 64
      %v2982 = vpop.permute.xlu0 %2981
      %2983 = vrot.lane.b32.xlu0 %v2765, 64
      %v2984 = vpop.permute.xlu0 %2983
      %2985 = vrot.lane.b32.xlu0 %v2766, 64
      %v2986 = vpop.permute.xlu0 %2985
      %2987 = vrot.lane.b32.xlu0 %v2767, 64
      %v2988 = vpop.permute.xlu0 %2987
      %2989 = vrot.lane.b32.xlu0 %v2768, 64
      %v2990 = vpop.permute.xlu0 %2989
      %2991 = vrot.lane.b32.xlu0 %v2769, 64
      %v2992 = vpop.permute.xlu0 %2991
      %2993 = vrot.lane.b32.xlu0 %v2770, 64
      %v2994 = vpop.permute.xlu0 %2993
      %vm3027 = vcmask 261120
      %v3028 = vsel %vm3027, %v1148, %v2804
      %v3029 = vsel %vm3027, %v1162, %v2806
      %v3030 = vsel %vm3027, %v1176, %v2808
      %v3031 = vsel %vm3027, %v1190, %v2810
      %v3032 = vsel %vm3027, %v1204, %v2812
      %v3033 = vsel %vm3027, %v1218, %v2814
      %v3034 = vsel %vm3027, %v1232, %v2816
      %v3035 = vsel %vm3027, %v1246, %v2818
      %v3036 = vsel %vm3027, %v1260, %v2820
      %v3037 = vsel %vm3027, %v1274, %v2822
      %v3038 = vsel %vm3027, %v1288, %v2824
      %v3039 = vsel %vm3027, %v1302, %v2826
      %v3040 = vsel %vm3027, %v1316, %v2828
      %v3041 = vsel %vm3027, %v1330, %v2830
      %v3042 = vsel %vm3027, %v1344, %v2832
      %v3043 = vsel %vm3027, %v1358, %v2834
      %v3044 = vsel %vm3027, %v1372, %v2836
      %v3045 = vsel %vm3027, %v1386, %v2838
      %v3046 = vsel %vm3027, %v1400, %v2840
      %v3047 = vsel %vm3027, %v1414, %v2842
      %v3048 = vsel %vm3027, %v1428, %v2844
      %v3049 = vsel %vm3027, %v1442, %v2846
      %v3050 = vsel %vm3027, %v1456, %v2848
      %v3051 = vsel %vm3027, %v1470, %v2850
      %v3052 = vsel %vm3027, %v1484, %v2852
      %v3053 = vsel %vm3027, %v1498, %v2854
      %v3054 = vsel %vm3027, %v1512, %v2856
      %v3055 = vsel %vm3027, %v1526, %v2858
      %v3056 = vsel %vm3027, %v1540, %v2860
      %v3057 = vsel %vm3027, %v1554, %v2862
      %v3058 = vsel %vm3027, %v1568, %v2864
      %v3059 = vsel %vm3027, %v1582, %v2866
      %vm3060 = vcmask 523264
      %v3061 = vsel %vm3060, %v3028, %v2932
      %v3062 = vsel %vm3060, %v3029, %v2934
      %v3063 = vsel %vm3060, %v3030, %v2936
      %v3064 = vsel %vm3060, %v3031, %v2938
      %v3065 = vsel %vm3060, %v3032, %v2940
      %v3066 = vsel %vm3060, %v3033, %v2942
      %v3067 = vsel %vm3060, %v3034, %v2944
      %v3068 = vsel %vm3060, %v3035, %v2946
      %v3069 = vsel %vm3060, %v3036, %v2948
      %v3070 = vsel %vm3060, %v3037, %v2950
      %v3071 = vsel %vm3060, %v3038, %v2952
      %v3072 = vsel %vm3060, %v3039, %v2954
      %v3073 = vsel %vm3060, %v3040, %v2956
      %v3074 = vsel %vm3060, %v3041, %v2958
      %v3075 = vsel %vm3060, %v3042, %v2960
      %v3076 = vsel %vm3060, %v3043, %v2962
      %v3077 = vsel %vm3060, %v3044, %v2964
      %v3078 = vsel %vm3060, %v3045, %v2966
      %v3079 = vsel %vm3060, %v3046, %v2968
      %v3080 = vsel %vm3060, %v3047, %v2970
      %v3081 = vsel %vm3060, %v3048, %v2972
      %v3082 = vsel %vm3060, %v3049, %v2974
      %v3083 = vsel %vm3060, %v3050, %v2976
      %v3084 = vsel %vm3060, %v3051, %v2978
      %v3085 = vsel %vm3060, %v3052, %v2980
      %v3086 = vsel %vm3060, %v3053, %v2982
      %v3087 = vsel %vm3060, %v3054, %v2984
      %v3088 = vsel %vm3060, %v3055, %v2986
      %v3089 = vsel %vm3060, %v3056, %v2988
      %v3090 = vsel %vm3060, %v3057, %v2990
      %v3091 = vsel %vm3060, %v3058, %v2992
      %v3092 = vsel %vm3060, %v3059, %v2994
      %vm3093 = vcmask 785408
      %v3094 = vsel %vm3093, %v3061, 0.0
      %v3095 = vsel %vm3093, %v3062, 0.0
      %v3096 = vsel %vm3093, %v3063, 0.0
      %v3097 = vsel %vm3093, %v3064, 0.0
      %v3098 = vsel %vm3093, %v3065, 0.0
      %v3099 = vsel %vm3093, %v3066, 0.0
      %v3100 = vsel %vm3093, %v3067, 0.0
      %v3101 = vsel %vm3093, %v3068, 0.0
      %v3102 = vsel %vm3093, %v3069, 0.0
      %v3103 = vsel %vm3093, %v3070, 0.0
      %v3104 = vsel %vm3093, %v3071, 0.0
      %v3105 = vsel %vm3093, %v3072, 0.0
      %v3106 = vsel %vm3093, %v3073, 0.0
      %v3107 = vsel %vm3093, %v3074, 0.0
      %v3108 = vsel %vm3093, %v3075, 0.0
      %v3109 = vsel %vm3093, %v3076, 0.0
      %v3110 = vsel %vm3093, %v3077, 0.0
      %v3111 = vsel %vm3093, %v3078, 0.0
      %v3112 = vsel %vm3093, %v3079, 0.0
      %v3113 = vsel %vm3093, %v3080, 0.0
      %v3114 = vsel %vm3093, %v3081, 0.0
      %v3115 = vsel %vm3093, %v3082, 0.0
      %v3116 = vsel %vm3093, %v3083, 0.0
      %v3117 = vsel %vm3093, %v3084, 0.0
      %v3118 = vsel %vm3093, %v3085, 0.0
      %v3119 = vsel %vm3093, %v3086, 0.0
      %v3120 = vsel %vm3093, %v3087, 0.0
      %v3121 = vsel %vm3093, %v3088, 0.0
      %v3122 = vsel %vm3093, %v3089, 0.0
      %v3123 = vsel %vm3093, %v3090, 0.0
      %v3124 = vsel %vm3093, %v3091, 0.0
      %v3125 = vsel %vm3093, %v3092, 0.0
      %3126 = vst [vmem:[%s387] sm:$0xff] %v3094
      %3127 = vst [vmem:[%s387 + $0x8] sm:$0xff] %v3095
      %3128 = vst [vmem:[%s387 + $0x10] sm:$0xff] %v3096
      %3129 = vst [vmem:[%s387 + $0x18] sm:$0xff] %v3097
      %3130 = vst [vmem:[%s387 + $0x20] sm:$0xff] %v3098
      %3131 = vst [vmem:[%s387 + $0x28] sm:$0xff] %v3099
      %3132 = vst [vmem:[%s387 + $0x30] sm:$0xff] %v3100
      %3133 = vst [vmem:[%s387 + $0x38] sm:$0xff] %v3101
      %3134 = vst [vmem:[%s387 + $0x40] sm:$0xff] %v3102
      %3135 = vst [vmem:[%s387 + $0x48] sm:$0xff] %v3103
      %3136 = vst [vmem:[%s387 + $0x50] sm:$0xff] %v3104
      %3137 = vst [vmem:[%s387 + $0x58] sm:$0xff] %v3105
      %3138 = vst [vmem:[%s387 + $0x60] sm:$0xff] %v3106
      %3139 = vst [vmem:[%s387 + $0x68] sm:$0xff] %v3107
      %3140 = vst [vmem:[%s387 + $0x70] sm:$0xff] %v3108
      %3141 = vst [vmem:[%s387 + $0x78] sm:$0xff] %v3109
      %3142 = vst [vmem:[%s387 + $0x80] sm:$0xff] %v3110
      %3143 = vst [vmem:[%s387 + $0x88] sm:$0xff] %v3111
      %3144 = vst [vmem:[%s387 + $0x90] sm:$0xff] %v3112
      %3145 = vst [vmem:[%s387 + $0x98] sm:$0xff] %v3113
      %3146 = vst [vmem:[%s387 + $0xa0] sm:$0xff] %v3114
      %3147 = vst [vmem:[%s387 + $0xa8] sm:$0xff] %v3115
      %3148 = vst [vmem:[%s387 + $0xb0] sm:$0xff] %v3116
      %3149 = vst [vmem:[%s387 + $0xb8] sm:$0xff] %v3117
      %3150 = vst [vmem:[%s387 + $0xc0] sm:$0xff] %v3118
      %3151 = vst [vmem:[%s387 + $0xc8] sm:$0xff] %v3119
      %3152 = vst [vmem:[%s387 + $0xd0] sm:$0xff] %v3120
      %3153 = vst [vmem:[%s387 + $0xd8] sm:$0xff] %v3121
      %3154 = vst [vmem:[%s387 + $0xe0] sm:$0xff] %v3122
      %3155 = vst [vmem:[%s387 + $0xe8] sm:$0xff] %v3123
      %3156 = vst [vmem:[%s387 + $0xf0] sm:$0xff] %v3124
      %3157 = vst [vmem:[%s387 + $0xf8] sm:$0xff] %v3125
      %s3158 = smul.u32 32, %s23
      %p3159 = scmp.lt.s32.totalorder %s24, 1
      %s3160 = scalar_select %p3159, %s24, 1
      %p3161 = scmp.lt.s32.totalorder %s3158, 31
      %s3162 = scalar_select %p3161, %s3158, 31
      %s3163 = smul.addr %s3160, 32
      %s3164 = sadd.s32 %s3162, %s3163
      %s3165 = smul.addr %s3164, 8
      %s3166 = scalar_lea.vmem %s8, %s3165
      // Predicated region
      $region53: #{_rpn_forward_impl.1} parent=51 // pred_check
        %p3167 = pneg %p236
      $region54: #{_rpn_forward_impl.1} parent=51 // pred_check_branch
        %3169 = sbr.rel (%p3167) target = $region56
      $region55: #{_rpn_forward_impl.1} parent=51 // pred_region
        %s3170 = smul.u32 32, %s23
      $region56: #{_rpn_forward_impl.1} parent=51 // pred_fallthru
        _
    $region52: #{_rpn_forward_impl.1} parent=5 // pred_fallthru
      _
    %p3171 = scmp.le.s32.totalorder 2, %s14
    // Predicated region
    $region57: #{_rpn_forward_impl.1} parent=5 // pred_check
      %p3172 = pneg %p3171
    $region58: #{_rpn_forward_impl.1} parent=5 // pred_check_branch
      %3174 = sbr.rel (%p3172) target = $region60
    $region59: #{_rpn_forward_impl.1} parent=5 // pred_region
      %s3175 = ssub.s32 %s14, 2
      // Predicated region
      $region61: #{_rpn_forward_impl.1} parent=59 // pred_check
        %p3176 = pneg %p242
      $region62: #{_rpn_forward_impl.1} parent=59 // pred_check_branch
        %3178 = sbr.rel (%p3176) target = $region64
      $region63: #{_rpn_forward_impl.1} parent=59 // pred_region
        %s3179 = smul.u32 32, %s25
        %p3180 = scmp.lt.s32.totalorder %s26, 1
        %s3181 = scalar_select %p3180, %s26, 1
        %p3182 = scmp.lt.s32.totalorder %s3179, 31
        %s3183 = scalar_select %p3182, %s3179, 31
        %s3184 = smul.addr %s3181, 32
        %s3185 = sadd.s32 %s3183, %s3184
        %s3186 = smul.addr %s3185, 8
        %s3187 = scalar_lea.vmem %s8, %s3186
      $region64: #{_rpn_forward_impl.1} parent=59 // pred_fallthru
        _
    $region60: #{_rpn_forward_impl.1} parent=5 // pred_fallthru
      _
  $region6: #{_rpn_forward_impl.1} parent=0 // loop_footer
    %s18 = sadd.s32 1, %s14
  $region7: #{_rpn_forward_impl.1} parent=0 // loop_footer_branch
    %13 = sbr.rel target = $region3
  $region8: #{_rpn_forward_impl.1} parent=0 // loop_exit
    _

</llo_original>
